<compile_context>
chip_gen: v5e
topology: v5e:2x2
jax: 0.10.0
libtpu: 0.0.40
codegen_flags: <defaults>
</compile_context>

<pallas_src>
import jax
import jax.numpy as jnp
from jax.experimental import pallas as pl
from jax.experimental.pallas import tpu as pltpu

HIDDEN = 768          # BERT hidden size
NUM_CLASSES = 8       # nn.Linear(768, 8)
PADDED_CLASSES = 128  # lane-dense classifier width (zero-pad 8 -> 128)


def _head_kernel(cls_ref, wp_i8_ref, wp_scale_ref, bp_ref, wl_ref, bl_ref, out_ref):
    """Fused BERT pooler + (padded) classifier head.

    cls_ref      : [B, 768]   CLS-token hidden state, f32
    wp_i8_ref    : [768, 768] pooler dense weight, int8, stored [in, out]
    wp_scale_ref : [1, 768]   per-output-column dequant scale, f32
    bp_ref       : [1, 768]   pooler dense bias, f32
    wl_ref       : [768, 128] classifier weight, bf16, zero-padded 8 -> 128
    bl_ref       : [1, 128]   classifier bias, bf16, zero-padded 8 -> 128
    out_ref      : [B, 128]   padded logits, f32 (real classes live in [:, :8])
    """
    # Dequantize the pooler weight on the VPU: int8 * per-column scale -> bf16
    # (native MXU input dtype on every TPU generation).
    wp = (wp_i8_ref[...].astype(jnp.float32) * wp_scale_ref[...]).astype(jnp.bfloat16)

    # Pooler matmul on the MXU bf16 path, f32 accumulation; tanh goes to the EUP.
    cls = cls_ref[...].astype(jnp.bfloat16)
    pooled = jnp.dot(cls, wp, preferred_element_type=jnp.float32)
    pooled = jnp.tanh(pooled + bp_ref[...])

    # Classifier: bf16 weights, lane-dense [B, 128] f32 output -> unmasked stores.
    logits = jnp.dot(pooled.astype(jnp.bfloat16), wl_ref[...],
                     preferred_element_type=jnp.float32)
    out_ref[...] = (logits + bl_ref[...].astype(jnp.float32)).astype(out_ref.dtype)


def bert_head_forward(cls_hidden, params):
    """cls_hidden: [B, 768] f32 (CLS token) -> logits [B, 8] f32."""
    B, H = cls_hidden.shape
    assert H == HIDDEN
    padded_logits = pl.pallas_call(
        _head_kernel,
        out_shape=jax.ShapeDtypeStruct((B, PADDED_CLASSES), jnp.float32),
        grid_spec=pltpu.PrefetchScalarGridSpec(
            num_scalar_prefetch=0,
            grid=(1,),
            in_specs=[
                pl.BlockSpec((B, HIDDEN), lambda i: (0, 0)),                # CLS
                pl.BlockSpec((HIDDEN, HIDDEN), lambda i: (0, 0)),           # int8 pooler W
                pl.BlockSpec((1, HIDDEN), lambda i: (0, 0)),                # pooler W scales
                pl.BlockSpec((1, HIDDEN), lambda i: (0, 0)),                # pooler b
                pl.BlockSpec((HIDDEN, PADDED_CLASSES), lambda i: (0, 0)),   # bf16 padded cls W
                pl.BlockSpec((1, PADDED_CLASSES), lambda i: (0, 0)),        # bf16 padded cls b
            ],
            out_specs=pl.BlockSpec((B, PADDED_CLASSES), lambda i: (0, 0)),
        ),
        compiler_params=pltpu.CompilerParams(
            dimension_semantics=("arbitrary",),
        ),
    )(cls_hidden, params["w_pool_i8"], params["w_pool_scale"], params["b_pool"],
      params["w_lin_pad"], params["b_lin_pad"])
    # Drop the zero-padded lanes (tiny XLA slice, outside the kernel).
    return padded_logits[:, :NUM_CLASSES]


def my_model_forward(last_hidden_state, params):
    """Mirrors MyModel.forward: BERT pooler on the CLS token + Linear(768, 8)."""
    cls_hidden = last_hidden_state[:, 0, :]   # effectively-free wrapper slice
    return bert_head_forward(cls_hidden, params)


def init_params(key):
    k1, k2, k3, k4 = jax.random.split(key, 4)
    # Pooler dense (768 -> 768), stored [in, out], symmetric int8 quantization
    # with per-output-column f32 scales (halves the dominant weight DMA vs bf16).
    w_pool_f32 = jax.random.normal(k1, (HIDDEN, HIDDEN), jnp.float32) * 0.02
    w_pool_scale = jnp.max(jnp.abs(w_pool_f32), axis=0, keepdims=True) / 127.0
    w_pool_i8 = jnp.clip(jnp.round(w_pool_f32 / w_pool_scale), -127, 127).astype(jnp.int8)
    b_pool = jax.random.normal(k2, (1, HIDDEN), jnp.float32) * 0.02
    # nn.Linear(768, 8): torch stores W as [out, in]; we keep [in, out] in bf16
    # and zero-pad the output dim 8 -> 128 for a lane-dense kernel output.
    # (Real checkpoint weights must be transposed/padded exactly once at load.)
    w_lin = (jax.random.normal(k3, (HIDDEN, NUM_CLASSES), jnp.float32) * 0.02
             ).astype(jnp.bfloat16)
    b_lin = (jax.random.normal(k4, (1, NUM_CLASSES), jnp.float32) * 0.02
             ).astype(jnp.bfloat16)
    w_lin_pad = jnp.zeros((HIDDEN, PADDED_CLASSES), jnp.bfloat16
                          ).at[:, :NUM_CLASSES].set(w_lin)
    b_lin_pad = jnp.zeros((1, PADDED_CLASSES), jnp.bfloat16
                          ).at[:, :NUM_CLASSES].set(b_lin)
    return {
        "w_pool_i8": w_pool_i8, "w_pool_scale": w_pool_scale, "b_pool": b_pool,
        "w_lin_pad": w_lin_pad, "b_lin_pad": b_lin_pad,
        # unpadded copies kept only for the pure-JAX reference check
        "w_lin": w_lin, "b_lin": b_lin,
    }


if __name__ == "__main__":
    key = jax.random.PRNGKey(0)
    kx, kp = jax.random.split(key)

    batch, seq = 8, 16
    # Synthetic stand-in for BertModel(...).last_hidden_state
    last_hidden_state = jax.random.normal(kx, (batch, seq, HIDDEN), jnp.float32)
    params = init_params(kp)

    logits = my_model_forward(last_hidden_state, params)
    logits = jax.block_until_ready(logits)

    # Reference check in plain JAX using the identical dequant / bf16 / f32 path.
    cls = last_hidden_state[:, 0, :]
    wp_deq = (params["w_pool_i8"].astype(jnp.float32) * params["w_pool_scale"]
              ).astype(jnp.bfloat16)
    pooled_ref = jnp.tanh(
        jnp.dot(cls.astype(jnp.bfloat16), wp_deq, preferred_element_type=jnp.float32)
        + params["b_pool"])
    ref = (jnp.dot(pooled_ref.astype(jnp.bfloat16), params["w_lin"],
                   preferred_element_type=jnp.float32)
           + params["b_lin"].astype(jnp.float32))

    assert logits.shape == (batch, NUM_CLASSES)
    assert jnp.allclose(logits, ref, atol=2e-2, rtol=2e-2)

    print("KERNEL_OK")
</pallas_src>

<mosaic_0001>
module attributes {stable_mosaic.version = 11 : i64} {
  func.func @_head_kernel(%arg0: i32, %arg1: memref<8x768xf32, #tpu.memory_space<vmem>>, %arg2: memref<768x768xi8, #tpu.memory_space<vmem>>, %arg3: memref<1x768xf32, #tpu.memory_space<vmem>>, %arg4: memref<1x768xf32, #tpu.memory_space<vmem>>, %arg5: memref<768x128xbf16, #tpu.memory_space<vmem>>, %arg6: memref<1x128xbf16, #tpu.memory_space<vmem>>, %arg7: memref<8x128xf32, #tpu.memory_space<vmem>>) attributes {dimension_semantics = [#tpu.dimension_semantics<arbitrary>], iteration_bounds = array<i64: 1>, scalar_prefetch = 0 : i64, scratch_operands = 0 : i64, tpu.core_type = #tpu.core_type<tc>, window_params = [{pipeline_mode = #tpu.pipeline_mode<synchronous>, transform_indices = @transform_0, window_bounds = array<i64: 8, 768>}, {pipeline_mode = #tpu.pipeline_mode<synchronous>, transform_indices = @transform_1, window_bounds = array<i64: 768, 768>}, {pipeline_mode = #tpu.pipeline_mode<synchronous>, transform_indices = @transform_2, window_bounds = array<i64: 1, 768>}, {pipeline_mode = #tpu.pipeline_mode<synchronous>, transform_indices = @transform_3, window_bounds = array<i64: 1, 768>}, {pipeline_mode = #tpu.pipeline_mode<synchronous>, transform_indices = @transform_4, window_bounds = array<i64: 768, 128>}, {pipeline_mode = #tpu.pipeline_mode<synchronous>, transform_indices = @transform_5, window_bounds = array<i64: 1, 128>}, {pipeline_mode = #tpu.pipeline_mode<synchronous>, transform_indices = @transform_6, window_bounds = array<i64: 8, 128>}]} {
    %c0 = arith.constant 0 : index
    %c0_0 = arith.constant 0 : index
    %0 = vector.load %arg2[%c0, %c0_0] : memref<768x768xi8, #tpu.memory_space<vmem>>, vector<768x768xi8>
    %1 = arith.sitofp %0 : vector<768x768xi8> to vector<768x768xf32>
    %c0_1 = arith.constant 0 : index
    %c0_2 = arith.constant 0 : index
    %2 = vector.load %arg3[%c0_1, %c0_2] : memref<1x768xf32, #tpu.memory_space<vmem>>, vector<1x768xf32>
    %3 = vector.broadcast %2 : vector<1x768xf32> to vector<768x768xf32>
    %4 = arith.mulf %1, %3 : vector<768x768xf32>
    %5 = arith.truncf %4 : vector<768x768xf32> to vector<768x768xbf16>
    %c0_3 = arith.constant 0 : index
    %c0_4 = arith.constant 0 : index
    %6 = vector.load %arg1[%c0_3, %c0_4] : memref<8x768xf32, #tpu.memory_space<vmem>>, vector<8x768xf32>
    %7 = arith.truncf %6 : vector<8x768xf32> to vector<8x768xbf16>
    %cst = arith.constant dense<0.000000e+00> : vector<8x768xf32>
    %8 = tpu.matmul %7, %5, %cst {dimension_numbers = #tpu.dot_dimension_numbers<[1], [0], [0], [1], [0, 0, 1, 1], [], []>} : vector<8x768xbf16>, vector<768x768xbf16>, vector<8x768xf32> -> vector<8x768xf32>
    %c0_5 = arith.constant 0 : index
    %c0_6 = arith.constant 0 : index
    %9 = vector.load %arg4[%c0_5, %c0_6] : memref<1x768xf32, #tpu.memory_space<vmem>>, vector<1x768xf32>
    %10 = vector.broadcast %9 : vector<1x768xf32> to vector<8x768xf32>
    %11 = arith.addf %8, %10 : vector<8x768xf32>
    %12 = math.tanh %11 : vector<8x768xf32>
    %13 = arith.truncf %12 : vector<8x768xf32> to vector<8x768xbf16>
    %c0_7 = arith.constant 0 : index
    %c0_8 = arith.constant 0 : index
    %14 = vector.load %arg5[%c0_7, %c0_8] : memref<768x128xbf16, #tpu.memory_space<vmem>>, vector<768x128xbf16>
    %cst_9 = arith.constant dense<0.000000e+00> : vector<8x128xf32>
    %15 = tpu.matmul %13, %14, %cst_9 {dimension_numbers = #tpu.dot_dimension_numbers<[1], [0], [0], [1], [0, 0, 1, 1], [], []>} : vector<8x768xbf16>, vector<768x128xbf16>, vector<8x128xf32> -> vector<8x128xf32>
    %c0_10 = arith.constant 0 : index
    %c0_11 = arith.constant 0 : index
    %16 = vector.load %arg6[%c0_10, %c0_11] : memref<1x128xbf16, #tpu.memory_space<vmem>>, vector<1x128xbf16>
    %17 = arith.extf %16 : vector<1x128xbf16> to vector<1x128xf32>
    %18 = vector.broadcast %17 : vector<1x128xf32> to vector<8x128xf32>
    %19 = arith.addf %15, %18 : vector<8x128xf32>
    %c0_12 = arith.constant 0 : index
    %c0_13 = arith.constant 0 : index
    %20 = vector.load %arg7[%c0_12, %c0_13] : memref<8x128xf32, #tpu.memory_space<vmem>>, vector<8x128xf32>
    tpu.vector_store %arg7[%c0_12, %c0_13], %19 {strides = array<i32>} : memref<8x128xf32, #tpu.memory_space<vmem>>, vector<8x128xf32>,
    return
  }
  func.func @transform_0(%arg0: i32) -> (i32, i32) {
    %c0_i32 = arith.constant 0 : i32
    %c0_i32_0 = arith.constant 0 : i32
    %c0_i32_1 = arith.constant 0 : i32
    return %c0_i32, %c0_i32_0 : i32, i32
  }
  func.func @transform_1(%arg0: i32) -> (i32, i32) {
    %c0_i32 = arith.constant 0 : i32
    %c0_i32_0 = arith.constant 0 : i32
    %c0_i32_1 = arith.constant 0 : i32
    return %c0_i32, %c0_i32_0 : i32, i32
  }
  func.func @transform_2(%arg0: i32) -> (i32, i32) {
    %c0_i32 = arith.constant 0 : i32
    %c0_i32_0 = arith.constant 0 : i32
    %c0_i32_1 = arith.constant 0 : i32
    return %c0_i32, %c0_i32_0 : i32, i32
  }
  func.func @transform_3(%arg0: i32) -> (i32, i32) {
    %c0_i32 = arith.constant 0 : i32
    %c0_i32_0 = arith.constant 0 : i32
    %c0_i32_1 = arith.constant 0 : i32
    return %c0_i32, %c0_i32_0 : i32, i32
  }
  func.func @transform_4(%arg0: i32) -> (i32, i32) {
    %c0_i32 = arith.constant 0 : i32
    %c0_i32_0 = arith.constant 0 : i32
    %c0_i32_1 = arith.constant 0 : i32
    return %c0_i32, %c0_i32_0 : i32, i32
  }
  func.func @transform_5(%arg0: i32) -> (i32, i32) {
    %c0_i32 = arith.constant 0 : i32
    %c0_i32_0 = arith.constant 0 : i32
    %c0_i32_1 = arith.constant 0 : i32
    return %c0_i32, %c0_i32_0 : i32, i32
  }
  func.func @transform_6(%arg0: i32) -> (i32, i32) {
    %c0_i32 = arith.constant 0 : i32
    %c0_i32_0 = arith.constant 0 : i32
    %c0_i32_1 = arith.constant 0 : i32
    return %c0_i32, %c0_i32_0 : i32, i32
  }
}

</mosaic_0001>

<llo_original>
// kernel: tpu_custom_call.1
$region0: #{tpu_custom_call.1}
  #allocation0 [shape = 'u32[]', space=smem, size = 0x4, offset = 0x4, fixed_abs, tag = 'smem constant byte address 0x4 - core index']
  #allocation1 [shape = 'u32[72,128]{1,0:T(1,128)}', space=vmem, size = 0x9000, scoped, tag = 'internal scratch']
  %s0 = inlined_call_operand.hbm [shape: f32[8,768], index: 0, kind: input, shape index: {}]
  %s1 = inlined_call_operand.hbm [shape: s8[768,768], index: 1, kind: input, shape index: {}]
  %s2 = inlined_call_operand.hbm [shape: f32[1,768], index: 2, kind: input, shape index: {}]
  %s3 = inlined_call_operand.hbm [shape: f32[1,768], index: 3, kind: input, shape index: {}]
  %s4 = inlined_call_operand.hbm [shape: bf16[768,128], index: 4, kind: input, shape index: {}]
  %s5 = inlined_call_operand.vmem [shape: bf16[1,128], index: 5, kind: input, shape index: {}]
  %s6 = inlined_call_operand.hbm [shape: f32[8,128], index: 6, kind: output, shape index: {}]
  %s7 = sld [smem:[#allocation0]]
  $region54: #{tpu_custom_call.1} parent=0
    _
  %s9 = ssub.s32 1, %s7
  %s10 = scalar_select 0, %s9, %s7
  $region1: #{tpu_custom_call.1} parent=0
    #allocation2 [shape = 'u8[24576]{0}', space=vmem, size = 0x6000, scoped, tag = 'input window, operand 0, single buffered']
    #allocation3 [shape = 's32[1]{0}', space=sflag, size = 0x4, scoped, tag = 'scoped memory for tpu_custom_call.1']
    #allocation4 [shape = 's32[1]{0}', space=sflag, size = 0x4, scoped, tag = 'scoped memory for tpu_custom_call.1']
    #allocation5 [shape = 'u8[589824]{0}', space=vmem, size = 0x90000, scoped, tag = 'input window, operand 1, single buffered']
    #allocation6 [shape = 's32[1]{0}', space=sflag, size = 0x4, scoped, tag = 'scoped memory for tpu_custom_call.1']
    #allocation7 [shape = 'u8[3072]{0}', space=vmem, size = 0xc00, scoped, tag = 'input window, operand 2, single buffered']
    #allocation8 [shape = 'u8[3072]{0}', space=vmem, size = 0xc00, scoped, tag = 'input window, operand 3, single buffered']
    #allocation9 [shape = 's32[1]{0}', space=sflag, size = 0x4, scoped, tag = 'scoped memory for tpu_custom_call.1']
    #allocation10 [shape = 'u8[196608]{0}', space=vmem, size = 0x30000, scoped, tag = 'input window, operand 4, single buffered']
    #allocation11 [shape = 'u8[4096]{0}', space=vmem, size = 0x1000, scoped, tag = 'output window, operand 0, single buffered']
    %11 = vsyncpa [#allocation3], 0
    %12 = vsyncpa [#allocation6], 0
    %13 = vsyncpa [#allocation9], 0
    %14 = vsyncpa [#allocation4], 0
    // Predicated region
    $region2: #{tpu_custom_call.1} parent=1 // pred_check
      _
    $region3: #{tpu_custom_call.1} parent=1 // pred_check_branch
      %16 = sbr.rel (0) target = $region5
    $region4: #{tpu_custom_call.1} parent=1 // pred_region
      %18 = vsyncadd [#allocation3], 0
      %s20 = sshll.u32 %s0, 4
      %s21 = int_to_ptr.hbm [resolvable:$true] %s20
      %s22 = sshll.u32 [#allocation2], 4
      %s23 = int_to_ptr.vmem [resolvable:$true] %s22
      %25 = dma.hbm_to_vmem [thread:$0]  %s21, 768, %s23, [#allocation3]
    $region5: #{tpu_custom_call.1} parent=1 // pred_fallthru
      _
    // Predicated region
    $region6: #{tpu_custom_call.1} parent=1 // pred_check
      _
    $region7: #{tpu_custom_call.1} parent=1 // pred_check_branch
      %27 = sbr.rel (0) target = $region9
    $region8: #{tpu_custom_call.1} parent=1 // pred_region
      %29 = vsyncadd [#allocation6], 0
      %s30 = sshll.u32 %s1, 4
      %s31 = int_to_ptr.hbm [resolvable:$true] %s30
      %s32 = sshll.u32 [#allocation5], 4
      %s33 = int_to_ptr.vmem [resolvable:$true] %s32
      %38 = dma.hbm_to_vmem [thread:$0]  %s31, 18432, %s33, [#allocation6], 768, 768, 48
    $region9: #{tpu_custom_call.1} parent=1 // pred_fallthru
      _
    // Predicated region
    $region10: #{tpu_custom_call.1} parent=1 // pred_check
      _
    $region11: #{tpu_custom_call.1} parent=1 // pred_check_branch
      %40 = sbr.rel (0) target = $region13
    $region12: #{tpu_custom_call.1} parent=1 // pred_region
      %42 = vsyncadd [#allocation6], 0
      %s44 = sshll.u32 %s2, 4
      %s45 = int_to_ptr.hbm [resolvable:$true] %s44
      %s46 = sshll.u32 [#allocation7], 4
      %s47 = int_to_ptr.vmem [resolvable:$true] %s46
      %49 = dma.hbm_to_vmem [thread:$0]  %s45, 96, %s47, [#allocation6]
    $region13: #{tpu_custom_call.1} parent=1 // pred_fallthru
      _
    // Predicated region
    $region14: #{tpu_custom_call.1} parent=1 // pred_check
      _
    $region15: #{tpu_custom_call.1} parent=1 // pred_check_branch
      %51 = sbr.rel (0) target = $region17
    $region16: #{tpu_custom_call.1} parent=1 // pred_region
      %53 = vsyncadd [#allocation9], 0
      %s55 = sshll.u32 %s3, 4
      %s56 = int_to_ptr.hbm [resolvable:$true] %s55
      %s57 = sshll.u32 [#allocation8], 4
      %s58 = int_to_ptr.vmem [resolvable:$true] %s57
      %60 = dma.hbm_to_vmem [thread:$0]  %s56, 96, %s58, [#allocation9]
    $region17: #{tpu_custom_call.1} parent=1 // pred_fallthru
      _
    // Predicated region
    $region18: #{tpu_custom_call.1} parent=1 // pred_check
      _
    $region19: #{tpu_custom_call.1} parent=1 // pred_check_branch
      %62 = sbr.rel (0) target = $region21
    $region20: #{tpu_custom_call.1} parent=1 // pred_region
      %64 = vsyncadd [#allocation9], 0
      %s65 = sshll.u32 %s4, 4
      %s66 = int_to_ptr.hbm [resolvable:$true] %s65
      %s67 = sshll.u32 [#allocation10], 4
      %s68 = int_to_ptr.vmem [resolvable:$true] %s67
      %73 = dma.hbm_to_vmem [thread:$0]  %s66, 6144, %s68, [#allocation9], 64, 64, 4
    $region21: #{tpu_custom_call.1} parent=1 // pred_fallthru
      _
    // Predicated region
    $region22: #{tpu_custom_call.1} parent=1 // pred_check
      _
    $region23: #{tpu_custom_call.1} parent=1 // pred_check_branch
      %75 = sbr.rel (0) target = $region25
    $region24: #{tpu_custom_call.1} parent=1 // pred_region
      _
    $region25: #{tpu_custom_call.1} parent=1 // pred_fallthru
      _
    // Predicated region
    $region26: #{tpu_custom_call.1} parent=1 // pred_check
      _
    $region27: #{tpu_custom_call.1} parent=1 // pred_check_branch
      %77 = sbr.rel (0) target = $region29
    $region28: #{tpu_custom_call.1} parent=1 // pred_region
      %79 = dma.done [#allocation3], 768
    $region29: #{tpu_custom_call.1} parent=1 // pred_fallthru
      _
    // Predicated region
    $region30: #{tpu_custom_call.1} parent=1 // pred_check
      _
    $region31: #{tpu_custom_call.1} parent=1 // pred_check_branch
      %81 = sbr.rel (0) target = $region33
    $region32: #{tpu_custom_call.1} parent=1 // pred_region
      %83 = dma.done [#allocation6], 18432
    $region33: #{tpu_custom_call.1} parent=1 // pred_fallthru
      _
    // Predicated region
    $region34: #{tpu_custom_call.1} parent=1 // pred_check
      _
    $region35: #{tpu_custom_call.1} parent=1 // pred_check_branch
      %85 = sbr.rel (0) target = $region37
    $region36: #{tpu_custom_call.1} parent=1 // pred_region
      %87 = dma.done [#allocation6], 96
    $region37: #{tpu_custom_call.1} parent=1 // pred_fallthru
      _
    // Predicated region
    $region38: #{tpu_custom_call.1} parent=1 // pred_check
      _
    $region39: #{tpu_custom_call.1} parent=1 // pred_check_branch
      %89 = sbr.rel (0) target = $region41
    $region40: #{tpu_custom_call.1} parent=1 // pred_region
      %91 = dma.done [#allocation9], 96
    $region41: #{tpu_custom_call.1} parent=1 // pred_fallthru
      _
    // Predicated region
    $region42: #{tpu_custom_call.1} parent=1 // pred_check
      _
    $region43: #{tpu_custom_call.1} parent=1 // pred_check_branch
      %93 = sbr.rel (0) target = $region45
    $region44: #{tpu_custom_call.1} parent=1 // pred_region
      %95 = dma.done [#allocation9], 6144
    $region45: #{tpu_custom_call.1} parent=1 // pred_fallthru
      _
    %v96 = vld [vmem:[#allocation5] sm:$0xff]
    %v97 = vld [vmem:[#allocation5 + $0x8] sm:$0xff]
    %v98 = vld [vmem:[#allocation5 + $0x10] sm:$0xff]
    %v99 = vld [vmem:[#allocation5 + $0x18] sm:$0xff]
    %v100 = vld [vmem:[#allocation5 + $0x20] sm:$0xff]
    %v101 = vld [vmem:[#allocation5 + $0x28] sm:$0xff]
    %v102 = vld [vmem:[#allocation5 + $0x30] sm:$0xff]
    %v103 = vld [vmem:[#allocation5 + $0x38] sm:$0xff]
    %v104 = vld [vmem:[#allocation5 + $0x40] sm:$0xff]
    %v105 = vld [vmem:[#allocation5 + $0x48] sm:$0xff]
    %v106 = vld [vmem:[#allocation5 + $0x50] sm:$0xff]
    %v107 = vld [vmem:[#allocation5 + $0x58] sm:$0xff]
    %v108 = vld [vmem:[#allocation5 + $0x60] sm:$0xff]
    %v109 = vld [vmem:[#allocation5 + $0x68] sm:$0xff]
    %v110 = vld [vmem:[#allocation5 + $0x70] sm:$0xff]
    %v111 = vld [vmem:[#allocation5 + $0x78] sm:$0xff]
    %v112 = vld [vmem:[#allocation5 + $0x80] sm:$0xff]
    %v113 = vld [vmem:[#allocation5 + $0x88] sm:$0xff]
    %v114 = vld [vmem:[#allocation5 + $0x90] sm:$0xff]
    %v115 = vld [vmem:[#allocation5 + $0x98] sm:$0xff]
    %v116 = vld [vmem:[#allocation5 + $0xa0] sm:$0xff]
    %v117 = vld [vmem:[#allocation5 + $0xa8] sm:$0xff]
    %v118 = vld [vmem:[#allocation5 + $0xb0] sm:$0xff]
    %v119 = vld [vmem:[#allocation5 + $0xb8] sm:$0xff]
    %v120 = vld [vmem:[#allocation5 + $0xc0] sm:$0xff]
    %v121 = vld [vmem:[#allocation5 + $0xc8] sm:$0xff]
    %v122 = vld [vmem:[#allocation5 + $0xd0] sm:$0xff]
    %v123 = vld [vmem:[#allocation5 + $0xd8] sm:$0xff]
    %v124 = vld [vmem:[#allocation5 + $0xe0] sm:$0xff]
    %v125 = vld [vmem:[#allocation5 + $0xe8] sm:$0xff]
    %v126 = vld [vmem:[#allocation5 + $0xf0] sm:$0xff]
    %v127 = vld [vmem:[#allocation5 + $0xf8] sm:$0xff]
    %v128 = vld [vmem:[#allocation5 + $0x100] sm:$0xff]
    %v129 = vld [vmem:[#allocation5 + $0x108] sm:$0xff]
    %v130 = vld [vmem:[#allocation5 + $0x110] sm:$0xff]
    %v131 = vld [vmem:[#allocation5 + $0x118] sm:$0xff]
    %v132 = vld [vmem:[#allocation5 + $0x120] sm:$0xff]
    %v133 = vld [vmem:[#allocation5 + $0x128] sm:$0xff]
    %v134 = vld [vmem:[#allocation5 + $0x130] sm:$0xff]
    %v135 = vld [vmem:[#allocation5 + $0x138] sm:$0xff]
    %v136 = vld [vmem:[#allocation5 + $0x140] sm:$0xff]
    %v137 = vld [vmem:[#allocation5 + $0x148] sm:$0xff]
    %v138 = vld [vmem:[#allocation5 + $0x150] sm:$0xff]
    %v139 = vld [vmem:[#allocation5 + $0x158] sm:$0xff]
    %v140 = vld [vmem:[#allocation5 + $0x160] sm:$0xff]
    %v141 = vld [vmem:[#allocation5 + $0x168] sm:$0xff]
    %v142 = vld [vmem:[#allocation5 + $0x170] sm:$0xff]
    %v143 = vld [vmem:[#allocation5 + $0x178] sm:$0xff]
    %v144 = vld [vmem:[#allocation5 + $0x180] sm:$0xff]
    %v145 = vld [vmem:[#allocation5 + $0x188] sm:$0xff]
    %v146 = vld [vmem:[#allocation5 + $0x190] sm:$0xff]
    %v147 = vld [vmem:[#allocation5 + $0x198] sm:$0xff]
    %v148 = vld [vmem:[#allocation5 + $0x1a0] sm:$0xff]
    %v149 = vld [vmem:[#allocation5 + $0x1a8] sm:$0xff]
    %v150 = vld [vmem:[#allocation5 + $0x1b0] sm:$0xff]
    %v151 = vld [vmem:[#allocation5 + $0x1b8] sm:$0xff]
    %v152 = vld [vmem:[#allocation5 + $0x1c0] sm:$0xff]
    %v153 = vld [vmem:[#allocation5 + $0x1c8] sm:$0xff]
    %v154 = vld [vmem:[#allocation5 + $0x1d0] sm:$0xff]
    %v155 = vld [vmem:[#allocation5 + $0x1d8] sm:$0xff]
    %v156 = vld [vmem:[#allocation5 + $0x1e0] sm:$0xff]
    %v157 = vld [vmem:[#allocation5 + $0x1e8] sm:$0xff]
    %v158 = vld [vmem:[#allocation5 + $0x1f0] sm:$0xff]
    %v159 = vld [vmem:[#allocation5 + $0x1f8] sm:$0xff]
    %v160 = vld [vmem:[#allocation5 + $0x200] sm:$0xff]
    %v161 = vld [vmem:[#allocation5 + $0x208] sm:$0xff]
    %v162 = vld [vmem:[#allocation5 + $0x210] sm:$0xff]
    %v163 = vld [vmem:[#allocation5 + $0x218] sm:$0xff]
    %v164 = vld [vmem:[#allocation5 + $0x220] sm:$0xff]
    %v165 = vld [vmem:[#allocation5 + $0x228] sm:$0xff]
    %v166 = vld [vmem:[#allocation5 + $0x230] sm:$0xff]
    %v167 = vld [vmem:[#allocation5 + $0x238] sm:$0xff]
    %v168 = vld [vmem:[#allocation5 + $0x240] sm:$0xff]
    %v169 = vld [vmem:[#allocation5 + $0x248] sm:$0xff]
    %v170 = vld [vmem:[#allocation5 + $0x250] sm:$0xff]
    %v171 = vld [vmem:[#allocation5 + $0x258] sm:$0xff]
    %v172 = vld [vmem:[#allocation5 + $0x260] sm:$0xff]
    %v173 = vld [vmem:[#allocation5 + $0x268] sm:$0xff]
    %v174 = vld [vmem:[#allocation5 + $0x270] sm:$0xff]
    %v175 = vld [vmem:[#allocation5 + $0x278] sm:$0xff]
    %v176 = vld [vmem:[#allocation5 + $0x280] sm:$0xff]
    %v177 = vld [vmem:[#allocation5 + $0x288] sm:$0xff]
    %v178 = vld [vmem:[#allocation5 + $0x290] sm:$0xff]
    %v179 = vld [vmem:[#allocation5 + $0x298] sm:$0xff]
    %v180 = vld [vmem:[#allocation5 + $0x2a0] sm:$0xff]
    %v181 = vld [vmem:[#allocation5 + $0x2a8] sm:$0xff]
    %v182 = vld [vmem:[#allocation5 + $0x2b0] sm:$0xff]
    %v183 = vld [vmem:[#allocation5 + $0x2b8] sm:$0xff]
    %v184 = vld [vmem:[#allocation5 + $0x2c0] sm:$0xff]
    %v185 = vld [vmem:[#allocation5 + $0x2c8] sm:$0xff]
    %v186 = vld [vmem:[#allocation5 + $0x2d0] sm:$0xff]
    %v187 = vld [vmem:[#allocation5 + $0x2d8] sm:$0xff]
    %v188 = vld [vmem:[#allocation5 + $0x2e0] sm:$0xff]
    %v189 = vld [vmem:[#allocation5 + $0x2e8] sm:$0xff]
    %v190 = vld [vmem:[#allocation5 + $0x2f0] sm:$0xff]
    %v191 = vld [vmem:[#allocation5 + $0x2f8] sm:$0xff]
    %v192 = vld [vmem:[#allocation5 + $0x300] sm:$0xff]
    %v193 = vld [vmem:[#allocation5 + $0x308] sm:$0xff]
    %v194 = vld [vmem:[#allocation5 + $0x310] sm:$0xff]
    %v195 = vld [vmem:[#allocation5 + $0x318] sm:$0xff]
    %v196 = vld [vmem:[#allocation5 + $0x320] sm:$0xff]
    %v197 = vld [vmem:[#allocation5 + $0x328] sm:$0xff]
    %v198 = vld [vmem:[#allocation5 + $0x330] sm:$0xff]
    %v199 = vld [vmem:[#allocation5 + $0x338] sm:$0xff]
    %v200 = vld [vmem:[#allocation5 + $0x340] sm:$0xff]
    %v201 = vld [vmem:[#allocation5 + $0x348] sm:$0xff]
    %v202 = vld [vmem:[#allocation5 + $0x350] sm:$0xff]
    %v203 = vld [vmem:[#allocation5 + $0x358] sm:$0xff]
    %v204 = vld [vmem:[#allocation5 + $0x360] sm:$0xff]
    %v205 = vld [vmem:[#allocation5 + $0x368] sm:$0xff]
    %v206 = vld [vmem:[#allocation5 + $0x370] sm:$0xff]
    %v207 = vld [vmem:[#allocation5 + $0x378] sm:$0xff]
    %v208 = vld [vmem:[#allocation5 + $0x380] sm:$0xff]
    %v209 = vld [vmem:[#allocation5 + $0x388] sm:$0xff]
    %v210 = vld [vmem:[#allocation5 + $0x390] sm:$0xff]
    %v211 = vld [vmem:[#allocation5 + $0x398] sm:$0xff]
    %v212 = vld [vmem:[#allocation5 + $0x3a0] sm:$0xff]
    %v213 = vld [vmem:[#allocation5 + $0x3a8] sm:$0xff]
    %v214 = vld [vmem:[#allocation5 + $0x3b0] sm:$0xff]
    %v215 = vld [vmem:[#allocation5 + $0x3b8] sm:$0xff]
    %v216 = vld [vmem:[#allocation5 + $0x3c0] sm:$0xff]
    %v217 = vld [vmem:[#allocation5 + $0x3c8] sm:$0xff]
    %v218 = vld [vmem:[#allocation5 + $0x3d0] sm:$0xff]
    %v219 = vld [vmem:[#allocation5 + $0x3d8] sm:$0xff]
    %v220 = vld [vmem:[#allocation5 + $0x3e0] sm:$0xff]
    %v221 = vld [vmem:[#allocation5 + $0x3e8] sm:$0xff]
    %v222 = vld [vmem:[#allocation5 + $0x3f0] sm:$0xff]
    %v223 = vld [vmem:[#allocation5 + $0x3f8] sm:$0xff]
    %v224 = vld [vmem:[#allocation5 + $0x400] sm:$0xff]
    %v225 = vld [vmem:[#allocation5 + $0x408] sm:$0xff]
    %v226 = vld [vmem:[#allocation5 + $0x410] sm:$0xff]
    %v227 = vld [vmem:[#allocation5 + $0x418] sm:$0xff]
    %v228 = vld [vmem:[#allocation5 + $0x420] sm:$0xff]
    %v229 = vld [vmem:[#allocation5 + $0x428] sm:$0xff]
    %v230 = vld [vmem:[#allocation5 + $0x430] sm:$0xff]
    %v231 = vld [vmem:[#allocation5 + $0x438] sm:$0xff]
    %v232 = vld [vmem:[#allocation5 + $0x440] sm:$0xff]
    %v233 = vld [vmem:[#allocation5 + $0x448] sm:$0xff]
    %v234 = vld [vmem:[#allocation5 + $0x450] sm:$0xff]
    %v235 = vld [vmem:[#allocation5 + $0x458] sm:$0xff]
    %v236 = vld [vmem:[#allocation5 + $0x460] sm:$0xff]
    %v237 = vld [vmem:[#allocation5 + $0x468] sm:$0xff]
    %v238 = vld [vmem:[#allocation5 + $0x470] sm:$0xff]
    %v239 = vld [vmem:[#allocation5 + $0x478] sm:$0xff]
    %v240 = vunpack.c.0.s8 %v96
    %v241 = vunpack.c.0.s8 %v97
    %v242 = vunpack.c.0.s8 %v98
    %v243 = vunpack.c.0.s8 %v99
    %v244 = vunpack.c.0.s8 %v100
    %v245 = vunpack.c.0.s8 %v101
    %v246 = vunpack.c.1.s8 %v96
    %v247 = vunpack.c.1.s8 %v97
    %v248 = vunpack.c.1.s8 %v98
    %v249 = vunpack.c.1.s8 %v99
    %v250 = vunpack.c.1.s8 %v100
    %v251 = vunpack.c.1.s8 %v101
    %v252 = vunpack.c.2.s8 %v96
    %v253 = vunpack.c.2.s8 %v97
    %v254 = vunpack.c.2.s8 %v98
    %v255 = vunpack.c.2.s8 %v99
    %v256 = vunpack.c.2.s8 %v100
    %v257 = vunpack.c.2.s8 %v101
    %v258 = vunpack.c.3.s8 %v96
    %v259 = vunpack.c.3.s8 %v97
    %v260 = vunpack.c.3.s8 %v98
    %v261 = vunpack.c.3.s8 %v99
    %v262 = vunpack.c.3.s8 %v100
    %v263 = vunpack.c.3.s8 %v101
    %v264 = vunpack.c.0.s8 %v102
    %v265 = vunpack.c.0.s8 %v103
    %v266 = vunpack.c.0.s8 %v104
    %v267 = vunpack.c.0.s8 %v105
    %v268 = vunpack.c.0.s8 %v106
    %v269 = vunpack.c.0.s8 %v107
    %v270 = vunpack.c.1.s8 %v102
    %v271 = vunpack.c.1.s8 %v103
    %v272 = vunpack.c.1.s8 %v104
    %v273 = vunpack.c.1.s8 %v105
    %v274 = vunpack.c.1.s8 %v106
    %v275 = vunpack.c.1.s8 %v107
    %v276 = vunpack.c.2.s8 %v102
    %v277 = vunpack.c.2.s8 %v103
    %v278 = vunpack.c.2.s8 %v104
    %v279 = vunpack.c.2.s8 %v105
    %v280 = vunpack.c.2.s8 %v106
    %v281 = vunpack.c.2.s8 %v107
    %v282 = vunpack.c.3.s8 %v102
    %v283 = vunpack.c.3.s8 %v103
    %v284 = vunpack.c.3.s8 %v104
    %v285 = vunpack.c.3.s8 %v105
    %v286 = vunpack.c.3.s8 %v106
    %v287 = vunpack.c.3.s8 %v107
    %v288 = vunpack.c.0.s8 %v108
    %v289 = vunpack.c.0.s8 %v109
    %v290 = vunpack.c.0.s8 %v110
    %v291 = vunpack.c.0.s8 %v111
    %v292 = vunpack.c.0.s8 %v112
    %v293 = vunpack.c.0.s8 %v113
    %v294 = vunpack.c.1.s8 %v108
    %v295 = vunpack.c.1.s8 %v109
    %v296 = vunpack.c.1.s8 %v110
    %v297 = vunpack.c.1.s8 %v111
    %v298 = vunpack.c.1.s8 %v112
    %v299 = vunpack.c.1.s8 %v113
    %v300 = vunpack.c.2.s8 %v108
    %v301 = vunpack.c.2.s8 %v109
    %v302 = vunpack.c.2.s8 %v110
    %v303 = vunpack.c.2.s8 %v111
    %v304 = vunpack.c.2.s8 %v112
    %v305 = vunpack.c.2.s8 %v113
    %v306 = vunpack.c.3.s8 %v108
    %v307 = vunpack.c.3.s8 %v109
    %v308 = vunpack.c.3.s8 %v110
    %v309 = vunpack.c.3.s8 %v111
    %v310 = vunpack.c.3.s8 %v112
    %v311 = vunpack.c.3.s8 %v113
    %v312 = vunpack.c.0.s8 %v114
    %v313 = vunpack.c.0.s8 %v115
    %v314 = vunpack.c.0.s8 %v116
    %v315 = vunpack.c.0.s8 %v117
    %v316 = vunpack.c.0.s8 %v118
    %v317 = vunpack.c.0.s8 %v119
    %v318 = vunpack.c.1.s8 %v114
    %v319 = vunpack.c.1.s8 %v115
    %v320 = vunpack.c.1.s8 %v116
    %v321 = vunpack.c.1.s8 %v117
    %v322 = vunpack.c.1.s8 %v118
    %v323 = vunpack.c.1.s8 %v119
    %v324 = vunpack.c.2.s8 %v114
    %v325 = vunpack.c.2.s8 %v115
    %v326 = vunpack.c.2.s8 %v116
    %v327 = vunpack.c.2.s8 %v117
    %v328 = vunpack.c.2.s8 %v118
    %v329 = vunpack.c.2.s8 %v119
    %v330 = vunpack.c.3.s8 %v114
    %v331 = vunpack.c.3.s8 %v115
    %v332 = vunpack.c.3.s8 %v116
    %v333 = vunpack.c.3.s8 %v117
    %v334 = vunpack.c.3.s8 %v118
    %v335 = vunpack.c.3.s8 %v119
    %v336 = vunpack.c.0.s8 %v120
    %v337 = vunpack.c.0.s8 %v121
    %v338 = vunpack.c.0.s8 %v122
    %v339 = vunpack.c.0.s8 %v123
    %v340 = vunpack.c.0.s8 %v124
    %v341 = vunpack.c.0.s8 %v125
    %v342 = vunpack.c.1.s8 %v120
    %v343 = vunpack.c.1.s8 %v121
    %v344 = vunpack.c.1.s8 %v122
    %v345 = vunpack.c.1.s8 %v123
    %v346 = vunpack.c.1.s8 %v124
    %v347 = vunpack.c.1.s8 %v125
    %v348 = vunpack.c.2.s8 %v120
    %v349 = vunpack.c.2.s8 %v121
    %v350 = vunpack.c.2.s8 %v122
    %v351 = vunpack.c.2.s8 %v123
    %v352 = vunpack.c.2.s8 %v124
    %v353 = vunpack.c.2.s8 %v125
    %v354 = vunpack.c.3.s8 %v120
    %v355 = vunpack.c.3.s8 %v121
    %v356 = vunpack.c.3.s8 %v122
    %v357 = vunpack.c.3.s8 %v123
    %v358 = vunpack.c.3.s8 %v124
    %v359 = vunpack.c.3.s8 %v125
    %v360 = vunpack.c.0.s8 %v126
    %v361 = vunpack.c.0.s8 %v127
    %v362 = vunpack.c.0.s8 %v128
    %v363 = vunpack.c.0.s8 %v129
    %v364 = vunpack.c.0.s8 %v130
    %v365 = vunpack.c.0.s8 %v131
    %v366 = vunpack.c.1.s8 %v126
    %v367 = vunpack.c.1.s8 %v127
    %v368 = vunpack.c.1.s8 %v128
    %v369 = vunpack.c.1.s8 %v129
    %v370 = vunpack.c.1.s8 %v130
    %v371 = vunpack.c.1.s8 %v131
    %v372 = vunpack.c.2.s8 %v126
    %v373 = vunpack.c.2.s8 %v127
    %v374 = vunpack.c.2.s8 %v128
    %v375 = vunpack.c.2.s8 %v129
    %v376 = vunpack.c.2.s8 %v130
    %v377 = vunpack.c.2.s8 %v131
    %v378 = vunpack.c.3.s8 %v126
    %v379 = vunpack.c.3.s8 %v127
    %v380 = vunpack.c.3.s8 %v128
    %v381 = vunpack.c.3.s8 %v129
    %v382 = vunpack.c.3.s8 %v130
    %v383 = vunpack.c.3.s8 %v131
    %v384 = vunpack.c.0.s8 %v132
    %v385 = vunpack.c.0.s8 %v133
    %v386 = vunpack.c.0.s8 %v134
    %v387 = vunpack.c.0.s8 %v135
    %v388 = vunpack.c.0.s8 %v136
    %v389 = vunpack.c.0.s8 %v137
    %v390 = vunpack.c.1.s8 %v132
    %v391 = vunpack.c.1.s8 %v133
    %v392 = vunpack.c.1.s8 %v134
    %v393 = vunpack.c.1.s8 %v135
    %v394 = vunpack.c.1.s8 %v136
    %v395 = vunpack.c.1.s8 %v137
    %v396 = vunpack.c.2.s8 %v132
    %v397 = vunpack.c.2.s8 %v133
    %v398 = vunpack.c.2.s8 %v134
    %v399 = vunpack.c.2.s8 %v135
    %v400 = vunpack.c.2.s8 %v136
    %v401 = vunpack.c.2.s8 %v137
    %v402 = vunpack.c.3.s8 %v132
    %v403 = vunpack.c.3.s8 %v133
    %v404 = vunpack.c.3.s8 %v134
    %v405 = vunpack.c.3.s8 %v135
    %v406 = vunpack.c.3.s8 %v136
    %v407 = vunpack.c.3.s8 %v137
    %v408 = vunpack.c.0.s8 %v138
    %v409 = vunpack.c.0.s8 %v139
    %v410 = vunpack.c.0.s8 %v140
    %v411 = vunpack.c.0.s8 %v141
    %v412 = vunpack.c.0.s8 %v142
    %v413 = vunpack.c.0.s8 %v143
    %v414 = vunpack.c.1.s8 %v138
    %v415 = vunpack.c.1.s8 %v139
    %v416 = vunpack.c.1.s8 %v140
    %v417 = vunpack.c.1.s8 %v141
    %v418 = vunpack.c.1.s8 %v142
    %v419 = vunpack.c.1.s8 %v143
    %v420 = vunpack.c.2.s8 %v138
    %v421 = vunpack.c.2.s8 %v139
    %v422 = vunpack.c.2.s8 %v140
    %v423 = vunpack.c.2.s8 %v141
    %v424 = vunpack.c.2.s8 %v142
    %v425 = vunpack.c.2.s8 %v143
    %v426 = vunpack.c.3.s8 %v138
    %v427 = vunpack.c.3.s8 %v139
    %v428 = vunpack.c.3.s8 %v140
    %v429 = vunpack.c.3.s8 %v141
    %v430 = vunpack.c.3.s8 %v142
    %v431 = vunpack.c.3.s8 %v143
    %v432 = vunpack.c.0.s8 %v144
    %v433 = vunpack.c.0.s8 %v145
    %v434 = vunpack.c.0.s8 %v146
    %v435 = vunpack.c.0.s8 %v147
    %v436 = vunpack.c.0.s8 %v148
    %v437 = vunpack.c.0.s8 %v149
    %v438 = vunpack.c.1.s8 %v144
    %v439 = vunpack.c.1.s8 %v145
    %v440 = vunpack.c.1.s8 %v146
    %v441 = vunpack.c.1.s8 %v147
    %v442 = vunpack.c.1.s8 %v148
    %v443 = vunpack.c.1.s8 %v149
    %v444 = vunpack.c.2.s8 %v144
    %v445 = vunpack.c.2.s8 %v145
    %v446 = vunpack.c.2.s8 %v146
    %v447 = vunpack.c.2.s8 %v147
    %v448 = vunpack.c.2.s8 %v148
    %v449 = vunpack.c.2.s8 %v149
    %v450 = vunpack.c.3.s8 %v144
    %v451 = vunpack.c.3.s8 %v145
    %v452 = vunpack.c.3.s8 %v146
    %v453 = vunpack.c.3.s8 %v147
    %v454 = vunpack.c.3.s8 %v148
    %v455 = vunpack.c.3.s8 %v149
    %v456 = vunpack.c.0.s8 %v150
    %v457 = vunpack.c.0.s8 %v151
    %v458 = vunpack.c.0.s8 %v152
    %v459 = vunpack.c.0.s8 %v153
    %v460 = vunpack.c.0.s8 %v154
    %v461 = vunpack.c.0.s8 %v155
    %v462 = vunpack.c.1.s8 %v150
    %v463 = vunpack.c.1.s8 %v151
    %v464 = vunpack.c.1.s8 %v152
    %v465 = vunpack.c.1.s8 %v153
    %v466 = vunpack.c.1.s8 %v154
    %v467 = vunpack.c.1.s8 %v155
    %v468 = vunpack.c.2.s8 %v150
    %v469 = vunpack.c.2.s8 %v151
    %v470 = vunpack.c.2.s8 %v152
    %v471 = vunpack.c.2.s8 %v153
    %v472 = vunpack.c.2.s8 %v154
    %v473 = vunpack.c.2.s8 %v155
    %v474 = vunpack.c.3.s8 %v150
    %v475 = vunpack.c.3.s8 %v151
    %v476 = vunpack.c.3.s8 %v152
    %v477 = vunpack.c.3.s8 %v153
    %v478 = vunpack.c.3.s8 %v154
    %v479 = vunpack.c.3.s8 %v155
    %v480 = vunpack.c.0.s8 %v156
    %v481 = vunpack.c.0.s8 %v157
    %v482 = vunpack.c.0.s8 %v158
    %v483 = vunpack.c.0.s8 %v159
    %v484 = vunpack.c.0.s8 %v160
    %v485 = vunpack.c.0.s8 %v161
    %v486 = vunpack.c.1.s8 %v156
    %v487 = vunpack.c.1.s8 %v157
    %v488 = vunpack.c.1.s8 %v158
    %v489 = vunpack.c.1.s8 %v159
    %v490 = vunpack.c.1.s8 %v160
    %v491 = vunpack.c.1.s8 %v161
    %v492 = vunpack.c.2.s8 %v156
    %v493 = vunpack.c.2.s8 %v157
    %v494 = vunpack.c.2.s8 %v158
    %v495 = vunpack.c.2.s8 %v159
    %v496 = vunpack.c.2.s8 %v160
    %v497 = vunpack.c.2.s8 %v161
    %v498 = vunpack.c.3.s8 %v156
    %v499 = vunpack.c.3.s8 %v157
    %v500 = vunpack.c.3.s8 %v158
    %v501 = vunpack.c.3.s8 %v159
    %v502 = vunpack.c.3.s8 %v160
    %v503 = vunpack.c.3.s8 %v161
    %v504 = vunpack.c.0.s8 %v162
    %v505 = vunpack.c.0.s8 %v163
    %v506 = vunpack.c.0.s8 %v164
    %v507 = vunpack.c.0.s8 %v165
    %v508 = vunpack.c.0.s8 %v166
    %v509 = vunpack.c.0.s8 %v167
    %v510 = vunpack.c.1.s8 %v162
    %v511 = vunpack.c.1.s8 %v163
    %v512 = vunpack.c.1.s8 %v164
    %v513 = vunpack.c.1.s8 %v165
    %v514 = vunpack.c.1.s8 %v166
    %v515 = vunpack.c.1.s8 %v167
    %v516 = vunpack.c.2.s8 %v162
    %v517 = vunpack.c.2.s8 %v163
    %v518 = vunpack.c.2.s8 %v164
    %v519 = vunpack.c.2.s8 %v165
    %v520 = vunpack.c.2.s8 %v166
    %v521 = vunpack.c.2.s8 %v167
    %v522 = vunpack.c.3.s8 %v162
    %v523 = vunpack.c.3.s8 %v163
    %v524 = vunpack.c.3.s8 %v164
    %v525 = vunpack.c.3.s8 %v165
    %v526 = vunpack.c.3.s8 %v166
    %v527 = vunpack.c.3.s8 %v167
    %v528 = vunpack.c.0.s8 %v168
    %v529 = vunpack.c.0.s8 %v169
    %v530 = vunpack.c.0.s8 %v170
    %v531 = vunpack.c.0.s8 %v171
    %v532 = vunpack.c.0.s8 %v172
    %v533 = vunpack.c.0.s8 %v173
    %v534 = vunpack.c.1.s8 %v168
    %v535 = vunpack.c.1.s8 %v169
    %v536 = vunpack.c.1.s8 %v170
    %v537 = vunpack.c.1.s8 %v171
    %v538 = vunpack.c.1.s8 %v172
    %v539 = vunpack.c.1.s8 %v173
    %v540 = vunpack.c.2.s8 %v168
    %v541 = vunpack.c.2.s8 %v169
    %v542 = vunpack.c.2.s8 %v170
    %v543 = vunpack.c.2.s8 %v171
    %v544 = vunpack.c.2.s8 %v172
    %v545 = vunpack.c.2.s8 %v173
    %v546 = vunpack.c.3.s8 %v168
    %v547 = vunpack.c.3.s8 %v169
    %v548 = vunpack.c.3.s8 %v170
    %v549 = vunpack.c.3.s8 %v171
    %v550 = vunpack.c.3.s8 %v172
    %v551 = vunpack.c.3.s8 %v173
    %v552 = vunpack.c.0.s8 %v174
    %v553 = vunpack.c.0.s8 %v175
    %v554 = vunpack.c.0.s8 %v176
    %v555 = vunpack.c.0.s8 %v177
    %v556 = vunpack.c.0.s8 %v178
    %v557 = vunpack.c.0.s8 %v179
    %v558 = vunpack.c.1.s8 %v174
    %v559 = vunpack.c.1.s8 %v175
    %v560 = vunpack.c.1.s8 %v176
    %v561 = vunpack.c.1.s8 %v177
    %v562 = vunpack.c.1.s8 %v178
    %v563 = vunpack.c.1.s8 %v179
    %v564 = vunpack.c.2.s8 %v174
    %v565 = vunpack.c.2.s8 %v175
    %v566 = vunpack.c.2.s8 %v176
    %v567 = vunpack.c.2.s8 %v177
    %v568 = vunpack.c.2.s8 %v178
    %v569 = vunpack.c.2.s8 %v179
    %v570 = vunpack.c.3.s8 %v174
    %v571 = vunpack.c.3.s8 %v175
    %v572 = vunpack.c.3.s8 %v176
    %v573 = vunpack.c.3.s8 %v177
    %v574 = vunpack.c.3.s8 %v178
    %v575 = vunpack.c.3.s8 %v179
    %v576 = vunpack.c.0.s8 %v180
    %v577 = vunpack.c.0.s8 %v181
    %v578 = vunpack.c.0.s8 %v182
    %v579 = vunpack.c.0.s8 %v183
    %v580 = vunpack.c.0.s8 %v184
    %v581 = vunpack.c.0.s8 %v185
    %v582 = vunpack.c.1.s8 %v180
    %v583 = vunpack.c.1.s8 %v181
    %v584 = vunpack.c.1.s8 %v182
    %v585 = vunpack.c.1.s8 %v183
    %v586 = vunpack.c.1.s8 %v184
    %v587 = vunpack.c.1.s8 %v185
    %v588 = vunpack.c.2.s8 %v180
    %v589 = vunpack.c.2.s8 %v181
    %v590 = vunpack.c.2.s8 %v182
    %v591 = vunpack.c.2.s8 %v183
    %v592 = vunpack.c.2.s8 %v184
    %v593 = vunpack.c.2.s8 %v185
    %v594 = vunpack.c.3.s8 %v180
    %v595 = vunpack.c.3.s8 %v181
    %v596 = vunpack.c.3.s8 %v182
    %v597 = vunpack.c.3.s8 %v183
    %v598 = vunpack.c.3.s8 %v184
    %v599 = vunpack.c.3.s8 %v185
    %v600 = vunpack.c.0.s8 %v186
    %v601 = vunpack.c.0.s8 %v187
    %v602 = vunpack.c.0.s8 %v188
    %v603 = vunpack.c.0.s8 %v189
    %v604 = vunpack.c.0.s8 %v190
    %v605 = vunpack.c.0.s8 %v191
    %v606 = vunpack.c.1.s8 %v186
    %v607 = vunpack.c.1.s8 %v187
    %v608 = vunpack.c.1.s8 %v188
    %v609 = vunpack.c.1.s8 %v189
    %v610 = vunpack.c.1.s8 %v190
    %v611 = vunpack.c.1.s8 %v191
    %v612 = vunpack.c.2.s8 %v186
    %v613 = vunpack.c.2.s8 %v187
    %v614 = vunpack.c.2.s8 %v188
    %v615 = vunpack.c.2.s8 %v189
    %v616 = vunpack.c.2.s8 %v190
    %v617 = vunpack.c.2.s8 %v191
    %v618 = vunpack.c.3.s8 %v186
    %v619 = vunpack.c.3.s8 %v187
    %v620 = vunpack.c.3.s8 %v188
    %v621 = vunpack.c.3.s8 %v189
    %v622 = vunpack.c.3.s8 %v190
    %v623 = vunpack.c.3.s8 %v191
    %v624 = vunpack.c.0.s8 %v192
    %v625 = vunpack.c.0.s8 %v193
    %v626 = vunpack.c.0.s8 %v194
    %v627 = vunpack.c.0.s8 %v195
    %v628 = vunpack.c.0.s8 %v196
    %v629 = vunpack.c.0.s8 %v197
    %v630 = vunpack.c.1.s8 %v192
    %v631 = vunpack.c.1.s8 %v193
    %v632 = vunpack.c.1.s8 %v194
    %v633 = vunpack.c.1.s8 %v195
    %v634 = vunpack.c.1.s8 %v196
    %v635 = vunpack.c.1.s8 %v197
    %v636 = vunpack.c.2.s8 %v192
    %v637 = vunpack.c.2.s8 %v193
    %v638 = vunpack.c.2.s8 %v194
    %v639 = vunpack.c.2.s8 %v195
    %v640 = vunpack.c.2.s8 %v196
    %v641 = vunpack.c.2.s8 %v197
    %v642 = vunpack.c.3.s8 %v192
    %v643 = vunpack.c.3.s8 %v193
    %v644 = vunpack.c.3.s8 %v194
    %v645 = vunpack.c.3.s8 %v195
    %v646 = vunpack.c.3.s8 %v196
    %v647 = vunpack.c.3.s8 %v197
    %v648 = vunpack.c.0.s8 %v198
    %v649 = vunpack.c.0.s8 %v199
    %v650 = vunpack.c.0.s8 %v200
    %v651 = vunpack.c.0.s8 %v201
    %v652 = vunpack.c.0.s8 %v202
    %v653 = vunpack.c.0.s8 %v203
    %v654 = vunpack.c.1.s8 %v198
    %v655 = vunpack.c.1.s8 %v199
    %v656 = vunpack.c.1.s8 %v200
    %v657 = vunpack.c.1.s8 %v201
    %v658 = vunpack.c.1.s8 %v202
    %v659 = vunpack.c.1.s8 %v203
    %v660 = vunpack.c.2.s8 %v198
    %v661 = vunpack.c.2.s8 %v199
    %v662 = vunpack.c.2.s8 %v200
    %v663 = vunpack.c.2.s8 %v201
    %v664 = vunpack.c.2.s8 %v202
    %v665 = vunpack.c.2.s8 %v203
    %v666 = vunpack.c.3.s8 %v198
    %v667 = vunpack.c.3.s8 %v199
    %v668 = vunpack.c.3.s8 %v200
    %v669 = vunpack.c.3.s8 %v201
    %v670 = vunpack.c.3.s8 %v202
    %v671 = vunpack.c.3.s8 %v203
    %v672 = vunpack.c.0.s8 %v204
    %v673 = vunpack.c.0.s8 %v205
    %v674 = vunpack.c.0.s8 %v206
    %v675 = vunpack.c.0.s8 %v207
    %v676 = vunpack.c.0.s8 %v208
    %v677 = vunpack.c.0.s8 %v209
    %v678 = vunpack.c.1.s8 %v204
    %v679 = vunpack.c.1.s8 %v205
    %v680 = vunpack.c.1.s8 %v206
    %v681 = vunpack.c.1.s8 %v207
    %v682 = vunpack.c.1.s8 %v208
    %v683 = vunpack.c.1.s8 %v209
    %v684 = vunpack.c.2.s8 %v204
    %v685 = vunpack.c.2.s8 %v205
    %v686 = vunpack.c.2.s8 %v206
    %v687 = vunpack.c.2.s8 %v207
    %v688 = vunpack.c.2.s8 %v208
    %v689 = vunpack.c.2.s8 %v209
    %v690 = vunpack.c.3.s8 %v204
    %v691 = vunpack.c.3.s8 %v205
    %v692 = vunpack.c.3.s8 %v206
    %v693 = vunpack.c.3.s8 %v207
    %v694 = vunpack.c.3.s8 %v208
    %v695 = vunpack.c.3.s8 %v209
    %v696 = vunpack.c.0.s8 %v210
    %v697 = vunpack.c.0.s8 %v211
    %v698 = vunpack.c.0.s8 %v212
    %v699 = vunpack.c.0.s8 %v213
    %v700 = vunpack.c.0.s8 %v214
    %v701 = vunpack.c.0.s8 %v215
    %v702 = vunpack.c.1.s8 %v210
    %v703 = vunpack.c.1.s8 %v211
    %v704 = vunpack.c.1.s8 %v212
    %v705 = vunpack.c.1.s8 %v213
    %v706 = vunpack.c.1.s8 %v214
    %v707 = vunpack.c.1.s8 %v215
    %v708 = vunpack.c.2.s8 %v210
    %v709 = vunpack.c.2.s8 %v211
    %v710 = vunpack.c.2.s8 %v212
    %v711 = vunpack.c.2.s8 %v213
    %v712 = vunpack.c.2.s8 %v214
    %v713 = vunpack.c.2.s8 %v215
    %v714 = vunpack.c.3.s8 %v210
    %v715 = vunpack.c.3.s8 %v211
    %v716 = vunpack.c.3.s8 %v212
    %v717 = vunpack.c.3.s8 %v213
    %v718 = vunpack.c.3.s8 %v214
    %v719 = vunpack.c.3.s8 %v215
    %v720 = vunpack.c.0.s8 %v216
    %v721 = vunpack.c.0.s8 %v217
    %v722 = vunpack.c.0.s8 %v218
    %v723 = vunpack.c.0.s8 %v219
    %v724 = vunpack.c.0.s8 %v220
    %v725 = vunpack.c.0.s8 %v221
    %v726 = vunpack.c.1.s8 %v216
    %v727 = vunpack.c.1.s8 %v217
    %v728 = vunpack.c.1.s8 %v218
    %v729 = vunpack.c.1.s8 %v219
    %v730 = vunpack.c.1.s8 %v220
    %v731 = vunpack.c.1.s8 %v221
    %v732 = vunpack.c.2.s8 %v216
    %v733 = vunpack.c.2.s8 %v217
    %v734 = vunpack.c.2.s8 %v218
    %v735 = vunpack.c.2.s8 %v219
    %v736 = vunpack.c.2.s8 %v220
    %v737 = vunpack.c.2.s8 %v221
    %v738 = vunpack.c.3.s8 %v216
    %v739 = vunpack.c.3.s8 %v217
    %v740 = vunpack.c.3.s8 %v218
    %v741 = vunpack.c.3.s8 %v219
    %v742 = vunpack.c.3.s8 %v220
    %v743 = vunpack.c.3.s8 %v221
    %v744 = vunpack.c.0.s8 %v222
    %v745 = vunpack.c.0.s8 %v223
    %v746 = vunpack.c.0.s8 %v224
    %v747 = vunpack.c.0.s8 %v225
    %v748 = vunpack.c.0.s8 %v226
    %v749 = vunpack.c.0.s8 %v227
    %v750 = vunpack.c.1.s8 %v222
    %v751 = vunpack.c.1.s8 %v223
    %v752 = vunpack.c.1.s8 %v224
    %v753 = vunpack.c.1.s8 %v225
    %v754 = vunpack.c.1.s8 %v226
    %v755 = vunpack.c.1.s8 %v227
    %v756 = vunpack.c.2.s8 %v222
    %v757 = vunpack.c.2.s8 %v223
    %v758 = vunpack.c.2.s8 %v224
    %v759 = vunpack.c.2.s8 %v225
    %v760 = vunpack.c.2.s8 %v226
    %v761 = vunpack.c.2.s8 %v227
    %v762 = vunpack.c.3.s8 %v222
    %v763 = vunpack.c.3.s8 %v223
    %v764 = vunpack.c.3.s8 %v224
    %v765 = vunpack.c.3.s8 %v225
    %v766 = vunpack.c.3.s8 %v226
    %v767 = vunpack.c.3.s8 %v227
    %v768 = vunpack.c.0.s8 %v228
    %v769 = vunpack.c.0.s8 %v229
    %v770 = vunpack.c.0.s8 %v230
    %v771 = vunpack.c.0.s8 %v231
    %v772 = vunpack.c.0.s8 %v232
    %v773 = vunpack.c.0.s8 %v233
    %v774 = vunpack.c.1.s8 %v228
    %v775 = vunpack.c.1.s8 %v229
    %v776 = vunpack.c.1.s8 %v230
    %v777 = vunpack.c.1.s8 %v231
    %v778 = vunpack.c.1.s8 %v232
    %v779 = vunpack.c.1.s8 %v233
    %v780 = vunpack.c.2.s8 %v228
    %v781 = vunpack.c.2.s8 %v229
    %v782 = vunpack.c.2.s8 %v230
    %v783 = vunpack.c.2.s8 %v231
    %v784 = vunpack.c.2.s8 %v232
    %v785 = vunpack.c.2.s8 %v233
    %v786 = vunpack.c.3.s8 %v228
    %v787 = vunpack.c.3.s8 %v229
    %v788 = vunpack.c.3.s8 %v230
    %v789 = vunpack.c.3.s8 %v231
    %v790 = vunpack.c.3.s8 %v232
    %v791 = vunpack.c.3.s8 %v233
    %v792 = vunpack.c.0.s8 %v234
    %v793 = vunpack.c.0.s8 %v235
    %v794 = vunpack.c.0.s8 %v236
    %v795 = vunpack.c.0.s8 %v237
    %v796 = vunpack.c.0.s8 %v238
    %v797 = vunpack.c.0.s8 %v239
    %v798 = vunpack.c.1.s8 %v234
    %v799 = vunpack.c.1.s8 %v235
    %v800 = vunpack.c.1.s8 %v236
    %v801 = vunpack.c.1.s8 %v237
    %v802 = vunpack.c.1.s8 %v238
    %v803 = vunpack.c.1.s8 %v239
    %v804 = vunpack.c.2.s8 %v234
    %v805 = vunpack.c.2.s8 %v235
    %v806 = vunpack.c.2.s8 %v236
    %v807 = vunpack.c.2.s8 %v237
    %v808 = vunpack.c.2.s8 %v238
    %v809 = vunpack.c.2.s8 %v239
    %v810 = vunpack.c.3.s8 %v234
    %v811 = vunpack.c.3.s8 %v235
    %v812 = vunpack.c.3.s8 %v236
    %v813 = vunpack.c.3.s8 %v237
    %v814 = vunpack.c.3.s8 %v238
    %v815 = vunpack.c.3.s8 %v239
    %v816 = vcvt.s32.f32 %v240
    %v817 = vcvt.s32.f32 %v241
    %v818 = vcvt.s32.f32 %v242
    %v819 = vcvt.s32.f32 %v243
    %v820 = vcvt.s32.f32 %v244
    %v821 = vcvt.s32.f32 %v245
    %v822 = vcvt.s32.f32 %v246
    %v823 = vcvt.s32.f32 %v247
    %v824 = vcvt.s32.f32 %v248
    %v825 = vcvt.s32.f32 %v249
    %v826 = vcvt.s32.f32 %v250
    %v827 = vcvt.s32.f32 %v251
    %v828 = vcvt.s32.f32 %v252
    %v829 = vcvt.s32.f32 %v253
    %v830 = vcvt.s32.f32 %v254
    %v831 = vcvt.s32.f32 %v255
    %v832 = vcvt.s32.f32 %v256
    %v833 = vcvt.s32.f32 %v257
    %v834 = vcvt.s32.f32 %v258
    %v835 = vcvt.s32.f32 %v259
    %v836 = vcvt.s32.f32 %v260
    %v837 = vcvt.s32.f32 %v261
    %v838 = vcvt.s32.f32 %v262
    %v839 = vcvt.s32.f32 %v263
    %v840 = vcvt.s32.f32 %v264
    %v841 = vcvt.s32.f32 %v265
    %v842 = vcvt.s32.f32 %v266
    %v843 = vcvt.s32.f32 %v267
    %v844 = vcvt.s32.f32 %v268
    %v845 = vcvt.s32.f32 %v269
    %v846 = vcvt.s32.f32 %v270
    %v847 = vcvt.s32.f32 %v271
    %v848 = vcvt.s32.f32 %v272
    %v849 = vcvt.s32.f32 %v273
    %v850 = vcvt.s32.f32 %v274
    %v851 = vcvt.s32.f32 %v275
    %v852 = vcvt.s32.f32 %v276
    %v853 = vcvt.s32.f32 %v277
    %v854 = vcvt.s32.f32 %v278
    %v855 = vcvt.s32.f32 %v279
    %v856 = vcvt.s32.f32 %v280
    %v857 = vcvt.s32.f32 %v281
    %v858 = vcvt.s32.f32 %v282
    %v859 = vcvt.s32.f32 %v283
    %v860 = vcvt.s32.f32 %v284
    %v861 = vcvt.s32.f32 %v285
    %v862 = vcvt.s32.f32 %v286
    %v863 = vcvt.s32.f32 %v287
    %v864 = vcvt.s32.f32 %v288
    %v865 = vcvt.s32.f32 %v289
    %v866 = vcvt.s32.f32 %v290
    %v867 = vcvt.s32.f32 %v291
    %v868 = vcvt.s32.f32 %v292
    %v869 = vcvt.s32.f32 %v293
    %v870 = vcvt.s32.f32 %v294
    %v871 = vcvt.s32.f32 %v295
    %v872 = vcvt.s32.f32 %v296
    %v873 = vcvt.s32.f32 %v297
    %v874 = vcvt.s32.f32 %v298
    %v875 = vcvt.s32.f32 %v299
    %v876 = vcvt.s32.f32 %v300
    %v877 = vcvt.s32.f32 %v301
    %v878 = vcvt.s32.f32 %v302
    %v879 = vcvt.s32.f32 %v303
    %v880 = vcvt.s32.f32 %v304
    %v881 = vcvt.s32.f32 %v305
    %v882 = vcvt.s32.f32 %v306
    %v883 = vcvt.s32.f32 %v307
    %v884 = vcvt.s32.f32 %v308
    %v885 = vcvt.s32.f32 %v309
    %v886 = vcvt.s32.f32 %v310
    %v887 = vcvt.s32.f32 %v311
    %v888 = vcvt.s32.f32 %v312
    %v889 = vcvt.s32.f32 %v313
    %v890 = vcvt.s32.f32 %v314
    %v891 = vcvt.s32.f32 %v315
    %v892 = vcvt.s32.f32 %v316
    %v893 = vcvt.s32.f32 %v317
    %v894 = vcvt.s32.f32 %v318
    %v895 = vcvt.s32.f32 %v319
    %v896 = vcvt.s32.f32 %v320
    %v897 = vcvt.s32.f32 %v321
    %v898 = vcvt.s32.f32 %v322
    %v899 = vcvt.s32.f32 %v323
    %v900 = vcvt.s32.f32 %v324
    %v901 = vcvt.s32.f32 %v325
    %v902 = vcvt.s32.f32 %v326
    %v903 = vcvt.s32.f32 %v327
    %v904 = vcvt.s32.f32 %v328
    %v905 = vcvt.s32.f32 %v329
    %v906 = vcvt.s32.f32 %v330
    %v907 = vcvt.s32.f32 %v331
    %v908 = vcvt.s32.f32 %v332
    %v909 = vcvt.s32.f32 %v333
    %v910 = vcvt.s32.f32 %v334
    %v911 = vcvt.s32.f32 %v335
    %v912 = vcvt.s32.f32 %v336
    %v913 = vcvt.s32.f32 %v337
    %v914 = vcvt.s32.f32 %v338
    %v915 = vcvt.s32.f32 %v339
    %v916 = vcvt.s32.f32 %v340
    %v917 = vcvt.s32.f32 %v341
    %v918 = vcvt.s32.f32 %v342
    %v919 = vcvt.s32.f32 %v343
    %v920 = vcvt.s32.f32 %v344
    %v921 = vcvt.s32.f32 %v345
    %v922 = vcvt.s32.f32 %v346
    %v923 = vcvt.s32.f32 %v347
    %v924 = vcvt.s32.f32 %v348
    %v925 = vcvt.s32.f32 %v349
    %v926 = vcvt.s32.f32 %v350
    %v927 = vcvt.s32.f32 %v351
    %v928 = vcvt.s32.f32 %v352
    %v929 = vcvt.s32.f32 %v353
    %v930 = vcvt.s32.f32 %v354
    %v931 = vcvt.s32.f32 %v355
    %v932 = vcvt.s32.f32 %v356
    %v933 = vcvt.s32.f32 %v357
    %v934 = vcvt.s32.f32 %v358
    %v935 = vcvt.s32.f32 %v359
    %v936 = vcvt.s32.f32 %v360
    %v937 = vcvt.s32.f32 %v361
    %v938 = vcvt.s32.f32 %v362
    %v939 = vcvt.s32.f32 %v363
    %v940 = vcvt.s32.f32 %v364
    %v941 = vcvt.s32.f32 %v365
    %v942 = vcvt.s32.f32 %v366
    %v943 = vcvt.s32.f32 %v367
    %v944 = vcvt.s32.f32 %v368
    %v945 = vcvt.s32.f32 %v369
    %v946 = vcvt.s32.f32 %v370
    %v947 = vcvt.s32.f32 %v371
    %v948 = vcvt.s32.f32 %v372
    %v949 = vcvt.s32.f32 %v373
    %v950 = vcvt.s32.f32 %v374
    %v951 = vcvt.s32.f32 %v375
    %v952 = vcvt.s32.f32 %v376
    %v953 = vcvt.s32.f32 %v377
    %v954 = vcvt.s32.f32 %v378
    %v955 = vcvt.s32.f32 %v379
    %v956 = vcvt.s32.f32 %v380
    %v957 = vcvt.s32.f32 %v381
    %v958 = vcvt.s32.f32 %v382
    %v959 = vcvt.s32.f32 %v383
    %v960 = vcvt.s32.f32 %v384
    %v961 = vcvt.s32.f32 %v385
    %v962 = vcvt.s32.f32 %v386
    %v963 = vcvt.s32.f32 %v387
    %v964 = vcvt.s32.f32 %v388
    %v965 = vcvt.s32.f32 %v389
    %v966 = vcvt.s32.f32 %v390
    %v967 = vcvt.s32.f32 %v391
    %v968 = vcvt.s32.f32 %v392
    %v969 = vcvt.s32.f32 %v393
    %v970 = vcvt.s32.f32 %v394
    %v971 = vcvt.s32.f32 %v395
    %v972 = vcvt.s32.f32 %v396
    %v973 = vcvt.s32.f32 %v397
    %v974 = vcvt.s32.f32 %v398
    %v975 = vcvt.s32.f32 %v399
    %v976 = vcvt.s32.f32 %v400
    %v977 = vcvt.s32.f32 %v401
    %v978 = vcvt.s32.f32 %v402
    %v979 = vcvt.s32.f32 %v403
    %v980 = vcvt.s32.f32 %v404
    %v981 = vcvt.s32.f32 %v405
    %v982 = vcvt.s32.f32 %v406
    %v983 = vcvt.s32.f32 %v407
    %v984 = vcvt.s32.f32 %v408
    %v985 = vcvt.s32.f32 %v409
    %v986 = vcvt.s32.f32 %v410
    %v987 = vcvt.s32.f32 %v411
    %v988 = vcvt.s32.f32 %v412
    %v989 = vcvt.s32.f32 %v413
    %v990 = vcvt.s32.f32 %v414
    %v991 = vcvt.s32.f32 %v415
    %v992 = vcvt.s32.f32 %v416
    %v993 = vcvt.s32.f32 %v417
    %v994 = vcvt.s32.f32 %v418
    %v995 = vcvt.s32.f32 %v419
    %v996 = vcvt.s32.f32 %v420
    %v997 = vcvt.s32.f32 %v421
    %v998 = vcvt.s32.f32 %v422
    %v999 = vcvt.s32.f32 %v423
    %v1000 = vcvt.s32.f32 %v424
    %v1001 = vcvt.s32.f32 %v425
    %v1002 = vcvt.s32.f32 %v426
    %v1003 = vcvt.s32.f32 %v427
    %v1004 = vcvt.s32.f32 %v428
    %v1005 = vcvt.s32.f32 %v429
    %v1006 = vcvt.s32.f32 %v430
    %v1007 = vcvt.s32.f32 %v431
    %v1008 = vcvt.s32.f32 %v432
    %v1009 = vcvt.s32.f32 %v433
    %v1010 = vcvt.s32.f32 %v434
    %v1011 = vcvt.s32.f32 %v435
    %v1012 = vcvt.s32.f32 %v436
    %v1013 = vcvt.s32.f32 %v437
    %v1014 = vcvt.s32.f32 %v438
    %v1015 = vcvt.s32.f32 %v439
    %v1016 = vcvt.s32.f32 %v440
    %v1017 = vcvt.s32.f32 %v441
    %v1018 = vcvt.s32.f32 %v442
    %v1019 = vcvt.s32.f32 %v443
    %v1020 = vcvt.s32.f32 %v444
    %v1021 = vcvt.s32.f32 %v445
    %v1022 = vcvt.s32.f32 %v446
    %v1023 = vcvt.s32.f32 %v447
    %v1024 = vcvt.s32.f32 %v448
    %v1025 = vcvt.s32.f32 %v449
    %v1026 = vcvt.s32.f32 %v450
    %v1027 = vcvt.s32.f32 %v451
    %v1028 = vcvt.s32.f32 %v452
    %v1029 = vcvt.s32.f32 %v453
    %v1030 = vcvt.s32.f32 %v454
    %v1031 = vcvt.s32.f32 %v455
    %v1032 = vcvt.s32.f32 %v456
    %v1033 = vcvt.s32.f32 %v457
    %v1034 = vcvt.s32.f32 %v458
    %v1035 = vcvt.s32.f32 %v459
    %v1036 = vcvt.s32.f32 %v460
    %v1037 = vcvt.s32.f32 %v461
    %v1038 = vcvt.s32.f32 %v462
    %v1039 = vcvt.s32.f32 %v463
    %v1040 = vcvt.s32.f32 %v464
    %v1041 = vcvt.s32.f32 %v465
    %v1042 = vcvt.s32.f32 %v466
    %v1043 = vcvt.s32.f32 %v467
    %v1044 = vcvt.s32.f32 %v468
    %v1045 = vcvt.s32.f32 %v469
    %v1046 = vcvt.s32.f32 %v470
    %v1047 = vcvt.s32.f32 %v471
    %v1048 = vcvt.s32.f32 %v472
    %v1049 = vcvt.s32.f32 %v473
    %v1050 = vcvt.s32.f32 %v474
    %v1051 = vcvt.s32.f32 %v475
    %v1052 = vcvt.s32.f32 %v476
    %v1053 = vcvt.s32.f32 %v477
    %v1054 = vcvt.s32.f32 %v478
    %v1055 = vcvt.s32.f32 %v479
    %v1056 = vcvt.s32.f32 %v480
    %v1057 = vcvt.s32.f32 %v481
    %v1058 = vcvt.s32.f32 %v482
    %v1059 = vcvt.s32.f32 %v483
    %v1060 = vcvt.s32.f32 %v484
    %v1061 = vcvt.s32.f32 %v485
    %v1062 = vcvt.s32.f32 %v486
    %v1063 = vcvt.s32.f32 %v487
    %v1064 = vcvt.s32.f32 %v488
    %v1065 = vcvt.s32.f32 %v489
    %v1066 = vcvt.s32.f32 %v490
    %v1067 = vcvt.s32.f32 %v491
    %v1068 = vcvt.s32.f32 %v492
    %v1069 = vcvt.s32.f32 %v493
    %v1070 = vcvt.s32.f32 %v494
    %v1071 = vcvt.s32.f32 %v495
    %v1072 = vcvt.s32.f32 %v496
    %v1073 = vcvt.s32.f32 %v497
    %v1074 = vcvt.s32.f32 %v498
    %v1075 = vcvt.s32.f32 %v499
    %v1076 = vcvt.s32.f32 %v500
    %v1077 = vcvt.s32.f32 %v501
    %v1078 = vcvt.s32.f32 %v502
    %v1079 = vcvt.s32.f32 %v503
    %v1080 = vcvt.s32.f32 %v504
    %v1081 = vcvt.s32.f32 %v505
    %v1082 = vcvt.s32.f32 %v506
    %v1083 = vcvt.s32.f32 %v507
    %v1084 = vcvt.s32.f32 %v508
    %v1085 = vcvt.s32.f32 %v509
    %v1086 = vcvt.s32.f32 %v510
    %v1087 = vcvt.s32.f32 %v511
    %v1088 = vcvt.s32.f32 %v512
    %v1089 = vcvt.s32.f32 %v513
    %v1090 = vcvt.s32.f32 %v514
    %v1091 = vcvt.s32.f32 %v515
    %v1092 = vcvt.s32.f32 %v516
    %v1093 = vcvt.s32.f32 %v517
    %v1094 = vcvt.s32.f32 %v518
    %v1095 = vcvt.s32.f32 %v519
    %v1096 = vcvt.s32.f32 %v520
    %v1097 = vcvt.s32.f32 %v521
    %v1098 = vcvt.s32.f32 %v522
    %v1099 = vcvt.s32.f32 %v523
    %v1100 = vcvt.s32.f32 %v524
    %v1101 = vcvt.s32.f32 %v525
    %v1102 = vcvt.s32.f32 %v526
    %v1103 = vcvt.s32.f32 %v527
    %v1104 = vcvt.s32.f32 %v528
    %v1105 = vcvt.s32.f32 %v529
    %v1106 = vcvt.s32.f32 %v530
    %v1107 = vcvt.s32.f32 %v531
    %v1108 = vcvt.s32.f32 %v532
    %v1109 = vcvt.s32.f32 %v533
    %v1110 = vcvt.s32.f32 %v534
    %v1111 = vcvt.s32.f32 %v535
    %v1112 = vcvt.s32.f32 %v536
    %v1113 = vcvt.s32.f32 %v537
    %v1114 = vcvt.s32.f32 %v538
    %v1115 = vcvt.s32.f32 %v539
    %v1116 = vcvt.s32.f32 %v540
    %v1117 = vcvt.s32.f32 %v541
    %v1118 = vcvt.s32.f32 %v542
    %v1119 = vcvt.s32.f32 %v543
    %v1120 = vcvt.s32.f32 %v544
    %v1121 = vcvt.s32.f32 %v545
    %v1122 = vcvt.s32.f32 %v546
    %v1123 = vcvt.s32.f32 %v547
    %v1124 = vcvt.s32.f32 %v548
    %v1125 = vcvt.s32.f32 %v549
    %v1126 = vcvt.s32.f32 %v550
    %v1127 = vcvt.s32.f32 %v551
    %v1128 = vcvt.s32.f32 %v552
    %v1129 = vcvt.s32.f32 %v553
    %v1130 = vcvt.s32.f32 %v554
    %v1131 = vcvt.s32.f32 %v555
    %v1132 = vcvt.s32.f32 %v556
    %v1133 = vcvt.s32.f32 %v557
    %v1134 = vcvt.s32.f32 %v558
    %v1135 = vcvt.s32.f32 %v559
    %v1136 = vcvt.s32.f32 %v560
    %v1137 = vcvt.s32.f32 %v561
    %v1138 = vcvt.s32.f32 %v562
    %v1139 = vcvt.s32.f32 %v563
    %v1140 = vcvt.s32.f32 %v564
    %v1141 = vcvt.s32.f32 %v565
    %v1142 = vcvt.s32.f32 %v566
    %v1143 = vcvt.s32.f32 %v567
    %v1144 = vcvt.s32.f32 %v568
    %v1145 = vcvt.s32.f32 %v569
    %v1146 = vcvt.s32.f32 %v570
    %v1147 = vcvt.s32.f32 %v571
    %v1148 = vcvt.s32.f32 %v572
    %v1149 = vcvt.s32.f32 %v573
    %v1150 = vcvt.s32.f32 %v574
    %v1151 = vcvt.s32.f32 %v575
    %v1152 = vcvt.s32.f32 %v576
    %v1153 = vcvt.s32.f32 %v577
    %v1154 = vcvt.s32.f32 %v578
    %v1155 = vcvt.s32.f32 %v579
    %v1156 = vcvt.s32.f32 %v580
    %v1157 = vcvt.s32.f32 %v581
    %v1158 = vcvt.s32.f32 %v582
    %v1159 = vcvt.s32.f32 %v583
    %v1160 = vcvt.s32.f32 %v584
    %v1161 = vcvt.s32.f32 %v585
    %v1162 = vcvt.s32.f32 %v586
    %v1163 = vcvt.s32.f32 %v587
    %v1164 = vcvt.s32.f32 %v588
    %v1165 = vcvt.s32.f32 %v589
    %v1166 = vcvt.s32.f32 %v590
    %v1167 = vcvt.s32.f32 %v591
    %v1168 = vcvt.s32.f32 %v592
    %v1169 = vcvt.s32.f32 %v593
    %v1170 = vcvt.s32.f32 %v594
    %v1171 = vcvt.s32.f32 %v595
    %v1172 = vcvt.s32.f32 %v596
    %v1173 = vcvt.s32.f32 %v597
    %v1174 = vcvt.s32.f32 %v598
    %v1175 = vcvt.s32.f32 %v599
    %v1176 = vcvt.s32.f32 %v600
    %v1177 = vcvt.s32.f32 %v601
    %v1178 = vcvt.s32.f32 %v602
    %v1179 = vcvt.s32.f32 %v603
    %v1180 = vcvt.s32.f32 %v604
    %v1181 = vcvt.s32.f32 %v605
    %v1182 = vcvt.s32.f32 %v606
    %v1183 = vcvt.s32.f32 %v607
    %v1184 = vcvt.s32.f32 %v608
    %v1185 = vcvt.s32.f32 %v609
    %v1186 = vcvt.s32.f32 %v610
    %v1187 = vcvt.s32.f32 %v611
    %v1188 = vcvt.s32.f32 %v612
    %v1189 = vcvt.s32.f32 %v613
    %v1190 = vcvt.s32.f32 %v614
    %v1191 = vcvt.s32.f32 %v615
    %v1192 = vcvt.s32.f32 %v616
    %v1193 = vcvt.s32.f32 %v617
    %v1194 = vcvt.s32.f32 %v618
    %v1195 = vcvt.s32.f32 %v619
    %v1196 = vcvt.s32.f32 %v620
    %v1197 = vcvt.s32.f32 %v621
    %v1198 = vcvt.s32.f32 %v622
    %v1199 = vcvt.s32.f32 %v623
    %v1200 = vcvt.s32.f32 %v624
    %v1201 = vcvt.s32.f32 %v625
    %v1202 = vcvt.s32.f32 %v626
    %v1203 = vcvt.s32.f32 %v627
    %v1204 = vcvt.s32.f32 %v628
    %v1205 = vcvt.s32.f32 %v629
    %v1206 = vcvt.s32.f32 %v630
    %v1207 = vcvt.s32.f32 %v631
    %v1208 = vcvt.s32.f32 %v632
    %v1209 = vcvt.s32.f32 %v633
    %v1210 = vcvt.s32.f32 %v634
    %v1211 = vcvt.s32.f32 %v635
    %v1212 = vcvt.s32.f32 %v636
    %v1213 = vcvt.s32.f32 %v637
    %v1214 = vcvt.s32.f32 %v638
    %v1215 = vcvt.s32.f32 %v639
    %v1216 = vcvt.s32.f32 %v640
    %v1217 = vcvt.s32.f32 %v641
    %v1218 = vcvt.s32.f32 %v642
    %v1219 = vcvt.s32.f32 %v643
    %v1220 = vcvt.s32.f32 %v644
    %v1221 = vcvt.s32.f32 %v645
    %v1222 = vcvt.s32.f32 %v646
    %v1223 = vcvt.s32.f32 %v647
    %v1224 = vcvt.s32.f32 %v648
    %v1225 = vcvt.s32.f32 %v649
    %v1226 = vcvt.s32.f32 %v650
    %v1227 = vcvt.s32.f32 %v651
    %v1228 = vcvt.s32.f32 %v652
    %v1229 = vcvt.s32.f32 %v653
    %v1230 = vcvt.s32.f32 %v654
    %v1231 = vcvt.s32.f32 %v655
    %v1232 = vcvt.s32.f32 %v656
    %v1233 = vcvt.s32.f32 %v657
    %v1234 = vcvt.s32.f32 %v658
    %v1235 = vcvt.s32.f32 %v659
    %v1236 = vcvt.s32.f32 %v660
    %v1237 = vcvt.s32.f32 %v661
    %v1238 = vcvt.s32.f32 %v662
    %v1239 = vcvt.s32.f32 %v663
    %v1240 = vcvt.s32.f32 %v664
    %v1241 = vcvt.s32.f32 %v665
    %v1242 = vcvt.s32.f32 %v666
    %v1243 = vcvt.s32.f32 %v667
    %v1244 = vcvt.s32.f32 %v668
    %v1245 = vcvt.s32.f32 %v669
    %v1246 = vcvt.s32.f32 %v670
    %v1247 = vcvt.s32.f32 %v671
    %v1248 = vcvt.s32.f32 %v672
    %v1249 = vcvt.s32.f32 %v673
    %v1250 = vcvt.s32.f32 %v674
    %v1251 = vcvt.s32.f32 %v675
    %v1252 = vcvt.s32.f32 %v676
    %v1253 = vcvt.s32.f32 %v677
    %v1254 = vcvt.s32.f32 %v678
    %v1255 = vcvt.s32.f32 %v679
    %v1256 = vcvt.s32.f32 %v680
    %v1257 = vcvt.s32.f32 %v681
    %v1258 = vcvt.s32.f32 %v682
    %v1259 = vcvt.s32.f32 %v683
    %v1260 = vcvt.s32.f32 %v684
    %v1261 = vcvt.s32.f32 %v685
    %v1262 = vcvt.s32.f32 %v686
    %v1263 = vcvt.s32.f32 %v687
    %v1264 = vcvt.s32.f32 %v688
    %v1265 = vcvt.s32.f32 %v689
    %v1266 = vcvt.s32.f32 %v690
    %v1267 = vcvt.s32.f32 %v691
    %v1268 = vcvt.s32.f32 %v692
    %v1269 = vcvt.s32.f32 %v693
    %v1270 = vcvt.s32.f32 %v694
    %v1271 = vcvt.s32.f32 %v695
    %v1272 = vcvt.s32.f32 %v696
    %v1273 = vcvt.s32.f32 %v697
    %v1274 = vcvt.s32.f32 %v698
    %v1275 = vcvt.s32.f32 %v699
    %v1276 = vcvt.s32.f32 %v700
    %v1277 = vcvt.s32.f32 %v701
    %v1278 = vcvt.s32.f32 %v702
    %v1279 = vcvt.s32.f32 %v703
    %v1280 = vcvt.s32.f32 %v704
    %v1281 = vcvt.s32.f32 %v705
    %v1282 = vcvt.s32.f32 %v706
    %v1283 = vcvt.s32.f32 %v707
    %v1284 = vcvt.s32.f32 %v708
    %v1285 = vcvt.s32.f32 %v709
    %v1286 = vcvt.s32.f32 %v710
    %v1287 = vcvt.s32.f32 %v711
    %v1288 = vcvt.s32.f32 %v712
    %v1289 = vcvt.s32.f32 %v713
    %v1290 = vcvt.s32.f32 %v714
    %v1291 = vcvt.s32.f32 %v715
    %v1292 = vcvt.s32.f32 %v716
    %v1293 = vcvt.s32.f32 %v717
    %v1294 = vcvt.s32.f32 %v718
    %v1295 = vcvt.s32.f32 %v719
    %v1296 = vcvt.s32.f32 %v720
    %v1297 = vcvt.s32.f32 %v721
    %v1298 = vcvt.s32.f32 %v722
    %v1299 = vcvt.s32.f32 %v723
    %v1300 = vcvt.s32.f32 %v724
    %v1301 = vcvt.s32.f32 %v725
    %v1302 = vcvt.s32.f32 %v726
    %v1303 = vcvt.s32.f32 %v727
    %v1304 = vcvt.s32.f32 %v728
    %v1305 = vcvt.s32.f32 %v729
    %v1306 = vcvt.s32.f32 %v730
    %v1307 = vcvt.s32.f32 %v731
    %v1308 = vcvt.s32.f32 %v732
    %v1309 = vcvt.s32.f32 %v733
    %v1310 = vcvt.s32.f32 %v734
    %v1311 = vcvt.s32.f32 %v735
    %v1312 = vcvt.s32.f32 %v736
    %v1313 = vcvt.s32.f32 %v737
    %v1314 = vcvt.s32.f32 %v738
    %v1315 = vcvt.s32.f32 %v739
    %v1316 = vcvt.s32.f32 %v740
    %v1317 = vcvt.s32.f32 %v741
    %v1318 = vcvt.s32.f32 %v742
    %v1319 = vcvt.s32.f32 %v743
    %v1320 = vcvt.s32.f32 %v744
    %v1321 = vcvt.s32.f32 %v745
    %v1322 = vcvt.s32.f32 %v746
    %v1323 = vcvt.s32.f32 %v747
    %v1324 = vcvt.s32.f32 %v748
    %v1325 = vcvt.s32.f32 %v749
    %v1326 = vcvt.s32.f32 %v750
    %v1327 = vcvt.s32.f32 %v751
    %v1328 = vcvt.s32.f32 %v752
    %v1329 = vcvt.s32.f32 %v753
    %v1330 = vcvt.s32.f32 %v754
    %v1331 = vcvt.s32.f32 %v755
    %v1332 = vcvt.s32.f32 %v756
    %v1333 = vcvt.s32.f32 %v757
    %v1334 = vcvt.s32.f32 %v758
    %v1335 = vcvt.s32.f32 %v759
    %v1336 = vcvt.s32.f32 %v760
    %v1337 = vcvt.s32.f32 %v761
    %v1338 = vcvt.s32.f32 %v762
    %v1339 = vcvt.s32.f32 %v763
    %v1340 = vcvt.s32.f32 %v764
    %v1341 = vcvt.s32.f32 %v765
    %v1342 = vcvt.s32.f32 %v766
    %v1343 = vcvt.s32.f32 %v767
    %v1344 = vcvt.s32.f32 %v768
    %v1345 = vcvt.s32.f32 %v769
    %v1346 = vcvt.s32.f32 %v770
    %v1347 = vcvt.s32.f32 %v771
    %v1348 = vcvt.s32.f32 %v772
    %v1349 = vcvt.s32.f32 %v773
    %v1350 = vcvt.s32.f32 %v774
    %v1351 = vcvt.s32.f32 %v775
    %v1352 = vcvt.s32.f32 %v776
    %v1353 = vcvt.s32.f32 %v777
    %v1354 = vcvt.s32.f32 %v778
    %v1355 = vcvt.s32.f32 %v779
    %v1356 = vcvt.s32.f32 %v780
    %v1357 = vcvt.s32.f32 %v781
    %v1358 = vcvt.s32.f32 %v782
    %v1359 = vcvt.s32.f32 %v783
    %v1360 = vcvt.s32.f32 %v784
    %v1361 = vcvt.s32.f32 %v785
    %v1362 = vcvt.s32.f32 %v786
    %v1363 = vcvt.s32.f32 %v787
    %v1364 = vcvt.s32.f32 %v788
    %v1365 = vcvt.s32.f32 %v789
    %v1366 = vcvt.s32.f32 %v790
    %v1367 = vcvt.s32.f32 %v791
    %v1368 = vcvt.s32.f32 %v792
    %v1369 = vcvt.s32.f32 %v793
    %v1370 = vcvt.s32.f32 %v794
    %v1371 = vcvt.s32.f32 %v795
    %v1372 = vcvt.s32.f32 %v796
    %v1373 = vcvt.s32.f32 %v797
    %v1374 = vcvt.s32.f32 %v798
    %v1375 = vcvt.s32.f32 %v799
    %v1376 = vcvt.s32.f32 %v800
    %v1377 = vcvt.s32.f32 %v801
    %v1378 = vcvt.s32.f32 %v802
    %v1379 = vcvt.s32.f32 %v803
    %v1380 = vcvt.s32.f32 %v804
    %v1381 = vcvt.s32.f32 %v805
    %v1382 = vcvt.s32.f32 %v806
    %v1383 = vcvt.s32.f32 %v807
    %v1384 = vcvt.s32.f32 %v808
    %v1385 = vcvt.s32.f32 %v809
    %v1386 = vcvt.s32.f32 %v810
    %v1387 = vcvt.s32.f32 %v811
    %v1388 = vcvt.s32.f32 %v812
    %v1389 = vcvt.s32.f32 %v813
    %v1390 = vcvt.s32.f32 %v814
    %v1391 = vcvt.s32.f32 %v815
    %v1392 = vld [vmem:[#allocation7] sm:$0x3f]
    %v1394 = vperm.slane %v1392, 0
    %v1395 = vperm.slane %v1392, 1
    %v1396 = vperm.slane %v1392, 2
    %v1397 = vperm.slane %v1392, 3
    %v1398 = vperm.slane %v1392, 4
    %v1399 = vperm.slane %v1392, 5
    %v1406 = vmul.f32 %v816, %v1394
    %v1407 = vmul.f32 %v817, %v1395
    %v1408 = vmul.f32 %v818, %v1396
    %v1409 = vmul.f32 %v819, %v1397
    %v1410 = vmul.f32 %v820, %v1398
    %v1411 = vmul.f32 %v821, %v1399
    %v1412 = vmul.f32 %v822, %v1394
    %v1413 = vmul.f32 %v823, %v1395
    %v1414 = vmul.f32 %v824, %v1396
    %v1415 = vmul.f32 %v825, %v1397
    %v1416 = vmul.f32 %v826, %v1398
    %v1417 = vmul.f32 %v827, %v1399
    %v1418 = vmul.f32 %v828, %v1394
    %v1419 = vmul.f32 %v829, %v1395
    %v1420 = vmul.f32 %v830, %v1396
    %v1421 = vmul.f32 %v831, %v1397
    %v1422 = vmul.f32 %v832, %v1398
    %v1423 = vmul.f32 %v833, %v1399
    %v1424 = vmul.f32 %v834, %v1394
    %v1425 = vmul.f32 %v835, %v1395
    %v1426 = vmul.f32 %v836, %v1396
    %v1427 = vmul.f32 %v837, %v1397
    %v1428 = vmul.f32 %v838, %v1398
    %v1429 = vmul.f32 %v839, %v1399
    %v1430 = vmul.f32 %v840, %v1394
    %v1431 = vmul.f32 %v841, %v1395
    %v1432 = vmul.f32 %v842, %v1396
    %v1433 = vmul.f32 %v843, %v1397
    %v1434 = vmul.f32 %v844, %v1398
    %v1435 = vmul.f32 %v845, %v1399
    %v1436 = vmul.f32 %v846, %v1394
    %v1437 = vmul.f32 %v847, %v1395
    %v1438 = vmul.f32 %v848, %v1396
    %v1439 = vmul.f32 %v849, %v1397
    %v1440 = vmul.f32 %v850, %v1398
    %v1441 = vmul.f32 %v851, %v1399
    %v1442 = vmul.f32 %v852, %v1394
    %v1443 = vmul.f32 %v853, %v1395
    %v1444 = vmul.f32 %v854, %v1396
    %v1445 = vmul.f32 %v855, %v1397
    %v1446 = vmul.f32 %v856, %v1398
    %v1447 = vmul.f32 %v857, %v1399
    %v1448 = vmul.f32 %v858, %v1394
    %v1449 = vmul.f32 %v859, %v1395
    %v1450 = vmul.f32 %v860, %v1396
    %v1451 = vmul.f32 %v861, %v1397
    %v1452 = vmul.f32 %v862, %v1398
    %v1453 = vmul.f32 %v863, %v1399
    %v1454 = vmul.f32 %v864, %v1394
    %v1455 = vmul.f32 %v865, %v1395
    %v1456 = vmul.f32 %v866, %v1396
    %v1457 = vmul.f32 %v867, %v1397
    %v1458 = vmul.f32 %v868, %v1398
    %v1459 = vmul.f32 %v869, %v1399
    %v1460 = vmul.f32 %v870, %v1394
    %v1461 = vmul.f32 %v871, %v1395
    %v1462 = vmul.f32 %v872, %v1396
    %v1463 = vmul.f32 %v873, %v1397
    %v1464 = vmul.f32 %v874, %v1398
    %v1465 = vmul.f32 %v875, %v1399
    %v1466 = vmul.f32 %v876, %v1394
    %v1467 = vmul.f32 %v877, %v1395
    %v1468 = vmul.f32 %v878, %v1396
    %v1469 = vmul.f32 %v879, %v1397
    %v1470 = vmul.f32 %v880, %v1398
    %v1471 = vmul.f32 %v881, %v1399
    %v1472 = vmul.f32 %v882, %v1394
    %v1473 = vmul.f32 %v883, %v1395
    %v1474 = vmul.f32 %v884, %v1396
    %v1475 = vmul.f32 %v885, %v1397
    %v1476 = vmul.f32 %v886, %v1398
    %v1477 = vmul.f32 %v887, %v1399
    %v1478 = vmul.f32 %v888, %v1394
    %v1479 = vmul.f32 %v889, %v1395
    %v1480 = vmul.f32 %v890, %v1396
    %v1481 = vmul.f32 %v891, %v1397
    %v1482 = vmul.f32 %v892, %v1398
    %v1483 = vmul.f32 %v893, %v1399
    %v1484 = vmul.f32 %v894, %v1394
    %v1485 = vmul.f32 %v895, %v1395
    %v1486 = vmul.f32 %v896, %v1396
    %v1487 = vmul.f32 %v897, %v1397
    %v1488 = vmul.f32 %v898, %v1398
    %v1489 = vmul.f32 %v899, %v1399
    %v1490 = vmul.f32 %v900, %v1394
    %v1491 = vmul.f32 %v901, %v1395
    %v1492 = vmul.f32 %v902, %v1396
    %v1493 = vmul.f32 %v903, %v1397
    %v1494 = vmul.f32 %v904, %v1398
    %v1495 = vmul.f32 %v905, %v1399
    %v1496 = vmul.f32 %v906, %v1394
    %v1497 = vmul.f32 %v907, %v1395
    %v1498 = vmul.f32 %v908, %v1396
    %v1499 = vmul.f32 %v909, %v1397
    %v1500 = vmul.f32 %v910, %v1398
    %v1501 = vmul.f32 %v911, %v1399
    %v1502 = vmul.f32 %v912, %v1394
    %v1503 = vmul.f32 %v913, %v1395
    %v1504 = vmul.f32 %v914, %v1396
    %v1505 = vmul.f32 %v915, %v1397
    %v1506 = vmul.f32 %v916, %v1398
    %v1507 = vmul.f32 %v917, %v1399
    %v1508 = vmul.f32 %v918, %v1394
    %v1509 = vmul.f32 %v919, %v1395
    %v1510 = vmul.f32 %v920, %v1396
    %v1511 = vmul.f32 %v921, %v1397
    %v1512 = vmul.f32 %v922, %v1398
    %v1513 = vmul.f32 %v923, %v1399
    %v1514 = vmul.f32 %v924, %v1394
    %v1515 = vmul.f32 %v925, %v1395
    %v1516 = vmul.f32 %v926, %v1396
    %v1517 = vmul.f32 %v927, %v1397
    %v1518 = vmul.f32 %v928, %v1398
    %v1519 = vmul.f32 %v929, %v1399
    %v1520 = vmul.f32 %v930, %v1394
    %v1521 = vmul.f32 %v931, %v1395
    %v1522 = vmul.f32 %v932, %v1396
    %v1523 = vmul.f32 %v933, %v1397
    %v1524 = vmul.f32 %v934, %v1398
    %v1525 = vmul.f32 %v935, %v1399
    %v1526 = vmul.f32 %v936, %v1394
    %v1527 = vmul.f32 %v937, %v1395
    %v1528 = vmul.f32 %v938, %v1396
    %v1529 = vmul.f32 %v939, %v1397
    %v1530 = vmul.f32 %v940, %v1398
    %v1531 = vmul.f32 %v941, %v1399
    %v1532 = vmul.f32 %v942, %v1394
    %v1533 = vmul.f32 %v943, %v1395
    %v1534 = vmul.f32 %v944, %v1396
    %v1535 = vmul.f32 %v945, %v1397
    %v1536 = vmul.f32 %v946, %v1398
    %v1537 = vmul.f32 %v947, %v1399
    %v1538 = vmul.f32 %v948, %v1394
    %v1539 = vmul.f32 %v949, %v1395
    %v1540 = vmul.f32 %v950, %v1396
    %v1541 = vmul.f32 %v951, %v1397
    %v1542 = vmul.f32 %v952, %v1398
    %v1543 = vmul.f32 %v953, %v1399
    %v1544 = vmul.f32 %v954, %v1394
    %v1545 = vmul.f32 %v955, %v1395
    %v1546 = vmul.f32 %v956, %v1396
    %v1547 = vmul.f32 %v957, %v1397
    %v1548 = vmul.f32 %v958, %v1398
    %v1549 = vmul.f32 %v959, %v1399
    %v1550 = vmul.f32 %v960, %v1394
    %v1551 = vmul.f32 %v961, %v1395
    %v1552 = vmul.f32 %v962, %v1396
    %v1553 = vmul.f32 %v963, %v1397
    %v1554 = vmul.f32 %v964, %v1398
    %v1555 = vmul.f32 %v965, %v1399
    %v1556 = vmul.f32 %v966, %v1394
    %v1557 = vmul.f32 %v967, %v1395
    %v1558 = vmul.f32 %v968, %v1396
    %v1559 = vmul.f32 %v969, %v1397
    %v1560 = vmul.f32 %v970, %v1398
    %v1561 = vmul.f32 %v971, %v1399
    %v1562 = vmul.f32 %v972, %v1394
    %v1563 = vmul.f32 %v973, %v1395
    %v1564 = vmul.f32 %v974, %v1396
    %v1565 = vmul.f32 %v975, %v1397
    %v1566 = vmul.f32 %v976, %v1398
    %v1567 = vmul.f32 %v977, %v1399
    %v1568 = vmul.f32 %v978, %v1394
    %v1569 = vmul.f32 %v979, %v1395
    %v1570 = vmul.f32 %v980, %v1396
    %v1571 = vmul.f32 %v981, %v1397
    %v1572 = vmul.f32 %v982, %v1398
    %v1573 = vmul.f32 %v983, %v1399
    %v1574 = vmul.f32 %v984, %v1394
    %v1575 = vmul.f32 %v985, %v1395
    %v1576 = vmul.f32 %v986, %v1396
    %v1577 = vmul.f32 %v987, %v1397
    %v1578 = vmul.f32 %v988, %v1398
    %v1579 = vmul.f32 %v989, %v1399
    %v1580 = vmul.f32 %v990, %v1394
    %v1581 = vmul.f32 %v991, %v1395
    %v1582 = vmul.f32 %v992, %v1396
    %v1583 = vmul.f32 %v993, %v1397
    %v1584 = vmul.f32 %v994, %v1398
    %v1585 = vmul.f32 %v995, %v1399
    %v1586 = vmul.f32 %v996, %v1394
    %v1587 = vmul.f32 %v997, %v1395
    %v1588 = vmul.f32 %v998, %v1396
    %v1589 = vmul.f32 %v999, %v1397
    %v1590 = vmul.f32 %v1000, %v1398
    %v1591 = vmul.f32 %v1001, %v1399
    %v1592 = vmul.f32 %v1002, %v1394
    %v1593 = vmul.f32 %v1003, %v1395
    %v1594 = vmul.f32 %v1004, %v1396
    %v1595 = vmul.f32 %v1005, %v1397
    %v1596 = vmul.f32 %v1006, %v1398
    %v1597 = vmul.f32 %v1007, %v1399
    %v1598 = vmul.f32 %v1008, %v1394
    %v1599 = vmul.f32 %v1009, %v1395
    %v1600 = vmul.f32 %v1010, %v1396
    %v1601 = vmul.f32 %v1011, %v1397
    %v1602 = vmul.f32 %v1012, %v1398
    %v1603 = vmul.f32 %v1013, %v1399
    %v1604 = vmul.f32 %v1014, %v1394
    %v1605 = vmul.f32 %v1015, %v1395
    %v1606 = vmul.f32 %v1016, %v1396
    %v1607 = vmul.f32 %v1017, %v1397
    %v1608 = vmul.f32 %v1018, %v1398
    %v1609 = vmul.f32 %v1019, %v1399
    %v1610 = vmul.f32 %v1020, %v1394
    %v1611 = vmul.f32 %v1021, %v1395
    %v1612 = vmul.f32 %v1022, %v1396
    %v1613 = vmul.f32 %v1023, %v1397
    %v1614 = vmul.f32 %v1024, %v1398
    %v1615 = vmul.f32 %v1025, %v1399
    %v1616 = vmul.f32 %v1026, %v1394
    %v1617 = vmul.f32 %v1027, %v1395
    %v1618 = vmul.f32 %v1028, %v1396
    %v1619 = vmul.f32 %v1029, %v1397
    %v1620 = vmul.f32 %v1030, %v1398
    %v1621 = vmul.f32 %v1031, %v1399
    %v1622 = vmul.f32 %v1032, %v1394
    %v1623 = vmul.f32 %v1033, %v1395
    %v1624 = vmul.f32 %v1034, %v1396
    %v1625 = vmul.f32 %v1035, %v1397
    %v1626 = vmul.f32 %v1036, %v1398
    %v1627 = vmul.f32 %v1037, %v1399
    %v1628 = vmul.f32 %v1038, %v1394
    %v1629 = vmul.f32 %v1039, %v1395
    %v1630 = vmul.f32 %v1040, %v1396
    %v1631 = vmul.f32 %v1041, %v1397
    %v1632 = vmul.f32 %v1042, %v1398
    %v1633 = vmul.f32 %v1043, %v1399
    %v1634 = vmul.f32 %v1044, %v1394
    %v1635 = vmul.f32 %v1045, %v1395
    %v1636 = vmul.f32 %v1046, %v1396
    %v1637 = vmul.f32 %v1047, %v1397
    %v1638 = vmul.f32 %v1048, %v1398
    %v1639 = vmul.f32 %v1049, %v1399
    %v1640 = vmul.f32 %v1050, %v1394
    %v1641 = vmul.f32 %v1051, %v1395
    %v1642 = vmul.f32 %v1052, %v1396
    %v1643 = vmul.f32 %v1053, %v1397
    %v1644 = vmul.f32 %v1054, %v1398
    %v1645 = vmul.f32 %v1055, %v1399
    %v1646 = vmul.f32 %v1056, %v1394
    %v1647 = vmul.f32 %v1057, %v1395
    %v1648 = vmul.f32 %v1058, %v1396
    %v1649 = vmul.f32 %v1059, %v1397
    %v1650 = vmul.f32 %v1060, %v1398
    %v1651 = vmul.f32 %v1061, %v1399
    %v1652 = vmul.f32 %v1062, %v1394
    %v1653 = vmul.f32 %v1063, %v1395
    %v1654 = vmul.f32 %v1064, %v1396
    %v1655 = vmul.f32 %v1065, %v1397
    %v1656 = vmul.f32 %v1066, %v1398
    %v1657 = vmul.f32 %v1067, %v1399
    %v1658 = vmul.f32 %v1068, %v1394
    %v1659 = vmul.f32 %v1069, %v1395
    %v1660 = vmul.f32 %v1070, %v1396
    %v1661 = vmul.f32 %v1071, %v1397
    %v1662 = vmul.f32 %v1072, %v1398
    %v1663 = vmul.f32 %v1073, %v1399
    %v1664 = vmul.f32 %v1074, %v1394
    %v1665 = vmul.f32 %v1075, %v1395
    %v1666 = vmul.f32 %v1076, %v1396
    %v1667 = vmul.f32 %v1077, %v1397
    %v1668 = vmul.f32 %v1078, %v1398
    %v1669 = vmul.f32 %v1079, %v1399
    %v1670 = vmul.f32 %v1080, %v1394
    %v1671 = vmul.f32 %v1081, %v1395
    %v1672 = vmul.f32 %v1082, %v1396
    %v1673 = vmul.f32 %v1083, %v1397
    %v1674 = vmul.f32 %v1084, %v1398
    %v1675 = vmul.f32 %v1085, %v1399
    %v1676 = vmul.f32 %v1086, %v1394
    %v1677 = vmul.f32 %v1087, %v1395
    %v1678 = vmul.f32 %v1088, %v1396
    %v1679 = vmul.f32 %v1089, %v1397
    %v1680 = vmul.f32 %v1090, %v1398
    %v1681 = vmul.f32 %v1091, %v1399
    %v1682 = vmul.f32 %v1092, %v1394
    %v1683 = vmul.f32 %v1093, %v1395
    %v1684 = vmul.f32 %v1094, %v1396
    %v1685 = vmul.f32 %v1095, %v1397
    %v1686 = vmul.f32 %v1096, %v1398
    %v1687 = vmul.f32 %v1097, %v1399
    %v1688 = vmul.f32 %v1098, %v1394
    %v1689 = vmul.f32 %v1099, %v1395
    %v1690 = vmul.f32 %v1100, %v1396
    %v1691 = vmul.f32 %v1101, %v1397
    %v1692 = vmul.f32 %v1102, %v1398
    %v1693 = vmul.f32 %v1103, %v1399
    %v1694 = vmul.f32 %v1104, %v1394
    %v1695 = vmul.f32 %v1105, %v1395
    %v1696 = vmul.f32 %v1106, %v1396
    %v1697 = vmul.f32 %v1107, %v1397
    %v1698 = vmul.f32 %v1108, %v1398
    %v1699 = vmul.f32 %v1109, %v1399
    %v1700 = vmul.f32 %v1110, %v1394
    %v1701 = vmul.f32 %v1111, %v1395
    %v1702 = vmul.f32 %v1112, %v1396
    %v1703 = vmul.f32 %v1113, %v1397
    %v1704 = vmul.f32 %v1114, %v1398
    %v1705 = vmul.f32 %v1115, %v1399
    %v1706 = vmul.f32 %v1116, %v1394
    %v1707 = vmul.f32 %v1117, %v1395
    %v1708 = vmul.f32 %v1118, %v1396
    %v1709 = vmul.f32 %v1119, %v1397
    %v1710 = vmul.f32 %v1120, %v1398
    %v1711 = vmul.f32 %v1121, %v1399
    %v1712 = vmul.f32 %v1122, %v1394
    %v1713 = vmul.f32 %v1123, %v1395
    %v1714 = vmul.f32 %v1124, %v1396
    %v1715 = vmul.f32 %v1125, %v1397
    %v1716 = vmul.f32 %v1126, %v1398
    %v1717 = vmul.f32 %v1127, %v1399
    %v1718 = vmul.f32 %v1128, %v1394
    %v1719 = vmul.f32 %v1129, %v1395
    %v1720 = vmul.f32 %v1130, %v1396
    %v1721 = vmul.f32 %v1131, %v1397
    %v1722 = vmul.f32 %v1132, %v1398
    %v1723 = vmul.f32 %v1133, %v1399
    %v1724 = vmul.f32 %v1134, %v1394
    %v1725 = vmul.f32 %v1135, %v1395
    %v1726 = vmul.f32 %v1136, %v1396
    %v1727 = vmul.f32 %v1137, %v1397
    %v1728 = vmul.f32 %v1138, %v1398
    %v1729 = vmul.f32 %v1139, %v1399
    %v1730 = vmul.f32 %v1140, %v1394
    %v1731 = vmul.f32 %v1141, %v1395
    %v1732 = vmul.f32 %v1142, %v1396
    %v1733 = vmul.f32 %v1143, %v1397
    %v1734 = vmul.f32 %v1144, %v1398
    %v1735 = vmul.f32 %v1145, %v1399
    %v1736 = vmul.f32 %v1146, %v1394
    %v1737 = vmul.f32 %v1147, %v1395
    %v1738 = vmul.f32 %v1148, %v1396
    %v1739 = vmul.f32 %v1149, %v1397
    %v1740 = vmul.f32 %v1150, %v1398
    %v1741 = vmul.f32 %v1151, %v1399
    %v1742 = vmul.f32 %v1152, %v1394
    %v1743 = vmul.f32 %v1153, %v1395
    %v1744 = vmul.f32 %v1154, %v1396
    %v1745 = vmul.f32 %v1155, %v1397
    %v1746 = vmul.f32 %v1156, %v1398
    %v1747 = vmul.f32 %v1157, %v1399
    %v1748 = vmul.f32 %v1158, %v1394
    %v1749 = vmul.f32 %v1159, %v1395
    %v1750 = vmul.f32 %v1160, %v1396
    %v1751 = vmul.f32 %v1161, %v1397
    %v1752 = vmul.f32 %v1162, %v1398
    %v1753 = vmul.f32 %v1163, %v1399
    %v1754 = vmul.f32 %v1164, %v1394
    %v1755 = vmul.f32 %v1165, %v1395
    %v1756 = vmul.f32 %v1166, %v1396
    %v1757 = vmul.f32 %v1167, %v1397
    %v1758 = vmul.f32 %v1168, %v1398
    %v1759 = vmul.f32 %v1169, %v1399
    %v1760 = vmul.f32 %v1170, %v1394
    %v1761 = vmul.f32 %v1171, %v1395
    %v1762 = vmul.f32 %v1172, %v1396
    %v1763 = vmul.f32 %v1173, %v1397
    %v1764 = vmul.f32 %v1174, %v1398
    %v1765 = vmul.f32 %v1175, %v1399
    %v1766 = vmul.f32 %v1176, %v1394
    %v1767 = vmul.f32 %v1177, %v1395
    %v1768 = vmul.f32 %v1178, %v1396
    %v1769 = vmul.f32 %v1179, %v1397
    %v1770 = vmul.f32 %v1180, %v1398
    %v1771 = vmul.f32 %v1181, %v1399
    %v1772 = vmul.f32 %v1182, %v1394
    %v1773 = vmul.f32 %v1183, %v1395
    %v1774 = vmul.f32 %v1184, %v1396
    %v1775 = vmul.f32 %v1185, %v1397
    %v1776 = vmul.f32 %v1186, %v1398
    %v1777 = vmul.f32 %v1187, %v1399
    %v1778 = vmul.f32 %v1188, %v1394
    %v1779 = vmul.f32 %v1189, %v1395
    %v1780 = vmul.f32 %v1190, %v1396
    %v1781 = vmul.f32 %v1191, %v1397
    %v1782 = vmul.f32 %v1192, %v1398
    %v1783 = vmul.f32 %v1193, %v1399
    %v1784 = vmul.f32 %v1194, %v1394
    %v1785 = vmul.f32 %v1195, %v1395
    %v1786 = vmul.f32 %v1196, %v1396
    %v1787 = vmul.f32 %v1197, %v1397
    %v1788 = vmul.f32 %v1198, %v1398
    %v1789 = vmul.f32 %v1199, %v1399
    %v1790 = vmul.f32 %v1200, %v1394
    %v1791 = vmul.f32 %v1201, %v1395
    %v1792 = vmul.f32 %v1202, %v1396
    %v1793 = vmul.f32 %v1203, %v1397
    %v1794 = vmul.f32 %v1204, %v1398
    %v1795 = vmul.f32 %v1205, %v1399
    %v1796 = vmul.f32 %v1206, %v1394
    %v1797 = vmul.f32 %v1207, %v1395
    %v1798 = vmul.f32 %v1208, %v1396
    %v1799 = vmul.f32 %v1209, %v1397
    %v1800 = vmul.f32 %v1210, %v1398
    %v1801 = vmul.f32 %v1211, %v1399
    %v1802 = vmul.f32 %v1212, %v1394
    %v1803 = vmul.f32 %v1213, %v1395
    %v1804 = vmul.f32 %v1214, %v1396
    %v1805 = vmul.f32 %v1215, %v1397
    %v1806 = vmul.f32 %v1216, %v1398
    %v1807 = vmul.f32 %v1217, %v1399
    %v1808 = vmul.f32 %v1218, %v1394
    %v1809 = vmul.f32 %v1219, %v1395
    %v1810 = vmul.f32 %v1220, %v1396
    %v1811 = vmul.f32 %v1221, %v1397
    %v1812 = vmul.f32 %v1222, %v1398
    %v1813 = vmul.f32 %v1223, %v1399
    %v1814 = vmul.f32 %v1224, %v1394
    %v1815 = vmul.f32 %v1225, %v1395
    %v1816 = vmul.f32 %v1226, %v1396
    %v1817 = vmul.f32 %v1227, %v1397
    %v1818 = vmul.f32 %v1228, %v1398
    %v1819 = vmul.f32 %v1229, %v1399
    %v1820 = vmul.f32 %v1230, %v1394
    %v1821 = vmul.f32 %v1231, %v1395
    %v1822 = vmul.f32 %v1232, %v1396
    %v1823 = vmul.f32 %v1233, %v1397
    %v1824 = vmul.f32 %v1234, %v1398
    %v1825 = vmul.f32 %v1235, %v1399
    %v1826 = vmul.f32 %v1236, %v1394
    %v1827 = vmul.f32 %v1237, %v1395
    %v1828 = vmul.f32 %v1238, %v1396
    %v1829 = vmul.f32 %v1239, %v1397
    %v1830 = vmul.f32 %v1240, %v1398
    %v1831 = vmul.f32 %v1241, %v1399
    %v1832 = vmul.f32 %v1242, %v1394
    %v1833 = vmul.f32 %v1243, %v1395
    %v1834 = vmul.f32 %v1244, %v1396
    %v1835 = vmul.f32 %v1245, %v1397
    %v1836 = vmul.f32 %v1246, %v1398
    %v1837 = vmul.f32 %v1247, %v1399
    %v1838 = vmul.f32 %v1248, %v1394
    %v1839 = vmul.f32 %v1249, %v1395
    %v1840 = vmul.f32 %v1250, %v1396
    %v1841 = vmul.f32 %v1251, %v1397
    %v1842 = vmul.f32 %v1252, %v1398
    %v1843 = vmul.f32 %v1253, %v1399
    %v1844 = vmul.f32 %v1254, %v1394
    %v1845 = vmul.f32 %v1255, %v1395
    %v1846 = vmul.f32 %v1256, %v1396
    %v1847 = vmul.f32 %v1257, %v1397
    %v1848 = vmul.f32 %v1258, %v1398
    %v1849 = vmul.f32 %v1259, %v1399
    %v1850 = vmul.f32 %v1260, %v1394
    %v1851 = vmul.f32 %v1261, %v1395
    %v1852 = vmul.f32 %v1262, %v1396
    %v1853 = vmul.f32 %v1263, %v1397
    %v1854 = vmul.f32 %v1264, %v1398
    %v1855 = vmul.f32 %v1265, %v1399
    %v1856 = vmul.f32 %v1266, %v1394
    %v1857 = vmul.f32 %v1267, %v1395
    %v1858 = vmul.f32 %v1268, %v1396
    %v1859 = vmul.f32 %v1269, %v1397
    %v1860 = vmul.f32 %v1270, %v1398
    %v1861 = vmul.f32 %v1271, %v1399
    %v1862 = vmul.f32 %v1272, %v1394
    %v1863 = vmul.f32 %v1273, %v1395
    %v1864 = vmul.f32 %v1274, %v1396
    %v1865 = vmul.f32 %v1275, %v1397
    %v1866 = vmul.f32 %v1276, %v1398
    %v1867 = vmul.f32 %v1277, %v1399
    %v1868 = vmul.f32 %v1278, %v1394
    %v1869 = vmul.f32 %v1279, %v1395
    %v1870 = vmul.f32 %v1280, %v1396
    %v1871 = vmul.f32 %v1281, %v1397
    %v1872 = vmul.f32 %v1282, %v1398
    %v1873 = vmul.f32 %v1283, %v1399
    %v1874 = vmul.f32 %v1284, %v1394
    %v1875 = vmul.f32 %v1285, %v1395
    %v1876 = vmul.f32 %v1286, %v1396
    %v1877 = vmul.f32 %v1287, %v1397
    %v1878 = vmul.f32 %v1288, %v1398
    %v1879 = vmul.f32 %v1289, %v1399
    %v1880 = vmul.f32 %v1290, %v1394
    %v1881 = vmul.f32 %v1291, %v1395
    %v1882 = vmul.f32 %v1292, %v1396
    %v1883 = vmul.f32 %v1293, %v1397
    %v1884 = vmul.f32 %v1294, %v1398
    %v1885 = vmul.f32 %v1295, %v1399
    %v1886 = vmul.f32 %v1296, %v1394
    %v1887 = vmul.f32 %v1297, %v1395
    %v1888 = vmul.f32 %v1298, %v1396
    %v1889 = vmul.f32 %v1299, %v1397
    %v1890 = vmul.f32 %v1300, %v1398
    %v1891 = vmul.f32 %v1301, %v1399
    %v1892 = vmul.f32 %v1302, %v1394
    %v1893 = vmul.f32 %v1303, %v1395
    %v1894 = vmul.f32 %v1304, %v1396
    %v1895 = vmul.f32 %v1305, %v1397
    %v1896 = vmul.f32 %v1306, %v1398
    %v1897 = vmul.f32 %v1307, %v1399
    %v1898 = vmul.f32 %v1308, %v1394
    %v1899 = vmul.f32 %v1309, %v1395
    %v1900 = vmul.f32 %v1310, %v1396
    %v1901 = vmul.f32 %v1311, %v1397
    %v1902 = vmul.f32 %v1312, %v1398
    %v1903 = vmul.f32 %v1313, %v1399
    %v1904 = vmul.f32 %v1314, %v1394
    %v1905 = vmul.f32 %v1315, %v1395
    %v1906 = vmul.f32 %v1316, %v1396
    %v1907 = vmul.f32 %v1317, %v1397
    %v1908 = vmul.f32 %v1318, %v1398
    %v1909 = vmul.f32 %v1319, %v1399
    %v1910 = vmul.f32 %v1320, %v1394
    %v1911 = vmul.f32 %v1321, %v1395
    %v1912 = vmul.f32 %v1322, %v1396
    %v1913 = vmul.f32 %v1323, %v1397
    %v1914 = vmul.f32 %v1324, %v1398
    %v1915 = vmul.f32 %v1325, %v1399
    %v1916 = vmul.f32 %v1326, %v1394
    %v1917 = vmul.f32 %v1327, %v1395
    %v1918 = vmul.f32 %v1328, %v1396
    %v1919 = vmul.f32 %v1329, %v1397
    %v1920 = vmul.f32 %v1330, %v1398
    %v1921 = vmul.f32 %v1331, %v1399
    %v1922 = vmul.f32 %v1332, %v1394
    %v1923 = vmul.f32 %v1333, %v1395
    %v1924 = vmul.f32 %v1334, %v1396
    %v1925 = vmul.f32 %v1335, %v1397
    %v1926 = vmul.f32 %v1336, %v1398
    %v1927 = vmul.f32 %v1337, %v1399
    %v1928 = vmul.f32 %v1338, %v1394
    %v1929 = vmul.f32 %v1339, %v1395
    %v1930 = vmul.f32 %v1340, %v1396
    %v1931 = vmul.f32 %v1341, %v1397
    %v1932 = vmul.f32 %v1342, %v1398
    %v1933 = vmul.f32 %v1343, %v1399
    %v1934 = vmul.f32 %v1344, %v1394
    %v1935 = vmul.f32 %v1345, %v1395
    %v1936 = vmul.f32 %v1346, %v1396
    %v1937 = vmul.f32 %v1347, %v1397
    %v1938 = vmul.f32 %v1348, %v1398
    %v1939 = vmul.f32 %v1349, %v1399
    %v1940 = vmul.f32 %v1350, %v1394
    %v1941 = vmul.f32 %v1351, %v1395
    %v1942 = vmul.f32 %v1352, %v1396
    %v1943 = vmul.f32 %v1353, %v1397
    %v1944 = vmul.f32 %v1354, %v1398
    %v1945 = vmul.f32 %v1355, %v1399
    %v1946 = vmul.f32 %v1356, %v1394
    %v1947 = vmul.f32 %v1357, %v1395
    %v1948 = vmul.f32 %v1358, %v1396
    %v1949 = vmul.f32 %v1359, %v1397
    %v1950 = vmul.f32 %v1360, %v1398
    %v1951 = vmul.f32 %v1361, %v1399
    %v1952 = vmul.f32 %v1362, %v1394
    %v1953 = vmul.f32 %v1363, %v1395
    %v1954 = vmul.f32 %v1364, %v1396
    %v1955 = vmul.f32 %v1365, %v1397
    %v1956 = vmul.f32 %v1366, %v1398
    %v1957 = vmul.f32 %v1367, %v1399
    %v1958 = vmul.f32 %v1368, %v1394
    %v1959 = vmul.f32 %v1369, %v1395
    %v1960 = vmul.f32 %v1370, %v1396
    %v1961 = vmul.f32 %v1371, %v1397
    %v1962 = vmul.f32 %v1372, %v1398
    %v1963 = vmul.f32 %v1373, %v1399
    %v1964 = vmul.f32 %v1374, %v1394
    %v1965 = vmul.f32 %v1375, %v1395
    %v1966 = vmul.f32 %v1376, %v1396
    %v1967 = vmul.f32 %v1377, %v1397
    %v1968 = vmul.f32 %v1378, %v1398
    %v1969 = vmul.f32 %v1379, %v1399
    %v1970 = vmul.f32 %v1380, %v1394
    %v1971 = vmul.f32 %v1381, %v1395
    %v1972 = vmul.f32 %v1382, %v1396
    %v1973 = vmul.f32 %v1383, %v1397
    %v1974 = vmul.f32 %v1384, %v1398
    %v1975 = vmul.f32 %v1385, %v1399
    %v1976 = vmul.f32 %v1386, %v1394
    %v1977 = vmul.f32 %v1387, %v1395
    %v1978 = vmul.f32 %v1388, %v1396
    %v1979 = vmul.f32 %v1389, %v1397
    %v1980 = vmul.f32 %v1390, %v1398
    %v1981 = vmul.f32 %v1391, %v1399
    %v1982 = vpack.c.bf16 %v1412, %v1406
    %v1983 = vpack.c.bf16 %v1413, %v1407
    %v1984 = vpack.c.bf16 %v1414, %v1408
    %v1985 = vpack.c.bf16 %v1415, %v1409
    %v1986 = vpack.c.bf16 %v1416, %v1410
    %v1987 = vpack.c.bf16 %v1417, %v1411
    %v1988 = vpack.c.bf16 %v1424, %v1418
    %v1989 = vpack.c.bf16 %v1425, %v1419
    %v1990 = vpack.c.bf16 %v1426, %v1420
    %v1991 = vpack.c.bf16 %v1427, %v1421
    %v1992 = vpack.c.bf16 %v1428, %v1422
    %v1993 = vpack.c.bf16 %v1429, %v1423
    %v1994 = vpack.c.bf16 %v1436, %v1430
    %v1995 = vpack.c.bf16 %v1437, %v1431
    %v1996 = vpack.c.bf16 %v1438, %v1432
    %v1997 = vpack.c.bf16 %v1439, %v1433
    %v1998 = vpack.c.bf16 %v1440, %v1434
    %v1999 = vpack.c.bf16 %v1441, %v1435
    %v2000 = vpack.c.bf16 %v1448, %v1442
    %v2001 = vpack.c.bf16 %v1449, %v1443
    %v2002 = vpack.c.bf16 %v1450, %v1444
    %v2003 = vpack.c.bf16 %v1451, %v1445
    %v2004 = vpack.c.bf16 %v1452, %v1446
    %v2005 = vpack.c.bf16 %v1453, %v1447
    %v2006 = vpack.c.bf16 %v1460, %v1454
    %v2007 = vpack.c.bf16 %v1461, %v1455
    %v2008 = vpack.c.bf16 %v1462, %v1456
    %v2009 = vpack.c.bf16 %v1463, %v1457
    %v2010 = vpack.c.bf16 %v1464, %v1458
    %v2011 = vpack.c.bf16 %v1465, %v1459
    %v2012 = vpack.c.bf16 %v1472, %v1466
    %v2013 = vpack.c.bf16 %v1473, %v1467
    %v2014 = vpack.c.bf16 %v1474, %v1468
    %v2015 = vpack.c.bf16 %v1475, %v1469
    %v2016 = vpack.c.bf16 %v1476, %v1470
    %v2017 = vpack.c.bf16 %v1477, %v1471
    %v2018 = vpack.c.bf16 %v1484, %v1478
    %v2019 = vpack.c.bf16 %v1485, %v1479
    %v2020 = vpack.c.bf16 %v1486, %v1480
    %v2021 = vpack.c.bf16 %v1487, %v1481
    %v2022 = vpack.c.bf16 %v1488, %v1482
    %v2023 = vpack.c.bf16 %v1489, %v1483
    %v2024 = vpack.c.bf16 %v1496, %v1490
    %v2025 = vpack.c.bf16 %v1497, %v1491
    %v2026 = vpack.c.bf16 %v1498, %v1492
    %v2027 = vpack.c.bf16 %v1499, %v1493
    %v2028 = vpack.c.bf16 %v1500, %v1494
    %v2029 = vpack.c.bf16 %v1501, %v1495
    %v2030 = vpack.c.bf16 %v1508, %v1502
    %v2031 = vpack.c.bf16 %v1509, %v1503
    %v2032 = vpack.c.bf16 %v1510, %v1504
    %v2033 = vpack.c.bf16 %v1511, %v1505
    %v2034 = vpack.c.bf16 %v1512, %v1506
    %v2035 = vpack.c.bf16 %v1513, %v1507
    %v2036 = vpack.c.bf16 %v1520, %v1514
    %v2037 = vpack.c.bf16 %v1521, %v1515
    %v2038 = vpack.c.bf16 %v1522, %v1516
    %v2039 = vpack.c.bf16 %v1523, %v1517
    %v2040 = vpack.c.bf16 %v1524, %v1518
    %v2041 = vpack.c.bf16 %v1525, %v1519
    %v2042 = vpack.c.bf16 %v1532, %v1526
    %v2043 = vpack.c.bf16 %v1533, %v1527
    %v2044 = vpack.c.bf16 %v1534, %v1528
    %v2045 = vpack.c.bf16 %v1535, %v1529
    %v2046 = vpack.c.bf16 %v1536, %v1530
    %v2047 = vpack.c.bf16 %v1537, %v1531
    %v2048 = vpack.c.bf16 %v1544, %v1538
    %v2049 = vpack.c.bf16 %v1545, %v1539
    %v2050 = vpack.c.bf16 %v1546, %v1540
    %v2051 = vpack.c.bf16 %v1547, %v1541
    %v2052 = vpack.c.bf16 %v1548, %v1542
    %v2053 = vpack.c.bf16 %v1549, %v1543
    %v2054 = vpack.c.bf16 %v1556, %v1550
    %v2055 = vpack.c.bf16 %v1557, %v1551
    %v2056 = vpack.c.bf16 %v1558, %v1552
    %v2057 = vpack.c.bf16 %v1559, %v1553
    %v2058 = vpack.c.bf16 %v1560, %v1554
    %v2059 = vpack.c.bf16 %v1561, %v1555
    %v2060 = vpack.c.bf16 %v1568, %v1562
    %v2061 = vpack.c.bf16 %v1569, %v1563
    %v2062 = vpack.c.bf16 %v1570, %v1564
    %v2063 = vpack.c.bf16 %v1571, %v1565
    %v2064 = vpack.c.bf16 %v1572, %v1566
    %v2065 = vpack.c.bf16 %v1573, %v1567
    %v2066 = vpack.c.bf16 %v1580, %v1574
    %v2067 = vpack.c.bf16 %v1581, %v1575
    %v2068 = vpack.c.bf16 %v1582, %v1576
    %v2069 = vpack.c.bf16 %v1583, %v1577
    %v2070 = vpack.c.bf16 %v1584, %v1578
    %v2071 = vpack.c.bf16 %v1585, %v1579
    %v2072 = vpack.c.bf16 %v1592, %v1586
    %v2073 = vpack.c.bf16 %v1593, %v1587
    %v2074 = vpack.c.bf16 %v1594, %v1588
    %v2075 = vpack.c.bf16 %v1595, %v1589
    %v2076 = vpack.c.bf16 %v1596, %v1590
    %v2077 = vpack.c.bf16 %v1597, %v1591
    %v2078 = vpack.c.bf16 %v1604, %v1598
    %v2079 = vpack.c.bf16 %v1605, %v1599
    %v2080 = vpack.c.bf16 %v1606, %v1600
    %v2081 = vpack.c.bf16 %v1607, %v1601
    %v2082 = vpack.c.bf16 %v1608, %v1602
    %v2083 = vpack.c.bf16 %v1609, %v1603
    %v2084 = vpack.c.bf16 %v1616, %v1610
    %v2085 = vpack.c.bf16 %v1617, %v1611
    %v2086 = vpack.c.bf16 %v1618, %v1612
    %v2087 = vpack.c.bf16 %v1619, %v1613
    %v2088 = vpack.c.bf16 %v1620, %v1614
    %v2089 = vpack.c.bf16 %v1621, %v1615
    %v2090 = vpack.c.bf16 %v1628, %v1622
    %v2091 = vpack.c.bf16 %v1629, %v1623
    %v2092 = vpack.c.bf16 %v1630, %v1624
    %v2093 = vpack.c.bf16 %v1631, %v1625
    %v2094 = vpack.c.bf16 %v1632, %v1626
    %v2095 = vpack.c.bf16 %v1633, %v1627
    %v2096 = vpack.c.bf16 %v1640, %v1634
    %v2097 = vpack.c.bf16 %v1641, %v1635
    %v2098 = vpack.c.bf16 %v1642, %v1636
    %v2099 = vpack.c.bf16 %v1643, %v1637
    %v2100 = vpack.c.bf16 %v1644, %v1638
    %v2101 = vpack.c.bf16 %v1645, %v1639
    %v2102 = vpack.c.bf16 %v1652, %v1646
    %v2103 = vpack.c.bf16 %v1653, %v1647
    %v2104 = vpack.c.bf16 %v1654, %v1648
    %v2105 = vpack.c.bf16 %v1655, %v1649
    %v2106 = vpack.c.bf16 %v1656, %v1650
    %v2107 = vpack.c.bf16 %v1657, %v1651
    %v2108 = vpack.c.bf16 %v1664, %v1658
    %v2109 = vpack.c.bf16 %v1665, %v1659
    %v2110 = vpack.c.bf16 %v1666, %v1660
    %v2111 = vpack.c.bf16 %v1667, %v1661
    %v2112 = vpack.c.bf16 %v1668, %v1662
    %v2113 = vpack.c.bf16 %v1669, %v1663
    %v2114 = vpack.c.bf16 %v1676, %v1670
    %v2115 = vpack.c.bf16 %v1677, %v1671
    %v2116 = vpack.c.bf16 %v1678, %v1672
    %v2117 = vpack.c.bf16 %v1679, %v1673
    %v2118 = vpack.c.bf16 %v1680, %v1674
    %v2119 = vpack.c.bf16 %v1681, %v1675
    %v2120 = vpack.c.bf16 %v1688, %v1682
    %v2121 = vpack.c.bf16 %v1689, %v1683
    %v2122 = vpack.c.bf16 %v1690, %v1684
    %v2123 = vpack.c.bf16 %v1691, %v1685
    %v2124 = vpack.c.bf16 %v1692, %v1686
    %v2125 = vpack.c.bf16 %v1693, %v1687
    %v2126 = vpack.c.bf16 %v1700, %v1694
    %v2127 = vpack.c.bf16 %v1701, %v1695
    %v2128 = vpack.c.bf16 %v1702, %v1696
    %v2129 = vpack.c.bf16 %v1703, %v1697
    %v2130 = vpack.c.bf16 %v1704, %v1698
    %v2131 = vpack.c.bf16 %v1705, %v1699
    %v2132 = vpack.c.bf16 %v1712, %v1706
    %v2133 = vpack.c.bf16 %v1713, %v1707
    %v2134 = vpack.c.bf16 %v1714, %v1708
    %v2135 = vpack.c.bf16 %v1715, %v1709
    %v2136 = vpack.c.bf16 %v1716, %v1710
    %v2137 = vpack.c.bf16 %v1717, %v1711
    %v2138 = vpack.c.bf16 %v1724, %v1718
    %v2139 = vpack.c.bf16 %v1725, %v1719
    %v2140 = vpack.c.bf16 %v1726, %v1720
    %v2141 = vpack.c.bf16 %v1727, %v1721
    %v2142 = vpack.c.bf16 %v1728, %v1722
    %v2143 = vpack.c.bf16 %v1729, %v1723
    %v2144 = vpack.c.bf16 %v1736, %v1730
    %v2145 = vpack.c.bf16 %v1737, %v1731
    %v2146 = vpack.c.bf16 %v1738, %v1732
    %v2147 = vpack.c.bf16 %v1739, %v1733
    %v2148 = vpack.c.bf16 %v1740, %v1734
    %v2149 = vpack.c.bf16 %v1741, %v1735
    %v2150 = vpack.c.bf16 %v1748, %v1742
    %v2151 = vpack.c.bf16 %v1749, %v1743
    %v2152 = vpack.c.bf16 %v1750, %v1744
    %v2153 = vpack.c.bf16 %v1751, %v1745
    %v2154 = vpack.c.bf16 %v1752, %v1746
    %v2155 = vpack.c.bf16 %v1753, %v1747
    %v2156 = vpack.c.bf16 %v1760, %v1754
    %v2157 = vpack.c.bf16 %v1761, %v1755
    %v2158 = vpack.c.bf16 %v1762, %v1756
    %v2159 = vpack.c.bf16 %v1763, %v1757
    %v2160 = vpack.c.bf16 %v1764, %v1758
    %v2161 = vpack.c.bf16 %v1765, %v1759
    %v2162 = vpack.c.bf16 %v1772, %v1766
    %v2163 = vpack.c.bf16 %v1773, %v1767
    %v2164 = vpack.c.bf16 %v1774, %v1768
    %v2165 = vpack.c.bf16 %v1775, %v1769
    %v2166 = vpack.c.bf16 %v1776, %v1770
    %v2167 = vpack.c.bf16 %v1777, %v1771
    %v2168 = vpack.c.bf16 %v1784, %v1778
    %v2169 = vpack.c.bf16 %v1785, %v1779
    %v2170 = vpack.c.bf16 %v1786, %v1780
    %v2171 = vpack.c.bf16 %v1787, %v1781
    %v2172 = vpack.c.bf16 %v1788, %v1782
    %v2173 = vpack.c.bf16 %v1789, %v1783
    %v2174 = vpack.c.bf16 %v1796, %v1790
    %v2175 = vpack.c.bf16 %v1797, %v1791
    %v2176 = vpack.c.bf16 %v1798, %v1792
    %v2177 = vpack.c.bf16 %v1799, %v1793
    %v2178 = vpack.c.bf16 %v1800, %v1794
    %v2179 = vpack.c.bf16 %v1801, %v1795
    %v2180 = vpack.c.bf16 %v1808, %v1802
    %v2181 = vpack.c.bf16 %v1809, %v1803
    %v2182 = vpack.c.bf16 %v1810, %v1804
    %v2183 = vpack.c.bf16 %v1811, %v1805
    %v2184 = vpack.c.bf16 %v1812, %v1806
    %v2185 = vpack.c.bf16 %v1813, %v1807
    %v2186 = vpack.c.bf16 %v1820, %v1814
    %v2187 = vpack.c.bf16 %v1821, %v1815
    %v2188 = vpack.c.bf16 %v1822, %v1816
    %v2189 = vpack.c.bf16 %v1823, %v1817
    %v2190 = vpack.c.bf16 %v1824, %v1818
    %v2191 = vpack.c.bf16 %v1825, %v1819
    %v2192 = vpack.c.bf16 %v1832, %v1826
    %v2193 = vpack.c.bf16 %v1833, %v1827
    %v2194 = vpack.c.bf16 %v1834, %v1828
    %v2195 = vpack.c.bf16 %v1835, %v1829
    %v2196 = vpack.c.bf16 %v1836, %v1830
    %v2197 = vpack.c.bf16 %v1837, %v1831
    %v2198 = vpack.c.bf16 %v1844, %v1838
    %v2199 = vpack.c.bf16 %v1845, %v1839
    %v2200 = vpack.c.bf16 %v1846, %v1840
    %v2201 = vpack.c.bf16 %v1847, %v1841
    %v2202 = vpack.c.bf16 %v1848, %v1842
    %v2203 = vpack.c.bf16 %v1849, %v1843
    %v2204 = vpack.c.bf16 %v1856, %v1850
    %v2205 = vpack.c.bf16 %v1857, %v1851
    %v2206 = vpack.c.bf16 %v1858, %v1852
    %v2207 = vpack.c.bf16 %v1859, %v1853
    %v2208 = vpack.c.bf16 %v1860, %v1854
    %v2209 = vpack.c.bf16 %v1861, %v1855
    %v2210 = vpack.c.bf16 %v1868, %v1862
    %v2211 = vpack.c.bf16 %v1869, %v1863
    %v2212 = vpack.c.bf16 %v1870, %v1864
    %v2213 = vpack.c.bf16 %v1871, %v1865
    %v2214 = vpack.c.bf16 %v1872, %v1866
    %v2215 = vpack.c.bf16 %v1873, %v1867
    %v2216 = vpack.c.bf16 %v1880, %v1874
    %v2217 = vpack.c.bf16 %v1881, %v1875
    %v2218 = vpack.c.bf16 %v1882, %v1876
    %v2219 = vpack.c.bf16 %v1883, %v1877
    %v2220 = vpack.c.bf16 %v1884, %v1878
    %v2221 = vpack.c.bf16 %v1885, %v1879
    %v2222 = vpack.c.bf16 %v1892, %v1886
    %v2223 = vpack.c.bf16 %v1893, %v1887
    %v2224 = vpack.c.bf16 %v1894, %v1888
    %v2225 = vpack.c.bf16 %v1895, %v1889
    %v2226 = vpack.c.bf16 %v1896, %v1890
    %v2227 = vpack.c.bf16 %v1897, %v1891
    %v2228 = vpack.c.bf16 %v1904, %v1898
    %v2229 = vpack.c.bf16 %v1905, %v1899
    %v2230 = vpack.c.bf16 %v1906, %v1900
    %v2231 = vpack.c.bf16 %v1907, %v1901
    %v2232 = vpack.c.bf16 %v1908, %v1902
    %v2233 = vpack.c.bf16 %v1909, %v1903
    %v2234 = vpack.c.bf16 %v1916, %v1910
    %v2235 = vpack.c.bf16 %v1917, %v1911
    %v2236 = vpack.c.bf16 %v1918, %v1912
    %v2237 = vpack.c.bf16 %v1919, %v1913
    %v2238 = vpack.c.bf16 %v1920, %v1914
    %v2239 = vpack.c.bf16 %v1921, %v1915
    %v2240 = vpack.c.bf16 %v1928, %v1922
    %v2241 = vpack.c.bf16 %v1929, %v1923
    %v2242 = vpack.c.bf16 %v1930, %v1924
    %v2243 = vpack.c.bf16 %v1931, %v1925
    %v2244 = vpack.c.bf16 %v1932, %v1926
    %v2245 = vpack.c.bf16 %v1933, %v1927
    %v2246 = vpack.c.bf16 %v1940, %v1934
    %v2247 = vpack.c.bf16 %v1941, %v1935
    %v2248 = vpack.c.bf16 %v1942, %v1936
    %v2249 = vpack.c.bf16 %v1943, %v1937
    %v2250 = vpack.c.bf16 %v1944, %v1938
    %v2251 = vpack.c.bf16 %v1945, %v1939
    %v2252 = vpack.c.bf16 %v1952, %v1946
    %v2253 = vpack.c.bf16 %v1953, %v1947
    %v2254 = vpack.c.bf16 %v1954, %v1948
    %v2255 = vpack.c.bf16 %v1955, %v1949
    %v2256 = vpack.c.bf16 %v1956, %v1950
    %v2257 = vpack.c.bf16 %v1957, %v1951
    %v2258 = vpack.c.bf16 %v1964, %v1958
    %v2259 = vpack.c.bf16 %v1965, %v1959
    %v2260 = vpack.c.bf16 %v1966, %v1960
    %v2261 = vpack.c.bf16 %v1967, %v1961
    %v2262 = vpack.c.bf16 %v1968, %v1962
    %v2263 = vpack.c.bf16 %v1969, %v1963
    %v2264 = vpack.c.bf16 %v1976, %v1970
    %v2265 = vpack.c.bf16 %v1977, %v1971
    %v2266 = vpack.c.bf16 %v1978, %v1972
    %v2267 = vpack.c.bf16 %v1979, %v1973
    %v2268 = vpack.c.bf16 %v1980, %v1974
    %v2269 = vpack.c.bf16 %v1981, %v1975
    %v2270 = vld [vmem:[#allocation2] sm:$0xff]
    %v2271 = vld [vmem:[#allocation2 + $0x8] sm:$0xff]
    %v2272 = vld [vmem:[#allocation2 + $0x10] sm:$0xff]
    %v2273 = vld [vmem:[#allocation2 + $0x18] sm:$0xff]
    %v2274 = vld [vmem:[#allocation2 + $0x20] sm:$0xff]
    %v2275 = vld [vmem:[#allocation2 + $0x28] sm:$0xff]
    %v2276 = vpack.c.bf16 %v2270, %v2270
    %v2277 = vpack.c.bf16 %v2271, %v2271
    %v2278 = vpack.c.bf16 %v2272, %v2272
    %v2279 = vpack.c.bf16 %v2273, %v2273
    %v2280 = vpack.c.bf16 %v2274, %v2274
    %v2281 = vpack.c.bf16 %v2275, %v2275
    %v2282 = vld [vmem:[#allocation8] sm:$0x3f]
    %v2284 = vperm.slane %v2282, 0
    %v2285 = vperm.slane %v2282, 1
    %v2286 = vperm.slane %v2282, 2
    %v2287 = vperm.slane %v2282, 3
    %v2288 = vperm.slane %v2282, 4
    %v2289 = vperm.slane %v2282, 5
    %2296 = vmatpush.bf16.msra.mxu0 %v2024
    %2297 = vmatpush.bf16.msra.mxu0 %v2018
    %2298 = vmatpush.bf16.msra.mxu0 %v2012
    %2299 = vmatpush.bf16.msra.mxu0 %v2006
    %2300 = vmatpush.bf16.msra.mxu0 %v2000
    %2301 = vmatpush.bf16.msra.mxu0 %v1994
    %2302 = vmatpush.bf16.msra.mxu0 %v1988
    %2303 = vmatpush.bf16.msra.mxu0 %v1982
    %2304 = vmatmul.bf16.gmra.mxu0 %v2276
    %v2305 = vpop.f32.mrf.mxu0
    %v2306 = vadd.f32 %v2284, %v2305
    %v2307 = vpop.f32.mrf.mxu0
    %2308 = vdwg.mxu0
    %2309 = vmatpush.bf16.msra.mxu0 %v2072
    %2310 = vmatpush.bf16.msra.mxu0 %v2066
    %2311 = vmatpush.bf16.msra.mxu0 %v2060
    %2312 = vmatpush.bf16.msra.mxu0 %v2054
    %2313 = vmatpush.bf16.msra.mxu0 %v2048
    %2314 = vmatpush.bf16.msra.mxu0 %v2042
    %2315 = vmatpush.bf16.msra.mxu0 %v2036
    %2316 = vmatpush.bf16.msra.mxu0 %v2030
    %2317 = vmatmul.bf16.gmra.mxu0 %v2277
    %v2318 = vpop.f32.mrf.mxu0
    %v2319 = vadd.f32 %v2306, %v2318
    %v2320 = vpop.f32.mrf.mxu0
    %2321 = vdwg.mxu0
    %2322 = vmatpush.bf16.msra.mxu0 %v2120
    %2323 = vmatpush.bf16.msra.mxu0 %v2114
    %2324 = vmatpush.bf16.msra.mxu0 %v2108
    %2325 = vmatpush.bf16.msra.mxu0 %v2102
    %2326 = vmatpush.bf16.msra.mxu0 %v2096
    %2327 = vmatpush.bf16.msra.mxu0 %v2090
    %2328 = vmatpush.bf16.msra.mxu0 %v2084
    %2329 = vmatpush.bf16.msra.mxu0 %v2078
    %2330 = vmatmul.bf16.gmra.mxu0 %v2278
    %v2331 = vpop.f32.mrf.mxu0
    %v2332 = vadd.f32 %v2319, %v2331
    %v2333 = vpop.f32.mrf.mxu0
    %2334 = vdwg.mxu0
    %2335 = vmatpush.bf16.msra.mxu0 %v2168
    %2336 = vmatpush.bf16.msra.mxu0 %v2162
    %2337 = vmatpush.bf16.msra.mxu0 %v2156
    %2338 = vmatpush.bf16.msra.mxu0 %v2150
    %2339 = vmatpush.bf16.msra.mxu0 %v2144
    %2340 = vmatpush.bf16.msra.mxu0 %v2138
    %2341 = vmatpush.bf16.msra.mxu0 %v2132
    %2342 = vmatpush.bf16.msra.mxu0 %v2126
    %2343 = vmatmul.bf16.gmra.mxu0 %v2279
    %v2344 = vpop.f32.mrf.mxu0
    %v2345 = vadd.f32 %v2332, %v2344
    %v2346 = vpop.f32.mrf.mxu0
    %2347 = vdwg.mxu0
    %2348 = vmatpush.bf16.msra.mxu0 %v2216
    %2349 = vmatpush.bf16.msra.mxu0 %v2210
    %2350 = vmatpush.bf16.msra.mxu0 %v2204
    %2351 = vmatpush.bf16.msra.mxu0 %v2198
    %2352 = vmatpush.bf16.msra.mxu0 %v2192
    %2353 = vmatpush.bf16.msra.mxu0 %v2186
    %2354 = vmatpush.bf16.msra.mxu0 %v2180
    %2355 = vmatpush.bf16.msra.mxu0 %v2174
    %2356 = vmatmul.bf16.gmra.mxu0 %v2280
    %v2357 = vpop.f32.mrf.mxu0
    %v2358 = vadd.f32 %v2345, %v2357
    %v2359 = vpop.f32.mrf.mxu0
    %2360 = vdwg.mxu0
    %2361 = vmatpush.bf16.msra.mxu0 %v2264
    %2362 = vmatpush.bf16.msra.mxu0 %v2258
    %2363 = vmatpush.bf16.msra.mxu0 %v2252
    %2364 = vmatpush.bf16.msra.mxu0 %v2246
    %2365 = vmatpush.bf16.msra.mxu0 %v2240
    %2366 = vmatpush.bf16.msra.mxu0 %v2234
    %2367 = vmatpush.bf16.msra.mxu0 %v2228
    %2368 = vmatpush.bf16.msra.mxu0 %v2222
    %2369 = vmatmul.bf16.gmra.mxu0 %v2281
    %v2370 = vpop.f32.mrf.mxu0
    %v2371 = vadd.f32 %v2358, %v2370
    %v2372 = vpop.f32.mrf.mxu0
    %2373 = vdwg.mxu0
    %2374 = vmatpush.bf16.msra.mxu0 %v2025
    %2375 = vmatpush.bf16.msra.mxu0 %v2019
    %2376 = vmatpush.bf16.msra.mxu0 %v2013
    %2377 = vmatpush.bf16.msra.mxu0 %v2007
    %2378 = vmatpush.bf16.msra.mxu0 %v2001
    %2379 = vmatpush.bf16.msra.mxu0 %v1995
    %2380 = vmatpush.bf16.msra.mxu0 %v1989
    %2381 = vmatpush.bf16.msra.mxu0 %v1983
    %2382 = vmatmul.bf16.gmra.mxu0 %v2276
    %v2383 = vpop.f32.mrf.mxu0
    %v2384 = vadd.f32 %v2285, %v2383
    %v2385 = vpop.f32.mrf.mxu0
    %2386 = vdwg.mxu0
    %2387 = vmatpush.bf16.msra.mxu0 %v2073
    %2388 = vmatpush.bf16.msra.mxu0 %v2067
    %2389 = vmatpush.bf16.msra.mxu0 %v2061
    %2390 = vmatpush.bf16.msra.mxu0 %v2055
    %2391 = vmatpush.bf16.msra.mxu0 %v2049
    %2392 = vmatpush.bf16.msra.mxu0 %v2043
    %2393 = vmatpush.bf16.msra.mxu0 %v2037
    %2394 = vmatpush.bf16.msra.mxu0 %v2031
    %2395 = vmatmul.bf16.gmra.mxu0 %v2277
    %v2396 = vpop.f32.mrf.mxu0
    %v2397 = vadd.f32 %v2384, %v2396
    %v2398 = vpop.f32.mrf.mxu0
    %2399 = vdwg.mxu0
    %2400 = vmatpush.bf16.msra.mxu0 %v2121
    %2401 = vmatpush.bf16.msra.mxu0 %v2115
    %2402 = vmatpush.bf16.msra.mxu0 %v2109
    %2403 = vmatpush.bf16.msra.mxu0 %v2103
    %2404 = vmatpush.bf16.msra.mxu0 %v2097
    %2405 = vmatpush.bf16.msra.mxu0 %v2091
    %2406 = vmatpush.bf16.msra.mxu0 %v2085
    %2407 = vmatpush.bf16.msra.mxu0 %v2079
    %2408 = vmatmul.bf16.gmra.mxu0 %v2278
    %v2409 = vpop.f32.mrf.mxu0
    %v2410 = vadd.f32 %v2397, %v2409
    %v2411 = vpop.f32.mrf.mxu0
    %2412 = vdwg.mxu0
    %2413 = vmatpush.bf16.msra.mxu0 %v2169
    %2414 = vmatpush.bf16.msra.mxu0 %v2163
    %2415 = vmatpush.bf16.msra.mxu0 %v2157
    %2416 = vmatpush.bf16.msra.mxu0 %v2151
    %2417 = vmatpush.bf16.msra.mxu0 %v2145
    %2418 = vmatpush.bf16.msra.mxu0 %v2139
    %2419 = vmatpush.bf16.msra.mxu0 %v2133
    %2420 = vmatpush.bf16.msra.mxu0 %v2127
    %2421 = vmatmul.bf16.gmra.mxu0 %v2279
    %v2422 = vpop.f32.mrf.mxu0
    %v2423 = vadd.f32 %v2410, %v2422
    %v2424 = vpop.f32.mrf.mxu0
    %2425 = vdwg.mxu0
    %2426 = vmatpush.bf16.msra.mxu0 %v2217
    %2427 = vmatpush.bf16.msra.mxu0 %v2211
    %2428 = vmatpush.bf16.msra.mxu0 %v2205
    %2429 = vmatpush.bf16.msra.mxu0 %v2199
    %2430 = vmatpush.bf16.msra.mxu0 %v2193
    %2431 = vmatpush.bf16.msra.mxu0 %v2187
    %2432 = vmatpush.bf16.msra.mxu0 %v2181
    %2433 = vmatpush.bf16.msra.mxu0 %v2175
    %2434 = vmatmul.bf16.gmra.mxu0 %v2280
    %v2435 = vpop.f32.mrf.mxu0
    %v2436 = vadd.f32 %v2423, %v2435
    %v2437 = vpop.f32.mrf.mxu0
    %2438 = vdwg.mxu0
    %2439 = vmatpush.bf16.msra.mxu0 %v2265
    %2440 = vmatpush.bf16.msra.mxu0 %v2259
    %2441 = vmatpush.bf16.msra.mxu0 %v2253
    %2442 = vmatpush.bf16.msra.mxu0 %v2247
    %2443 = vmatpush.bf16.msra.mxu0 %v2241
    %2444 = vmatpush.bf16.msra.mxu0 %v2235
    %2445 = vmatpush.bf16.msra.mxu0 %v2229
    %2446 = vmatpush.bf16.msra.mxu0 %v2223
    %2447 = vmatmul.bf16.gmra.mxu0 %v2281
    %v2448 = vpop.f32.mrf.mxu0
    %v2449 = vadd.f32 %v2436, %v2448
    %v2450 = vpop.f32.mrf.mxu0
    %2451 = vdwg.mxu0
    %2452 = vmatpush.bf16.msra.mxu0 %v2026
    %2453 = vmatpush.bf16.msra.mxu0 %v2020
    %2454 = vmatpush.bf16.msra.mxu0 %v2014
    %2455 = vmatpush.bf16.msra.mxu0 %v2008
    %2456 = vmatpush.bf16.msra.mxu0 %v2002
    %2457 = vmatpush.bf16.msra.mxu0 %v1996
    %2458 = vmatpush.bf16.msra.mxu0 %v1990
    %2459 = vmatpush.bf16.msra.mxu0 %v1984
    %2460 = vmatmul.bf16.gmra.mxu0 %v2276
    %v2461 = vpop.f32.mrf.mxu0
    %v2462 = vadd.f32 %v2286, %v2461
    %v2463 = vpop.f32.mrf.mxu0
    %2464 = vdwg.mxu0
    %2465 = vmatpush.bf16.msra.mxu0 %v2074
    %2466 = vmatpush.bf16.msra.mxu0 %v2068
    %2467 = vmatpush.bf16.msra.mxu0 %v2062
    %2468 = vmatpush.bf16.msra.mxu0 %v2056
    %2469 = vmatpush.bf16.msra.mxu0 %v2050
    %2470 = vmatpush.bf16.msra.mxu0 %v2044
    %2471 = vmatpush.bf16.msra.mxu0 %v2038
    %2472 = vmatpush.bf16.msra.mxu0 %v2032
    %2473 = vmatmul.bf16.gmra.mxu0 %v2277
    %v2474 = vpop.f32.mrf.mxu0
    %v2475 = vadd.f32 %v2462, %v2474
    %v2476 = vpop.f32.mrf.mxu0
    %2477 = vdwg.mxu0
    %2478 = vmatpush.bf16.msra.mxu0 %v2122
    %2479 = vmatpush.bf16.msra.mxu0 %v2116
    %2480 = vmatpush.bf16.msra.mxu0 %v2110
    %2481 = vmatpush.bf16.msra.mxu0 %v2104
    %2482 = vmatpush.bf16.msra.mxu0 %v2098
    %2483 = vmatpush.bf16.msra.mxu0 %v2092
    %2484 = vmatpush.bf16.msra.mxu0 %v2086
    %2485 = vmatpush.bf16.msra.mxu0 %v2080
    %2486 = vmatmul.bf16.gmra.mxu0 %v2278
    %v2487 = vpop.f32.mrf.mxu0
    %v2488 = vadd.f32 %v2475, %v2487
    %v2489 = vpop.f32.mrf.mxu0
    %2490 = vdwg.mxu0
    %2491 = vmatpush.bf16.msra.mxu0 %v2170
    %2492 = vmatpush.bf16.msra.mxu0 %v2164
    %2493 = vmatpush.bf16.msra.mxu0 %v2158
    %2494 = vmatpush.bf16.msra.mxu0 %v2152
    %2495 = vmatpush.bf16.msra.mxu0 %v2146
    %2496 = vmatpush.bf16.msra.mxu0 %v2140
    %2497 = vmatpush.bf16.msra.mxu0 %v2134
    %2498 = vmatpush.bf16.msra.mxu0 %v2128
    %2499 = vmatmul.bf16.gmra.mxu0 %v2279
    %v2500 = vpop.f32.mrf.mxu0
    %v2501 = vadd.f32 %v2488, %v2500
    %v2502 = vpop.f32.mrf.mxu0
    %2503 = vdwg.mxu0
    %2504 = vmatpush.bf16.msra.mxu0 %v2218
    %2505 = vmatpush.bf16.msra.mxu0 %v2212
    %2506 = vmatpush.bf16.msra.mxu0 %v2206
    %2507 = vmatpush.bf16.msra.mxu0 %v2200
    %2508 = vmatpush.bf16.msra.mxu0 %v2194
    %2509 = vmatpush.bf16.msra.mxu0 %v2188
    %2510 = vmatpush.bf16.msra.mxu0 %v2182
    %2511 = vmatpush.bf16.msra.mxu0 %v2176
    %2512 = vmatmul.bf16.gmra.mxu0 %v2280
    %v2513 = vpop.f32.mrf.mxu0
    %v2514 = vadd.f32 %v2501, %v2513
    %v2515 = vpop.f32.mrf.mxu0
    %2516 = vdwg.mxu0
    %2517 = vmatpush.bf16.msra.mxu0 %v2266
    %2518 = vmatpush.bf16.msra.mxu0 %v2260
    %2519 = vmatpush.bf16.msra.mxu0 %v2254
    %2520 = vmatpush.bf16.msra.mxu0 %v2248
    %2521 = vmatpush.bf16.msra.mxu0 %v2242
    %2522 = vmatpush.bf16.msra.mxu0 %v2236
    %2523 = vmatpush.bf16.msra.mxu0 %v2230
    %2524 = vmatpush.bf16.msra.mxu0 %v2224
    %2525 = vmatmul.bf16.gmra.mxu0 %v2281
    %v2526 = vpop.f32.mrf.mxu0
    %v2527 = vadd.f32 %v2514, %v2526
    %v2528 = vpop.f32.mrf.mxu0
    %2529 = vdwg.mxu0
    %2530 = vmatpush.bf16.msra.mxu0 %v2027
    %2531 = vmatpush.bf16.msra.mxu0 %v2021
    %2532 = vmatpush.bf16.msra.mxu0 %v2015
    %2533 = vmatpush.bf16.msra.mxu0 %v2009
    %2534 = vmatpush.bf16.msra.mxu0 %v2003
    %2535 = vmatpush.bf16.msra.mxu0 %v1997
    %2536 = vmatpush.bf16.msra.mxu0 %v1991
    %2537 = vmatpush.bf16.msra.mxu0 %v1985
    %2538 = vmatmul.bf16.gmra.mxu0 %v2276
    %v2539 = vpop.f32.mrf.mxu0
    %v2540 = vadd.f32 %v2287, %v2539
    %v2541 = vpop.f32.mrf.mxu0
    %2542 = vdwg.mxu0
    %2543 = vmatpush.bf16.msra.mxu0 %v2075
    %2544 = vmatpush.bf16.msra.mxu0 %v2069
    %2545 = vmatpush.bf16.msra.mxu0 %v2063
    %2546 = vmatpush.bf16.msra.mxu0 %v2057
    %2547 = vmatpush.bf16.msra.mxu0 %v2051
    %2548 = vmatpush.bf16.msra.mxu0 %v2045
    %2549 = vmatpush.bf16.msra.mxu0 %v2039
    %2550 = vmatpush.bf16.msra.mxu0 %v2033
    %2551 = vmatmul.bf16.gmra.mxu0 %v2277
    %v2552 = vpop.f32.mrf.mxu0
    %v2553 = vadd.f32 %v2540, %v2552
    %v2554 = vpop.f32.mrf.mxu0
    %2555 = vdwg.mxu0
    %2556 = vmatpush.bf16.msra.mxu0 %v2123
    %2557 = vmatpush.bf16.msra.mxu0 %v2117
    %2558 = vmatpush.bf16.msra.mxu0 %v2111
    %2559 = vmatpush.bf16.msra.mxu0 %v2105
    %2560 = vmatpush.bf16.msra.mxu0 %v2099
    %2561 = vmatpush.bf16.msra.mxu0 %v2093
    %2562 = vmatpush.bf16.msra.mxu0 %v2087
    %2563 = vmatpush.bf16.msra.mxu0 %v2081
    %2564 = vmatmul.bf16.gmra.mxu0 %v2278
    %v2565 = vpop.f32.mrf.mxu0
    %v2566 = vadd.f32 %v2553, %v2565
    %v2567 = vpop.f32.mrf.mxu0
    %2568 = vdwg.mxu0
    %2569 = vmatpush.bf16.msra.mxu0 %v2171
    %2570 = vmatpush.bf16.msra.mxu0 %v2165
    %2571 = vmatpush.bf16.msra.mxu0 %v2159
    %2572 = vmatpush.bf16.msra.mxu0 %v2153
    %2573 = vmatpush.bf16.msra.mxu0 %v2147
    %2574 = vmatpush.bf16.msra.mxu0 %v2141
    %2575 = vmatpush.bf16.msra.mxu0 %v2135
    %2576 = vmatpush.bf16.msra.mxu0 %v2129
    %2577 = vmatmul.bf16.gmra.mxu0 %v2279
    %v2578 = vpop.f32.mrf.mxu0
    %v2579 = vadd.f32 %v2566, %v2578
    %v2580 = vpop.f32.mrf.mxu0
    %2581 = vdwg.mxu0
    %2582 = vmatpush.bf16.msra.mxu0 %v2219
    %2583 = vmatpush.bf16.msra.mxu0 %v2213
    %2584 = vmatpush.bf16.msra.mxu0 %v2207
    %2585 = vmatpush.bf16.msra.mxu0 %v2201
    %2586 = vmatpush.bf16.msra.mxu0 %v2195
    %2587 = vmatpush.bf16.msra.mxu0 %v2189
    %2588 = vmatpush.bf16.msra.mxu0 %v2183
    %2589 = vmatpush.bf16.msra.mxu0 %v2177
    %2590 = vmatmul.bf16.gmra.mxu0 %v2280
    %v2591 = vpop.f32.mrf.mxu0
    %v2592 = vadd.f32 %v2579, %v2591
    %v2593 = vpop.f32.mrf.mxu0
    %2594 = vdwg.mxu0
    %2595 = vmatpush.bf16.msra.mxu0 %v2267
    %2596 = vmatpush.bf16.msra.mxu0 %v2261
    %2597 = vmatpush.bf16.msra.mxu0 %v2255
    %2598 = vmatpush.bf16.msra.mxu0 %v2249
    %2599 = vmatpush.bf16.msra.mxu0 %v2243
    %2600 = vmatpush.bf16.msra.mxu0 %v2237
    %2601 = vmatpush.bf16.msra.mxu0 %v2231
    %2602 = vmatpush.bf16.msra.mxu0 %v2225
    %2603 = vmatmul.bf16.gmra.mxu0 %v2281
    %v2604 = vpop.f32.mrf.mxu0
    %v2605 = vadd.f32 %v2592, %v2604
    %v2606 = vpop.f32.mrf.mxu0
    %2607 = vdwg.mxu0
    %2608 = vmatpush.bf16.msra.mxu0 %v2028
    %2609 = vmatpush.bf16.msra.mxu0 %v2022
    %2610 = vmatpush.bf16.msra.mxu0 %v2016
    %2611 = vmatpush.bf16.msra.mxu0 %v2010
    %2612 = vmatpush.bf16.msra.mxu0 %v2004
    %2613 = vmatpush.bf16.msra.mxu0 %v1998
    %2614 = vmatpush.bf16.msra.mxu0 %v1992
    %2615 = vmatpush.bf16.msra.mxu0 %v1986
    %2616 = vmatmul.bf16.gmra.mxu0 %v2276
    %v2617 = vpop.f32.mrf.mxu0
    %v2618 = vadd.f32 %v2288, %v2617
    %v2619 = vpop.f32.mrf.mxu0
    %2620 = vdwg.mxu0
    %2621 = vmatpush.bf16.msra.mxu0 %v2076
    %2622 = vmatpush.bf16.msra.mxu0 %v2070
    %2623 = vmatpush.bf16.msra.mxu0 %v2064
    %2624 = vmatpush.bf16.msra.mxu0 %v2058
    %2625 = vmatpush.bf16.msra.mxu0 %v2052
    %2626 = vmatpush.bf16.msra.mxu0 %v2046
    %2627 = vmatpush.bf16.msra.mxu0 %v2040
    %2628 = vmatpush.bf16.msra.mxu0 %v2034
    %2629 = vmatmul.bf16.gmra.mxu0 %v2277
    %v2630 = vpop.f32.mrf.mxu0
    %v2631 = vadd.f32 %v2618, %v2630
    %v2632 = vpop.f32.mrf.mxu0
    %2633 = vdwg.mxu0
    %2634 = vmatpush.bf16.msra.mxu0 %v2124
    %2635 = vmatpush.bf16.msra.mxu0 %v2118
    %2636 = vmatpush.bf16.msra.mxu0 %v2112
    %2637 = vmatpush.bf16.msra.mxu0 %v2106
    %2638 = vmatpush.bf16.msra.mxu0 %v2100
    %2639 = vmatpush.bf16.msra.mxu0 %v2094
    %2640 = vmatpush.bf16.msra.mxu0 %v2088
    %2641 = vmatpush.bf16.msra.mxu0 %v2082
    %2642 = vmatmul.bf16.gmra.mxu0 %v2278
    %v2643 = vpop.f32.mrf.mxu0
    %v2644 = vadd.f32 %v2631, %v2643
    %v2645 = vpop.f32.mrf.mxu0
    %2646 = vdwg.mxu0
    %2647 = vmatpush.bf16.msra.mxu0 %v2172
    %2648 = vmatpush.bf16.msra.mxu0 %v2166
    %2649 = vmatpush.bf16.msra.mxu0 %v2160
    %2650 = vmatpush.bf16.msra.mxu0 %v2154
    %2651 = vmatpush.bf16.msra.mxu0 %v2148
    %2652 = vmatpush.bf16.msra.mxu0 %v2142
    %2653 = vmatpush.bf16.msra.mxu0 %v2136
    %2654 = vmatpush.bf16.msra.mxu0 %v2130
    %2655 = vmatmul.bf16.gmra.mxu0 %v2279
    %v2656 = vpop.f32.mrf.mxu0
    %v2657 = vadd.f32 %v2644, %v2656
    %v2658 = vpop.f32.mrf.mxu0
    %2659 = vdwg.mxu0
    %2660 = vmatpush.bf16.msra.mxu0 %v2220
    %2661 = vmatpush.bf16.msra.mxu0 %v2214
    %2662 = vmatpush.bf16.msra.mxu0 %v2208
    %2663 = vmatpush.bf16.msra.mxu0 %v2202
    %2664 = vmatpush.bf16.msra.mxu0 %v2196
    %2665 = vmatpush.bf16.msra.mxu0 %v2190
    %2666 = vmatpush.bf16.msra.mxu0 %v2184
    %2667 = vmatpush.bf16.msra.mxu0 %v2178
    %2668 = vmatmul.bf16.gmra.mxu0 %v2280
    %v2669 = vpop.f32.mrf.mxu0
    %v2670 = vadd.f32 %v2657, %v2669
    %v2671 = vpop.f32.mrf.mxu0
    %2672 = vdwg.mxu0
    %2673 = vmatpush.bf16.msra.mxu0 %v2268
    %2674 = vmatpush.bf16.msra.mxu0 %v2262
    %2675 = vmatpush.bf16.msra.mxu0 %v2256
    %2676 = vmatpush.bf16.msra.mxu0 %v2250
    %2677 = vmatpush.bf16.msra.mxu0 %v2244
    %2678 = vmatpush.bf16.msra.mxu0 %v2238
    %2679 = vmatpush.bf16.msra.mxu0 %v2232
    %2680 = vmatpush.bf16.msra.mxu0 %v2226
    %2681 = vmatmul.bf16.gmra.mxu0 %v2281
    %v2682 = vpop.f32.mrf.mxu0
    %v2683 = vadd.f32 %v2670, %v2682
    %v2684 = vpop.f32.mrf.mxu0
    %2685 = vdwg.mxu0
    %2686 = vmatpush.bf16.msra.mxu0 %v2029
    %2687 = vmatpush.bf16.msra.mxu0 %v2023
    %2688 = vmatpush.bf16.msra.mxu0 %v2017
    %2689 = vmatpush.bf16.msra.mxu0 %v2011
    %2690 = vmatpush.bf16.msra.mxu0 %v2005
    %2691 = vmatpush.bf16.msra.mxu0 %v1999
    %2692 = vmatpush.bf16.msra.mxu0 %v1993
    %2693 = vmatpush.bf16.msra.mxu0 %v1987
    %2694 = vmatmul.bf16.gmra.mxu0 %v2276
    %v2695 = vpop.f32.mrf.mxu0
    %v2696 = vadd.f32 %v2289, %v2695
    %v2697 = vpop.f32.mrf.mxu0
    %2698 = vdwg.mxu0
    %2699 = vmatpush.bf16.msra.mxu0 %v2077
    %2700 = vmatpush.bf16.msra.mxu0 %v2071
    %2701 = vmatpush.bf16.msra.mxu0 %v2065
    %2702 = vmatpush.bf16.msra.mxu0 %v2059
    %2703 = vmatpush.bf16.msra.mxu0 %v2053
    %2704 = vmatpush.bf16.msra.mxu0 %v2047
    %2705 = vmatpush.bf16.msra.mxu0 %v2041
    %2706 = vmatpush.bf16.msra.mxu0 %v2035
    %2707 = vmatmul.bf16.gmra.mxu0 %v2277
    %v2708 = vpop.f32.mrf.mxu0
    %v2709 = vadd.f32 %v2696, %v2708
    %v2710 = vpop.f32.mrf.mxu0
    %2711 = vdwg.mxu0
    %2712 = vmatpush.bf16.msra.mxu0 %v2125
    %2713 = vmatpush.bf16.msra.mxu0 %v2119
    %2714 = vmatpush.bf16.msra.mxu0 %v2113
    %2715 = vmatpush.bf16.msra.mxu0 %v2107
    %2716 = vmatpush.bf16.msra.mxu0 %v2101
    %2717 = vmatpush.bf16.msra.mxu0 %v2095
    %2718 = vmatpush.bf16.msra.mxu0 %v2089
    %2719 = vmatpush.bf16.msra.mxu0 %v2083
    %2720 = vmatmul.bf16.gmra.mxu0 %v2278
    %v2721 = vpop.f32.mrf.mxu0
    %v2722 = vadd.f32 %v2709, %v2721
    %v2723 = vpop.f32.mrf.mxu0
    %2724 = vdwg.mxu0
    %2725 = vmatpush.bf16.msra.mxu0 %v2173
    %2726 = vmatpush.bf16.msra.mxu0 %v2167
    %2727 = vmatpush.bf16.msra.mxu0 %v2161
    %2728 = vmatpush.bf16.msra.mxu0 %v2155
    %2729 = vmatpush.bf16.msra.mxu0 %v2149
    %2730 = vmatpush.bf16.msra.mxu0 %v2143
    %2731 = vmatpush.bf16.msra.mxu0 %v2137
    %2732 = vmatpush.bf16.msra.mxu0 %v2131
    %2733 = vmatmul.bf16.gmra.mxu0 %v2279
    %v2734 = vpop.f32.mrf.mxu0
    %v2735 = vadd.f32 %v2722, %v2734
    %v2736 = vpop.f32.mrf.mxu0
    %2737 = vdwg.mxu0
    %2738 = vmatpush.bf16.msra.mxu0 %v2221
    %2739 = vmatpush.bf16.msra.mxu0 %v2215
    %2740 = vmatpush.bf16.msra.mxu0 %v2209
    %2741 = vmatpush.bf16.msra.mxu0 %v2203
    %2742 = vmatpush.bf16.msra.mxu0 %v2197
    %2743 = vmatpush.bf16.msra.mxu0 %v2191
    %2744 = vmatpush.bf16.msra.mxu0 %v2185
    %2745 = vmatpush.bf16.msra.mxu0 %v2179
    %2746 = vmatmul.bf16.gmra.mxu0 %v2280
    %v2747 = vpop.f32.mrf.mxu0
    %v2748 = vadd.f32 %v2735, %v2747
    %v2749 = vpop.f32.mrf.mxu0
    %2750 = vdwg.mxu0
    %2751 = vmatpush.bf16.msra.mxu0 %v2269
    %2752 = vmatpush.bf16.msra.mxu0 %v2263
    %2753 = vmatpush.bf16.msra.mxu0 %v2257
    %2754 = vmatpush.bf16.msra.mxu0 %v2251
    %2755 = vmatpush.bf16.msra.mxu0 %v2245
    %2756 = vmatpush.bf16.msra.mxu0 %v2239
    %2757 = vmatpush.bf16.msra.mxu0 %v2233
    %2758 = vmatpush.bf16.msra.mxu0 %v2227
    %2759 = vmatmul.bf16.gmra.mxu0 %v2281
    %v2760 = vpop.f32.mrf.mxu0
    %v2761 = vadd.f32 %v2748, %v2760
    %v2762 = vpop.f32.mrf.mxu0
    %2763 = vdwg.mxu0
    %v2764 = vtanh.pop %v2371
    %v2765 = vtanh.pop %v2449
    %v2766 = vtanh.pop %v2527
    %v2767 = vtanh.pop %v2605
    %v2768 = vtanh.pop %v2683
    %v2769 = vtanh.pop %v2761
    %v2770 = vpack.c.bf16 %v2764, %v2764
    %v2771 = vpack.c.bf16 %v2765, %v2765
    %v2772 = vpack.c.bf16 %v2766, %v2766
    %v2773 = vpack.c.bf16 %v2767, %v2767
    %v2774 = vpack.c.bf16 %v2768, %v2768
    %v2775 = vpack.c.bf16 %v2769, %v2769
    %v2776 = vld [vmem:[#allocation10] sm:$0xf]
    %v2777 = vld [vmem:[#allocation10 + $0x4] sm:$0xf]
    %v2778 = vld [vmem:[#allocation10 + $0x8] sm:$0xf]
    %v2779 = vld [vmem:[#allocation10 + $0xc] sm:$0xf]
    %v2780 = vld [vmem:[#allocation10 + $0x10] sm:$0xf]
    %v2781 = vld [vmem:[#allocation10 + $0x14] sm:$0xf]
    %v2782 = vld [vmem:[#allocation10 + $0x18] sm:$0xf]
    %v2783 = vld [vmem:[#allocation10 + $0x1c] sm:$0xf]
    %v2784 = vld [vmem:[#allocation10 + $0x20] sm:$0xf]
    %v2785 = vld [vmem:[#allocation10 + $0x24] sm:$0xf]
    %v2786 = vld [vmem:[#allocation10 + $0x28] sm:$0xf]
    %v2787 = vld [vmem:[#allocation10 + $0x2c] sm:$0xf]
    %v2788 = vld [vmem:[#allocation10 + $0x30] sm:$0xf]
    %v2789 = vld [vmem:[#allocation10 + $0x34] sm:$0xf]
    %v2790 = vld [vmem:[#allocation10 + $0x38] sm:$0xf]
    %v2791 = vld [vmem:[#allocation10 + $0x3c] sm:$0xf]
    %v2792 = vld [vmem:[#allocation10 + $0x40] sm:$0xf]
    %v2793 = vld [vmem:[#allocation10 + $0x44] sm:$0xf]
    %v2794 = vld [vmem:[#allocation10 + $0x48] sm:$0xf]
    %v2795 = vld [vmem:[#allocation10 + $0x4c] sm:$0xf]
    %v2796 = vld [vmem:[#allocation10 + $0x50] sm:$0xf]
    %v2797 = vld [vmem:[#allocation10 + $0x54] sm:$0xf]
    %v2798 = vld [vmem:[#allocation10 + $0x58] sm:$0xf]
    %v2799 = vld [vmem:[#allocation10 + $0x5c] sm:$0xf]
    %v2800 = vld [vmem:[#allocation10 + $0x60] sm:$0xf]
    %v2801 = vld [vmem:[#allocation10 + $0x64] sm:$0xf]
    %v2802 = vld [vmem:[#allocation10 + $0x68] sm:$0xf]
    %v2803 = vld [vmem:[#allocation10 + $0x6c] sm:$0xf]
    %v2804 = vld [vmem:[#allocation10 + $0x70] sm:$0xf]
    %v2805 = vld [vmem:[#allocation10 + $0x74] sm:$0xf]
    %v2806 = vld [vmem:[#allocation10 + $0x78] sm:$0xf]
    %v2807 = vld [vmem:[#allocation10 + $0x7c] sm:$0xf]
    %v2808 = vld [vmem:[#allocation10 + $0x80] sm:$0xf]
    %v2809 = vld [vmem:[#allocation10 + $0x84] sm:$0xf]
    %v2810 = vld [vmem:[#allocation10 + $0x88] sm:$0xf]
    %v2811 = vld [vmem:[#allocation10 + $0x8c] sm:$0xf]
    %v2812 = vld [vmem:[#allocation10 + $0x90] sm:$0xf]
    %v2813 = vld [vmem:[#allocation10 + $0x94] sm:$0xf]
    %v2814 = vld [vmem:[#allocation10 + $0x98] sm:$0xf]
    %v2815 = vld [vmem:[#allocation10 + $0x9c] sm:$0xf]
    %v2816 = vld [vmem:[#allocation10 + $0xa0] sm:$0xf]
    %v2817 = vld [vmem:[#allocation10 + $0xa4] sm:$0xf]
    %v2818 = vld [vmem:[#allocation10 + $0xa8] sm:$0xf]
    %v2819 = vld [vmem:[#allocation10 + $0xac] sm:$0xf]
    %v2820 = vld [vmem:[#allocation10 + $0xb0] sm:$0xf]
    %v2821 = vld [vmem:[#allocation10 + $0xb4] sm:$0xf]
    %v2822 = vld [vmem:[#allocation10 + $0xb8] sm:$0xf]
    %v2823 = vld [vmem:[#allocation10 + $0xbc] sm:$0xf]
    %v2824 = vld [vmem:[#allocation10 + $0xc0] sm:$0xf]
    %v2825 = vld [vmem:[#allocation10 + $0xc4] sm:$0xf]
    %v2826 = vld [vmem:[#allocation10 + $0xc8] sm:$0xf]
    %v2827 = vld [vmem:[#allocation10 + $0xcc] sm:$0xf]
    %v2828 = vld [vmem:[#allocation10 + $0xd0] sm:$0xf]
    %v2829 = vld [vmem:[#allocation10 + $0xd4] sm:$0xf]
    %v2830 = vld [vmem:[#allocation10 + $0xd8] sm:$0xf]
    %v2831 = vld [vmem:[#allocation10 + $0xdc] sm:$0xf]
    %v2832 = vld [vmem:[#allocation10 + $0xe0] sm:$0xf]
    %v2833 = vld [vmem:[#allocation10 + $0xe4] sm:$0xf]
    %v2834 = vld [vmem:[#allocation10 + $0xe8] sm:$0xf]
    %v2835 = vld [vmem:[#allocation10 + $0xec] sm:$0xf]
    %v2836 = vld [vmem:[#allocation10 + $0xf0] sm:$0xf]
    %v2837 = vld [vmem:[#allocation10 + $0xf4] sm:$0xf]
    %v2838 = vld [vmem:[#allocation10 + $0xf8] sm:$0xf]
    %v2839 = vld [vmem:[#allocation10 + $0xfc] sm:$0xf]
    %v2840 = vld [vmem:[#allocation10 + $0x100] sm:$0xf]
    %v2841 = vld [vmem:[#allocation10 + $0x104] sm:$0xf]
    %v2842 = vld [vmem:[#allocation10 + $0x108] sm:$0xf]
    %v2843 = vld [vmem:[#allocation10 + $0x10c] sm:$0xf]
    %v2844 = vld [vmem:[#allocation10 + $0x110] sm:$0xf]
    %v2845 = vld [vmem:[#allocation10 + $0x114] sm:$0xf]
    %v2846 = vld [vmem:[#allocation10 + $0x118] sm:$0xf]
    %v2847 = vld [vmem:[#allocation10 + $0x11c] sm:$0xf]
    %v2848 = vld [vmem:[#allocation10 + $0x120] sm:$0xf]
    %v2849 = vld [vmem:[#allocation10 + $0x124] sm:$0xf]
    %v2850 = vld [vmem:[#allocation10 + $0x128] sm:$0xf]
    %v2851 = vld [vmem:[#allocation10 + $0x12c] sm:$0xf]
    %v2852 = vld [vmem:[#allocation10 + $0x130] sm:$0xf]
    %v2853 = vld [vmem:[#allocation10 + $0x134] sm:$0xf]
    %v2854 = vld [vmem:[#allocation10 + $0x138] sm:$0xf]
    %v2855 = vld [vmem:[#allocation10 + $0x13c] sm:$0xf]
    %v2856 = vld [vmem:[#allocation10 + $0x140] sm:$0xf]
    %v2857 = vld [vmem:[#allocation10 + $0x144] sm:$0xf]
    %v2858 = vld [vmem:[#allocation10 + $0x148] sm:$0xf]
    %v2859 = vld [vmem:[#allocation10 + $0x14c] sm:$0xf]
    %v2860 = vld [vmem:[#allocation10 + $0x150] sm:$0xf]
    %v2861 = vld [vmem:[#allocation10 + $0x154] sm:$0xf]
    %v2862 = vld [vmem:[#allocation10 + $0x158] sm:$0xf]
    %v2863 = vld [vmem:[#allocation10 + $0x15c] sm:$0xf]
    %v2864 = vld [vmem:[#allocation10 + $0x160] sm:$0xf]
    %v2865 = vld [vmem:[#allocation10 + $0x164] sm:$0xf]
    %v2866 = vld [vmem:[#allocation10 + $0x168] sm:$0xf]
    %v2867 = vld [vmem:[#allocation10 + $0x16c] sm:$0xf]
    %v2868 = vld [vmem:[#allocation10 + $0x170] sm:$0xf]
    %v2869 = vld [vmem:[#allocation10 + $0x174] sm:$0xf]
    %v2870 = vld [vmem:[#allocation10 + $0x178] sm:$0xf]
    %v2871 = vld [vmem:[#allocation10 + $0x17c] sm:$0xf]
    %v2872 = vld [vmem:[%s5] sm:$0x1]
    %v2873 = vunpack.c.l.bf16 %v2872
    %v2874 = vperm.slane %v2873, 0
    %v2971 = vunpack.c.l.b16 %v2776
    %v2972 = vunpack.c.l.b16 %v2777
    %v2973 = vunpack.c.l.b16 %v2778
    %v2974 = vunpack.c.l.b16 %v2779
    %v2975 = vunpack.c.l.b16 %v2780
    %v2976 = vunpack.c.l.b16 %v2781
    %v2977 = vunpack.c.l.b16 %v2782
    %v2978 = vunpack.c.l.b16 %v2783
    %v2979 = vunpack.c.l.b16 %v2784
    %v2980 = vunpack.c.l.b16 %v2785
    %v2981 = vunpack.c.l.b16 %v2786
    %v2982 = vunpack.c.l.b16 %v2787
    %v2983 = vunpack.c.l.b16 %v2788
    %v2984 = vunpack.c.l.b16 %v2789
    %v2985 = vunpack.c.l.b16 %v2790
    %v2986 = vunpack.c.l.b16 %v2791
    %v2987 = vunpack.c.l.b16 %v2792
    %v2988 = vunpack.c.l.b16 %v2793
    %v2989 = vunpack.c.l.b16 %v2794
    %v2990 = vunpack.c.l.b16 %v2795
    %v2991 = vunpack.c.l.b16 %v2796
    %v2992 = vunpack.c.l.b16 %v2797
    %v2993 = vunpack.c.l.b16 %v2798
    %v2994 = vunpack.c.l.b16 %v2799
    %v2995 = vunpack.c.l.b16 %v2800
    %v2996 = vunpack.c.l.b16 %v2801
    %v2997 = vunpack.c.l.b16 %v2802
    %v2998 = vunpack.c.l.b16 %v2803
    %v2999 = vunpack.c.l.b16 %v2804
    %v3000 = vunpack.c.l.b16 %v2805
    %v3001 = vunpack.c.l.b16 %v2806
    %v3002 = vunpack.c.l.b16 %v2807
    %v3003 = vunpack.c.l.b16 %v2808
    %v3004 = vunpack.c.l.b16 %v2809
    %v3005 = vunpack.c.l.b16 %v2810
    %v3006 = vunpack.c.l.b16 %v2811
    %v3007 = vunpack.c.l.b16 %v2812
    %v3008 = vunpack.c.l.b16 %v2813
    %v3009 = vunpack.c.l.b16 %v2814
    %v3010 = vunpack.c.l.b16 %v2815
    %v3011 = vunpack.c.l.b16 %v2816
    %v3012 = vunpack.c.l.b16 %v2817
    %v3013 = vunpack.c.l.b16 %v2818
    %v3014 = vunpack.c.l.b16 %v2819
    %v3015 = vunpack.c.l.b16 %v2820
    %v3016 = vunpack.c.l.b16 %v2821
    %v3017 = vunpack.c.l.b16 %v2822
    %v3018 = vunpack.c.l.b16 %v2823
    %v3019 = vunpack.c.l.b16 %v2824
    %v3020 = vunpack.c.l.b16 %v2825
    %v3021 = vunpack.c.l.b16 %v2826
    %v3022 = vunpack.c.l.b16 %v2827
    %v3023 = vunpack.c.l.b16 %v2828
    %v3024 = vunpack.c.l.b16 %v2829
    %v3025 = vunpack.c.l.b16 %v2830
    %v3026 = vunpack.c.l.b16 %v2831
    %v3027 = vunpack.c.l.b16 %v2832
    %v3028 = vunpack.c.l.b16 %v2833
    %v3029 = vunpack.c.l.b16 %v2834
    %v3030 = vunpack.c.l.b16 %v2835
    %v3031 = vunpack.c.l.b16 %v2836
    %v3032 = vunpack.c.l.b16 %v2837
    %v3033 = vunpack.c.l.b16 %v2838
    %v3034 = vunpack.c.l.b16 %v2839
    %v3035 = vunpack.c.l.b16 %v2840
    %v3036 = vunpack.c.l.b16 %v2841
    %v3037 = vunpack.c.l.b16 %v2842
    %v3038 = vunpack.c.l.b16 %v2843
    %v3039 = vunpack.c.l.b16 %v2844
    %v3040 = vunpack.c.l.b16 %v2845
    %v3041 = vunpack.c.l.b16 %v2846
    %v3042 = vunpack.c.l.b16 %v2847
    %v3043 = vunpack.c.l.b16 %v2848
    %v3044 = vunpack.c.l.b16 %v2849
    %v3045 = vunpack.c.l.b16 %v2850
    %v3046 = vunpack.c.l.b16 %v2851
    %v3047 = vunpack.c.l.b16 %v2852
    %v3048 = vunpack.c.l.b16 %v2853
    %v3049 = vunpack.c.l.b16 %v2854
    %v3050 = vunpack.c.l.b16 %v2855
    %v3051 = vunpack.c.l.b16 %v2856
    %v3052 = vunpack.c.l.b16 %v2857
    %v3053 = vunpack.c.l.b16 %v2858
    %v3054 = vunpack.c.l.b16 %v2859
    %v3055 = vunpack.c.l.b16 %v2860
    %v3056 = vunpack.c.l.b16 %v2861
    %v3057 = vunpack.c.l.b16 %v2862
    %v3058 = vunpack.c.l.b16 %v2863
    %v3059 = vunpack.c.l.b16 %v2864
    %v3060 = vunpack.c.l.b16 %v2865
    %v3061 = vunpack.c.l.b16 %v2866
    %v3062 = vunpack.c.l.b16 %v2867
    %v3063 = vunpack.c.l.b16 %v2868
    %v3064 = vunpack.c.l.b16 %v2869
    %v3065 = vunpack.c.l.b16 %v2870
    %v3066 = vunpack.c.l.b16 %v2871
    %v3067 = vpack.c.b16 %v2972, %v2971
    %v3068 = vpack.c.b16 %v2974, %v2973
    %v3069 = vpack.c.b16 %v2976, %v2975
    %v3070 = vpack.c.b16 %v2978, %v2977
    %v3071 = vpack.c.b16 %v2980, %v2979
    %v3072 = vpack.c.b16 %v2982, %v2981
    %v3073 = vpack.c.b16 %v2984, %v2983
    %v3074 = vpack.c.b16 %v2986, %v2985
    %v3075 = vpack.c.b16 %v2988, %v2987
    %v3076 = vpack.c.b16 %v2990, %v2989
    %v3077 = vpack.c.b16 %v2992, %v2991
    %v3078 = vpack.c.b16 %v2994, %v2993
    %v3079 = vpack.c.b16 %v2996, %v2995
    %v3080 = vpack.c.b16 %v2998, %v2997
    %v3081 = vpack.c.b16 %v3000, %v2999
    %v3082 = vpack.c.b16 %v3002, %v3001
    %v3083 = vpack.c.b16 %v3004, %v3003
    %v3084 = vpack.c.b16 %v3006, %v3005
    %v3085 = vpack.c.b16 %v3008, %v3007
    %v3086 = vpack.c.b16 %v3010, %v3009
    %v3087 = vpack.c.b16 %v3012, %v3011
    %v3088 = vpack.c.b16 %v3014, %v3013
    %v3089 = vpack.c.b16 %v3016, %v3015
    %v3090 = vpack.c.b16 %v3018, %v3017
    %v3091 = vpack.c.b16 %v3020, %v3019
    %v3092 = vpack.c.b16 %v3022, %v3021
    %v3093 = vpack.c.b16 %v3024, %v3023
    %v3094 = vpack.c.b16 %v3026, %v3025
    %v3095 = vpack.c.b16 %v3028, %v3027
    %v3096 = vpack.c.b16 %v3030, %v3029
    %v3097 = vpack.c.b16 %v3032, %v3031
    %v3098 = vpack.c.b16 %v3034, %v3033
    %v3099 = vpack.c.b16 %v3036, %v3035
    %v3100 = vpack.c.b16 %v3038, %v3037
    %v3101 = vpack.c.b16 %v3040, %v3039
    %v3102 = vpack.c.b16 %v3042, %v3041
    %v3103 = vpack.c.b16 %v3044, %v3043
    %v3104 = vpack.c.b16 %v3046, %v3045
    %v3105 = vpack.c.b16 %v3048, %v3047
    %v3106 = vpack.c.b16 %v3050, %v3049
    %v3107 = vpack.c.b16 %v3052, %v3051
    %v3108 = vpack.c.b16 %v3054, %v3053
    %v3109 = vpack.c.b16 %v3056, %v3055
    %v3110 = vpack.c.b16 %v3058, %v3057
    %v3111 = vpack.c.b16 %v3060, %v3059
    %v3112 = vpack.c.b16 %v3062, %v3061
    %v3113 = vpack.c.b16 %v3064, %v3063
    %v3114 = vpack.c.b16 %v3066, %v3065
    %3163 = vmatpush.bf16.msra.mxu0 %v3074
    %3164 = vmatpush.bf16.msra.mxu0 %v3073
    %3165 = vmatpush.bf16.msra.mxu0 %v3072
    %3166 = vmatpush.bf16.msra.mxu0 %v3071
    %3167 = vmatpush.bf16.msra.mxu0 %v3070
    %3168 = vmatpush.bf16.msra.mxu0 %v3069
    %3169 = vmatpush.bf16.msra.mxu0 %v3068
    %3170 = vmatpush.bf16.msra.mxu0 %v3067
    %3171 = vmatmul.bf16.gmra.mxu0 %v2770
    %v3172 = vpop.f32.mrf.mxu0
    %v3173 = vadd.f32 %v2874, %v3172
    %v3174 = vpop.f32.mrf.mxu0
    %3175 = vdwg.mxu0
    %3176 = vmatpush.bf16.msra.mxu0 %v3082
    %3177 = vmatpush.bf16.msra.mxu0 %v3081
    %3178 = vmatpush.bf16.msra.mxu0 %v3080
    %3179 = vmatpush.bf16.msra.mxu0 %v3079
    %3180 = vmatpush.bf16.msra.mxu0 %v3078
    %3181 = vmatpush.bf16.msra.mxu0 %v3077
    %3182 = vmatpush.bf16.msra.mxu0 %v3076
    %3183 = vmatpush.bf16.msra.mxu0 %v3075
    %3184 = vmatmul.bf16.gmra.mxu0 %v2771
    %v3185 = vpop.f32.mrf.mxu0
    %v3186 = vadd.f32 %v3173, %v3185
    %v3187 = vpop.f32.mrf.mxu0
    %3188 = vdwg.mxu0
    %3189 = vmatpush.bf16.msra.mxu0 %v3090
    %3190 = vmatpush.bf16.msra.mxu0 %v3089
    %3191 = vmatpush.bf16.msra.mxu0 %v3088
    %3192 = vmatpush.bf16.msra.mxu0 %v3087
    %3193 = vmatpush.bf16.msra.mxu0 %v3086
    %3194 = vmatpush.bf16.msra.mxu0 %v3085
    %3195 = vmatpush.bf16.msra.mxu0 %v3084
    %3196 = vmatpush.bf16.msra.mxu0 %v3083
    %3197 = vmatmul.bf16.gmra.mxu0 %v2772
    %v3198 = vpop.f32.mrf.mxu0
    %v3199 = vadd.f32 %v3186, %v3198
    %v3200 = vpop.f32.mrf.mxu0
    %3201 = vdwg.mxu0
    %3202 = vmatpush.bf16.msra.mxu0 %v3098
    %3203 = vmatpush.bf16.msra.mxu0 %v3097
    %3204 = vmatpush.bf16.msra.mxu0 %v3096
    %3205 = vmatpush.bf16.msra.mxu0 %v3095
    %3206 = vmatpush.bf16.msra.mxu0 %v3094
    %3207 = vmatpush.bf16.msra.mxu0 %v3093
    %3208 = vmatpush.bf16.msra.mxu0 %v3092
    %3209 = vmatpush.bf16.msra.mxu0 %v3091
    %3210 = vmatmul.bf16.gmra.mxu0 %v2773
    %v3211 = vpop.f32.mrf.mxu0
    %v3212 = vadd.f32 %v3199, %v3211
    %v3213 = vpop.f32.mrf.mxu0
    %3214 = vdwg.mxu0
    %3215 = vmatpush.bf16.msra.mxu0 %v3106
    %3216 = vmatpush.bf16.msra.mxu0 %v3105
    %3217 = vmatpush.bf16.msra.mxu0 %v3104
    %3218 = vmatpush.bf16.msra.mxu0 %v3103
    %3219 = vmatpush.bf16.msra.mxu0 %v3102
    %3220 = vmatpush.bf16.msra.mxu0 %v3101
    %3221 = vmatpush.bf16.msra.mxu0 %v3100
    %3222 = vmatpush.bf16.msra.mxu0 %v3099
    %3223 = vmatmul.bf16.gmra.mxu0 %v2774
    %v3224 = vpop.f32.mrf.mxu0
    %v3225 = vadd.f32 %v3212, %v3224
    %v3226 = vpop.f32.mrf.mxu0
    %3227 = vdwg.mxu0
    %3228 = vmatpush.bf16.msra.mxu0 %v3114
    %3229 = vmatpush.bf16.msra.mxu0 %v3113
    %3230 = vmatpush.bf16.msra.mxu0 %v3112
    %3231 = vmatpush.bf16.msra.mxu0 %v3111
    %3232 = vmatpush.bf16.msra.mxu0 %v3110
    %3233 = vmatpush.bf16.msra.mxu0 %v3109
    %3234 = vmatpush.bf16.msra.mxu0 %v3108
    %3235 = vmatpush.bf16.msra.mxu0 %v3107
    %3236 = vmatmul.bf16.gmra.mxu0 %v2775
    %v3237 = vpop.f32.mrf.mxu0
    %v3238 = vadd.f32 %v3225, %v3237
    %v3239 = vpop.f32.mrf.mxu0
    %3240 = vdwg.mxu0
    %3241 = vst [vmem:[#allocation11] sm:$0xff] %v3238
    // Predicated region
    $region46: #{tpu_custom_call.1} parent=1 // pred_check
      _
    $region47: #{tpu_custom_call.1} parent=1 // pred_check_branch
      %3243 = sbr.rel (0) target = $region49
    $region48: #{tpu_custom_call.1} parent=1 // pred_region
      %3245 = vsyncadd [#allocation4], 0
      %s3247 = sshll.u32 [#allocation11], 4
      %s3248 = int_to_ptr.vmem [resolvable:$true] %s3247
      %s3249 = sshll.u32 %s6, 4
      %s3250 = int_to_ptr.hbm [resolvable:$true] %s3249
      %3252 = dma.vmem_to_hbm [thread:$0]  %s3248, 128, %s3250, [#allocation4]
    $region49: #{tpu_custom_call.1} parent=1 // pred_fallthru
      _
    // Predicated region
    $region50: #{tpu_custom_call.1} parent=1 // pred_check
      _
    $region51: #{tpu_custom_call.1} parent=1 // pred_check_branch
      %3254 = sbr.rel (0) target = $region53
    $region52: #{tpu_custom_call.1} parent=1 // pred_region
      %3256 = dma.done [#allocation4], 128
    $region53: #{tpu_custom_call.1} parent=1 // pred_fallthru
      _
    %3257 = vsyncpa [#allocation3], 1
    %3258 = vsyncpa [#allocation6], 1
    %3259 = vsyncpa [#allocation9], 1
    %3260 = vsyncpa [#allocation4], 1

</llo_original>
